<compile_context>
chip_gen: v6e
topology: v6e:2x2x1
jax: 0.10.0
libtpu: 0.0.40
codegen_flags: <defaults>
</compile_context>

<pallas_src>
import functools

import numpy as np
import jax
import jax.numpy as jnp
from jax import lax
from jax.experimental import pallas as pl
from jax.experimental.pallas import tpu as pltpu

NEG_MAG = 9.0e15  # matches torch.full(..., -9000000000000000.0)

_VMEM = pl.BlockSpec(memory_space=pltpu.MemorySpace.VMEM)


# --------------------------------------------------------------------------------------
# One fused Pallas kernel: every channel's GAT stack + HeteroAttLayer + linear head
# --------------------------------------------------------------------------------------
def _han_fused_kernel(*refs, nchannel, nlayer, nheads, nhid, alpha, nnode):
    # ---- unpack refs (inputs..., outputs) ---------------------------------------------
    pos = 0
    feat_refs = refs[pos:pos + nchannel]; pos += nchannel
    layer_refs = []
    for _c in range(nchannel):
        ch = []
        for _i in range(nlayer):
            ch.append(refs[pos:pos + 4]); pos += 4          # (wproj, wa2t, sel, bias)
        layer_refs.append(ch)
    wl_ref, bl_ref, meta_ref, wc_ref, bc_ref = refs[pos:pos + 5]; pos += 5
    aggre_ref, pred_ref = refs[pos], refs[pos + 1]
    assert len(refs) == pos + 2

    # ---- per-channel GAT stacks (statically unrolled; activations stay in VMEM) --------
    ch_outs = []
    for c in range(nchannel):
        h = feat_refs[c][...]                                # (Nn0, F)
        for i in range(nlayer):
            wproj_ref, wa2t_ref, sel_ref, bias_ref = layer_refs[c][i]
            H, D = nheads[i], nhid
            # One wide projection: feat @ [W_0 | .. | W_{H-1} | W_0 a1_0 | .. | W_{H-1} a1_{H-1}]
            proj = jnp.dot(h, wproj_ref[...], preferred_element_type=jnp.float32)   # (Nn, H*D+H)
            hn = proj[:, :H * D]                                                    # (Nn, H*D)
            s1_all = proj[:, H * D:]                                                # (Nn, H)
            # Target-row gather of s1 via a static 0/1 selection matmul (no gather op).
            s1 = jnp.dot(sel_ref[...], s1_all, preferred_element_type=jnp.float32)  # (Nt, H)
            # s2[h, n] = feat[n] . (W_h a2_h): contract dim 1 with dim 1, no transposed input.
            s2 = lax.dot_general(wa2t_ref[...], h, (((1,), (1,)), ((), ())),
                                 preferred_element_type=jnp.float32)                # (H, Nn)
            bias = bias_ref[...]                             # 0 on edges, -9e15 elsewhere
            heads = []
            for hh in range(H):                              # statically unrolled, H small
                e = s1[:, hh:hh + 1] + s2[hh:hh + 1, :]      # (Nt, Nn) VPU broadcast add
                e = jnp.where(e >= 0.0, e, alpha * e) + bias  # LeakyReLU + additive edge mask
                m = jnp.max(e, axis=1, keepdims=True)
                p = jnp.exp(e - m)
                att = p * pl.reciprocal(jnp.sum(p, axis=1, keepdims=True), approx=True)
                # TODO(synk): F.dropout(att) is identity in eval mode; omitted.
                hp = jnp.dot(att, hn[:, hh * D:(hh + 1) * D],
                             preferred_element_type=jnp.float32)                    # (Nt, D)
                heads.append(jnp.where(hp > 0.0, hp,
                                       jnp.exp(jnp.minimum(hp, 0.0)) - 1.0))        # ELU
            h = jnp.concatenate(heads, axis=1)               # (Nt, H*D), stays in VMEM
            # TODO(synk): F.dropout(x) before each layer is identity in eval mode; omitted.
        ch_outs.append(h)                                    # (nnode, H_last*D)

    # ---- HeteroAttLayer + supervised linear head (fused, channels unrolled) ------------
    wl = wl_ref[...]
    bl = bl_ref[...]
    new_hs, scores = [], []
    for c in range(nchannel):
        nh = jnp.tanh(jnp.dot(ch_outs[c], wl, preferred_element_type=jnp.float32) + bl)  # (N, A)
        new_hs.append(nh)
        scores.append(jnp.sum(nh * meta_ref[c:c + 1, :]) / float(nnode))
    m = scores[0]
    for s in scores[1:]:
        m = jnp.maximum(m, s)
    exps = [jnp.exp(s - m) for s in scores]
    tot = exps[0]
    for e_ in exps[1:]:
        tot = tot + e_
    aggre = (exps[0] / tot) * new_hs[0]
    for c in range(1, nchannel):
        aggre = aggre + (exps[c] / tot) * new_hs[c]
    aggre_ref[...] = aggre
    pred_ref[...] = jnp.dot(aggre, wc_ref[...], preferred_element_type=jnp.float32) + bc_ref[...]


# --------------------------------------------------------------------------------------
# Whole-model jitted forward: exactly ONE pallas_call per forward pass
# --------------------------------------------------------------------------------------
def make_forward(cfg):
    nchannel, nlayer = cfg["nchannel"], cfg["nlayer"]
    nheads, nhid, alpha = tuple(int(h) for h in cfg["nheads"]), int(cfg["nhid"]), float(cfg["alpha"])

    @jax.jit
    def fwd(x, structs, prep):
        nnode = structs[0]["layers"][nlayer - 1]["sel"].shape[0]
        A = prep["wl"].shape[1]
        L = prep["wc"].shape[1]

        inputs = []
        for c in range(nchannel):
            # initial gather feats[sample_list[-1]]: one tiny XLA gather per channel
            inputs.append(jnp.take(x, structs[c]["init_idx"], axis=0))
        for c in range(nchannel):
            for i in range(nlayer):
                lp, st = prep["homo"][c][i], structs[c]["layers"][i]
                inputs += [lp["wproj"], lp["wa2t"], st["sel"], st["bias"]]
        inputs += [prep["wl"], prep["bl"], prep["meta"], prep["wc"], prep["bc"]]

        kernel = functools.partial(_han_fused_kernel, nchannel=nchannel, nlayer=nlayer,
                                   nheads=nheads, nhid=nhid, alpha=alpha, nnode=int(nnode))
        return pl.pallas_call(
            kernel,
            out_shape=(jax.ShapeDtypeStruct((int(nnode), int(A)), jnp.float32),
                       jax.ShapeDtypeStruct((int(nnode), int(L)), jnp.float32)),
            in_specs=[_VMEM] * len(inputs),
            out_specs=(_VMEM, _VMEM),
            compiler_params=pltpu.CompilerParams(vmem_limit_bytes=32 * 1024 * 1024),
        )(*inputs)

    return fwd


# --------------------------------------------------------------------------------------
# One-time host-side weight packing (not in the hot path)
# --------------------------------------------------------------------------------------
def prepare_params(params, cfg):
    """Per (channel, layer):
       wproj = [W_0 | .. | W_{H-1} | W_0@a1_0 | .. | W_{H-1}@a1_{H-1}]  (F, H*D + H)
       wa2t  = rows (W_h @ a2_h)^T                                      (H, F)"""
    prep = {"homo": []}
    for c in range(cfg["nchannel"]):
        ch = []
        for i in range(cfg["nlayer"]):
            heads = params["homo"][c][i]
            Ws = [np.asarray(W, np.float32) for (W, _, _) in heads]
            wa1 = [np.asarray(W, np.float32) @ np.asarray(a1, np.float32) for (W, a1, _) in heads]
            wa2 = [np.asarray(W, np.float32) @ np.asarray(a2, np.float32) for (W, _, a2) in heads]
            wproj = np.concatenate(Ws + wa1, axis=1)
            wa2t = np.concatenate([w.T for w in wa2], axis=0)
            ch.append({"wproj": jnp.asarray(wproj, jnp.float32),
                       "wa2t": jnp.asarray(wa2t, jnp.float32)})
        prep["homo"].append(ch)
    for k in ("wl", "bl", "meta", "wc", "bc"):
        prep[k] = params[k]
    return prep


# --------------------------------------------------------------------------------------
# Graph preprocessing (HomoAttModel.sample / transform), deterministic (neigh_por = 1.0)
# --------------------------------------------------------------------------------------
def sample_graph(adj_flat, adj_deg, samples, nlayer, neigh_por):
    sample_list = [np.asarray(samples, dtype=np.int64)]
    adj_list = []
    for _ in range(nlayer):
        new_samples = set(int(v) for v in sample_list[-1])
        new_adjs = []
        for s in sample_list[-1].tolist():
            deg = int(adj_deg[s])
            nneighbor = int(neigh_por * deg) + 1
            start = int(adj_deg[:s].sum())
            # neigh_por == 1.0  =>  deg <= nneighbor always: take all neighbors (deterministic)
            assert deg <= nneighbor
            curr = [int(v) for v in adj_flat[start:start + deg]]
            new_samples.update(curr)
            pairs = [[s, c] for c in curr]
            pairs.append([s, s])
            new_adjs.append(pairs)
        sample_list.append(np.array(sorted(new_samples), dtype=np.int64))
        adj_list.append(np.array([p for chunk in new_adjs for p in chunk], dtype=np.int64).T)
    return sample_list, adj_list


def transform_graph(sample_list, adj_list):
    trans_adj_list, target_index_outs = [], []
    base = {int(k): v for v, k in enumerate(sample_list[0])}
    for i, adjs in enumerate(adj_list):
        target_index_outs.append(np.array([base[int(k)] for k in adjs[0]], dtype=np.int64))
        base = {int(k): v for v, k in enumerate(sample_list[i + 1])}
        nio = np.array([base[int(k)] for k in adjs[0]], dtype=np.int64)
        nii = np.array([base[int(k)] for k in adjs[1]], dtype=np.int64)
        trans_adj_list.append((nio, nii))
    return target_index_outs, trans_adj_list


def build_structs(adj_flat, adj_deg, samples, nlayer, neigh_por):
    """Static per-channel device-side structures: initial gather indices and, per layer,
    the target-row selection matrix and the additive edge-mask bias (uploaded once)."""
    sample_list, adj_list = sample_graph(adj_flat, adj_deg, samples, nlayer, neigh_por)
    target_index_outs, trans_adj_list = transform_graph(sample_list, adj_list)
    layers = []
    for i in range(nlayer):
        tgt_nodes = sample_list[-i - 2]
        nb_nodes = sample_list[-i - 1]
        tio = target_index_outs[-i - 1]
        nii = trans_adj_list[-i - 1][1]
        N_t, N_nb = len(tgt_nodes), len(nb_nodes)
        mask = np.zeros((N_t, N_nb), dtype=np.float32)
        mask[tio, nii] = 1.0
        bias = (mask - 1.0) * NEG_MAG                 # 0 on edges, -9e15 elsewhere
        nb_pos = {int(k): v for v, k in enumerate(nb_nodes)}
        t2n = np.array([nb_pos[int(k)] for k in tgt_nodes], dtype=np.int64)
        sel = np.zeros((N_t, N_nb), dtype=np.float32)
        sel[np.arange(N_t), t2n] = 1.0                # 0/1 target-row selection matrix
        layers.append({"sel": jnp.asarray(sel, jnp.float32),
                       "bias": jnp.asarray(bias, jnp.float32)})
    return {"init_idx": jnp.asarray(np.asarray(sample_list[-1], np.int32)),
            "layers": layers}


# --------------------------------------------------------------------------------------
# NumPy reference path (float64) — mirrors the PyTorch math exactly
# --------------------------------------------------------------------------------------
def homo_att_head_ref(feat_t, feat_n, W, a1, a2, mask, alpha):
    ft = np.asarray(feat_t, np.float64)
    fn_ = np.asarray(feat_n, np.float64)
    W64 = np.asarray(W, np.float64)
    a1_ = np.asarray(a1, np.float64)
    a2_ = np.asarray(a2, np.float64)
    h_t = ft @ W64
    h_n = fn_ @ W64
    e = h_t @ a1_ + (h_n @ a2_).T
    e = np.where(e >= 0.0, e, alpha * e)
    logits = np.where(mask > 0.5, e, -NEG_MAG)
    m = logits.max(axis=1, keepdims=True)
    p = np.exp(logits - m)
    att = p / p.sum(axis=1, keepdims=True)
    hp = att @ h_n
    return np.where(hp > 0.0, hp, np.exp(np.minimum(hp, 0.0)) - 1.0)


def homo_att_model_forward_ref(feats, adj_flat, adj_deg, samples, layer_params,
                               nlayer, neigh_por, alpha):
    sample_list, adj_list = sample_graph(adj_flat, adj_deg, samples, nlayer, neigh_por)
    target_index_outs, trans_adj_list = transform_graph(sample_list, adj_list)
    x = np.asarray(feats, np.float64)[np.asarray(sample_list[-1])]
    for i in range(nlayer):
        tgt_nodes = sample_list[-i - 2]
        nb_nodes = sample_list[-i - 1]
        tio = target_index_outs[-i - 1]
        nii = trans_adj_list[-i - 1][1]
        N_t, N_nb = len(tgt_nodes), len(nb_nodes)
        mask = np.zeros((N_t, N_nb), dtype=np.float64)
        mask[tio, nii] = 1.0
        nb_pos = {int(k): v for v, k in enumerate(nb_nodes)}
        t2n = np.array([nb_pos[int(k)] for k in tgt_nodes], dtype=np.int64)
        feat_t = x[t2n]
        heads = [homo_att_head_ref(feat_t, x, W, a1, a2, mask, alpha)
                 for (W, a1, a2) in layer_params[i]]
        x = np.concatenate(heads, axis=1)
    return x


def hetero_att_ref(hs, wl, bl, meta, wc, bc):
    hs = np.asarray(hs, np.float64)
    wl = np.asarray(wl, np.float64)
    bl = np.asarray(bl, np.float64)
    meta = np.asarray(meta, np.float64)
    wc = np.asarray(wc, np.float64)
    bc = np.asarray(bc, np.float64)
    C, N, _ = hs.shape
    new_hs = np.tanh(hs @ wl + bl)
    scores = np.array([(new_hs[i] * meta[i]).sum() / N for i in range(C)])
    w = np.exp(scores - scores.max())
    w = w / w.sum()
    aggre = np.einsum("c,cna->na", w, new_hs)
    pred = aggre @ wc + bc
    return aggre, pred


def han_forward_ref(x, graphs, samples, params, cfg):
    homo_out = []
    for c in range(cfg["nchannel"]):
        adj_flat, adj_deg = graphs[c]
        homo_out.append(homo_att_model_forward_ref(
            x, adj_flat, adj_deg, samples, params["homo"][c],
            cfg["nlayer"], cfg["neigh_por"], cfg["alpha"]))
    homo_out = np.stack(homo_out, axis=0)
    return hetero_att_ref(homo_out, params["wl"], params["bl"], params["meta"],
                          params["wc"], params["bc"])


# --------------------------------------------------------------------------------------
# Deterministic parameter / input construction
# --------------------------------------------------------------------------------------
def xavier(key, shape, gain=1.414):
    bound = gain * float(np.sqrt(6.0 / (shape[0] + shape[-1])))
    return jax.random.uniform(key, shape, jnp.float32, -bound, bound)


def build_params(key, cfg):
    kc = [0]

    def nk():
        kc[0] += 1
        return jax.random.fold_in(key, kc[0])

    params = {"homo": []}
    for _c in range(cfg["nchannel"]):
        ch_layers = []
        for i in range(cfg["nlayer"]):
            in_dim = cfg["nfeat"] if i == 0 else cfg["nhid"] * cfg["nheads"][i - 1]
            heads = []
            for _j in range(cfg["nheads"][i]):
                W = xavier(nk(), (in_dim, cfg["nhid"]))
                a = xavier(nk(), (2 * cfg["nhid"], 1))
                heads.append((W, a[:cfg["nhid"], :], a[cfg["nhid"]:, :]))
            ch_layers.append(heads)
        params["homo"].append(ch_layers)

    hdim = cfg["nhid"] * cfg["nheads"][-1]
    params["wl"] = xavier(nk(), (hdim, cfg["nhid"]))
    params["bl"] = jax.random.uniform(nk(), (1, cfg["nhid"]), jnp.float32, -0.1, 0.1)
    params["meta"] = xavier(nk(), (cfg["nchannel"], cfg["nhid"]))
    params["wc"] = xavier(nk(), (cfg["nhid"], cfg["nlabel"]), gain=1.0)
    params["bc"] = jax.random.uniform(nk(), (1, cfg["nlabel"]), jnp.float32, -0.1, 0.1)
    return params


def build_graph(n_nodes, offsets):
    flat, deg = [], []
    for i in range(n_nodes):
        nbrs = sorted({(i + o) % n_nodes for o in offsets} - {i})
        flat.extend(nbrs)
        deg.append(len(nbrs))
    return np.array(flat, dtype=np.int64), np.array(deg, dtype=np.int64)


# --------------------------------------------------------------------------------------
if __name__ == "__main__":
    cfg = dict(nchannel=2, nfeat=32, nhid=16, nlabel=4, nlayer=2,
               nheads=[2, 2], neigh_por=1.0, dropout=0.5, alpha=0.2)
    n_nodes = 10
    samples = [0, 1, 2, 3]

    key = jax.random.PRNGKey(0)
    x = jax.random.normal(jax.random.fold_in(key, 999), (n_nodes, cfg["nfeat"]), jnp.float32)
    graphs = [build_graph(n_nodes, (1, 2, 5)), build_graph(n_nodes, (3, 4, 7))]
    params = build_params(key, cfg)

    # static graph structures + one-time packed weights (host-side, uploaded once)
    structs = [build_structs(graphs[c][0], graphs[c][1], samples,
                             cfg["nlayer"], cfg["neigh_por"])
               for c in range(cfg["nchannel"])]
    prep = prepare_params(params, cfg)

    fwd = make_forward(cfg)
    aggre_d, pred_d = fwd(x, structs, prep)
    jax.block_until_ready((aggre_d, pred_d))
    aggre = np.asarray(aggre_d)
    pred = np.asarray(pred_d)

    aggre_ref, pred_ref = han_forward_ref(np.asarray(x), graphs, samples, params, cfg)

    assert aggre.shape == (len(samples), cfg["nhid"])
    assert pred.shape == (len(samples), cfg["nlabel"])
    assert np.all(np.isfinite(aggre)) and np.all(np.isfinite(pred))
    assert np.allclose(aggre, aggre_ref, rtol=2e-2, atol=2e-2), \
        float(np.abs(aggre - aggre_ref).max())
    assert np.allclose(pred, pred_ref, rtol=2e-2, atol=2e-2), \
        float(np.abs(pred - pred_ref).max())

    print("KERNEL_OK")
</pallas_src>

<mosaic_0001>
module attributes {stable_mosaic.version = 11 : i64} {
  func.func @_han_fused_kernel(%arg0: memref<10x32xf32, #tpu.memory_space<vmem>>, %arg1: memref<10x32xf32, #tpu.memory_space<vmem>>, %arg2: memref<32x34xf32, #tpu.memory_space<vmem>>, %arg3: memref<2x32xf32, #tpu.memory_space<vmem>>, %arg4: memref<9x10xf32, #tpu.memory_space<vmem>>, %arg5: memref<9x10xf32, #tpu.memory_space<vmem>>, %arg6: memref<32x34xf32, #tpu.memory_space<vmem>>, %arg7: memref<2x32xf32, #tpu.memory_space<vmem>>, %arg8: memref<4x9xf32, #tpu.memory_space<vmem>>, %arg9: memref<4x9xf32, #tpu.memory_space<vmem>>, %arg10: memref<32x34xf32, #tpu.memory_space<vmem>>, %arg11: memref<2x32xf32, #tpu.memory_space<vmem>>, %arg12: memref<10x10xf32, #tpu.memory_space<vmem>>, %arg13: memref<10x10xf32, #tpu.memory_space<vmem>>, %arg14: memref<32x34xf32, #tpu.memory_space<vmem>>, %arg15: memref<2x32xf32, #tpu.memory_space<vmem>>, %arg16: memref<4x10xf32, #tpu.memory_space<vmem>>, %arg17: memref<4x10xf32, #tpu.memory_space<vmem>>, %arg18: memref<32x16xf32, #tpu.memory_space<vmem>>, %arg19: memref<1x16xf32, #tpu.memory_space<vmem>>, %arg20: memref<2x16xf32, #tpu.memory_space<vmem>>, %arg21: memref<16x4xf32, #tpu.memory_space<vmem>>, %arg22: memref<1x4xf32, #tpu.memory_space<vmem>>, %arg23: memref<4x16xf32, #tpu.memory_space<vmem>>, %arg24: memref<4x4xf32, #tpu.memory_space<vmem>>) attributes {dimension_semantics = [], scalar_prefetch = 0 : i64, scratch_operands = 0 : i64, tpu.core_type = #tpu.core_type<tc>} {
    %c0 = arith.constant 0 : index
    %c0_0 = arith.constant 0 : index
    %0 = vector.load %arg0[%c0, %c0_0] : memref<10x32xf32, #tpu.memory_space<vmem>>, vector<10x32xf32>
    %c0_1 = arith.constant 0 : index
    %c0_2 = arith.constant 0 : index
    %1 = vector.load %arg2[%c0_1, %c0_2] : memref<32x34xf32, #tpu.memory_space<vmem>>, vector<32x34xf32>
    %cst = arith.constant dense<0.000000e+00> : vector<10x34xf32>
    %2 = tpu.matmul %0, %1, %cst {dimension_numbers = #tpu.dot_dimension_numbers<[1], [0], [0], [1], [0, 0, 1, 1], [], []>} : vector<10x32xf32>, vector<32x34xf32>, vector<10x34xf32> -> vector<10x34xf32>
    %3 = vector.extract_strided_slice %2 {offsets = [0, 0], sizes = [10, 32], strides = [1, 1]} : vector<10x34xf32> to vector<10x32xf32>
    %4 = vector.extract_strided_slice %2 {offsets = [0, 32], sizes = [10, 2], strides = [1, 1]} : vector<10x34xf32> to vector<10x2xf32>
    %c0_3 = arith.constant 0 : index
    %c0_4 = arith.constant 0 : index
    %5 = vector.load %arg4[%c0_3, %c0_4] : memref<9x10xf32, #tpu.memory_space<vmem>>, vector<9x10xf32>
    %cst_5 = arith.constant dense<0.000000e+00> : vector<9x2xf32>
    %6 = tpu.matmul %5, %4, %cst_5 {dimension_numbers = #tpu.dot_dimension_numbers<[1], [0], [0], [1], [0, 0, 1, 1], [], []>} : vector<9x10xf32>, vector<10x2xf32>, vector<9x2xf32> -> vector<9x2xf32>
    %c0_6 = arith.constant 0 : index
    %c0_7 = arith.constant 0 : index
    %7 = vector.load %arg3[%c0_6, %c0_7] : memref<2x32xf32, #tpu.memory_space<vmem>>, vector<2x32xf32>
    %cst_8 = arith.constant dense<0.000000e+00> : vector<2x10xf32>
    %8 = tpu.matmul %7, %0, %cst_8 {dimension_numbers = #tpu.dot_dimension_numbers<[1], [1], [0], [0], [0, 0, 1, 0], [], []>} : vector<2x32xf32>, vector<10x32xf32>, vector<2x10xf32> -> vector<2x10xf32>
    %c0_9 = arith.constant 0 : index
    %c0_10 = arith.constant 0 : index
    %9 = vector.load %arg5[%c0_9, %c0_10] : memref<9x10xf32, #tpu.memory_space<vmem>>, vector<9x10xf32>
    %10 = vector.extract_strided_slice %6 {offsets = [0, 0], sizes = [9, 1], strides = [1, 1]} : vector<9x2xf32> to vector<9x1xf32>
    %11 = vector.extract_strided_slice %8 {offsets = [0, 0], sizes = [1, 10], strides = [1, 1]} : vector<2x10xf32> to vector<1x10xf32>
    %12 = vector.broadcast %10 : vector<9x1xf32> to vector<9x10xf32>
    %13 = vector.broadcast %11 : vector<1x10xf32> to vector<9x10xf32>
    %14 = arith.addf %12, %13 : vector<9x10xf32>
    %cst_11 = arith.constant 0.000000e+00 : f32
    %15 = vector.broadcast %cst_11 : f32 to vector<9x10xf32>
    %16 = arith.cmpf oge, %14, %15 : vector<9x10xf32>
    %cst_12 = arith.constant 2.000000e-01 : f32
    %17 = vector.broadcast %cst_12 : f32 to vector<9x10xf32>
    %18 = arith.mulf %17, %14 : vector<9x10xf32>
    %19 = arith.select %16, %14, %18 : vector<9x10xi1>, vector<9x10xf32>
    %20 = arith.addf %19, %9 : vector<9x10xf32>
    %cst_13 = arith.constant dense<0xFF800000> : vector<9xf32>
    %21 = vector.multi_reduction <maximumf>, %20, %cst_13 [1] : vector<9x10xf32> to vector<9xf32>
    %22 = vector.shape_cast %21 : vector<9xf32> to vector<9x1xf32>
    %23 = vector.broadcast %22 : vector<9x1xf32> to vector<9x10xf32>
    %24 = arith.subf %20, %23 : vector<9x10xf32>
    %25 = math.exp %24 : vector<9x10xf32>
    %cst_14 = arith.constant dense<0.000000e+00> : vector<9xf32>
    %26 = vector.multi_reduction <add>, %25, %cst_14 [1] : vector<9x10xf32> to vector<9xf32>
    %27 = vector.shape_cast %26 : vector<9xf32> to vector<9x1xf32>
    %28 = tpu.reciprocal %27 {approx = true} : vector<9x1xf32> -> vector<9x1xf32>
    %29 = vector.broadcast %28 : vector<9x1xf32> to vector<9x10xf32>
    %30 = arith.mulf %25, %29 : vector<9x10xf32>
    %31 = vector.extract_strided_slice %3 {offsets = [0, 0], sizes = [10, 16], strides = [1, 1]} : vector<10x32xf32> to vector<10x16xf32>
    %cst_15 = arith.constant dense<0.000000e+00> : vector<9x16xf32>
    %32 = tpu.matmul %30, %31, %cst_15 {dimension_numbers = #tpu.dot_dimension_numbers<[1], [0], [0], [1], [0, 0, 1, 1], [], []>} : vector<9x10xf32>, vector<10x16xf32>, vector<9x16xf32> -> vector<9x16xf32>
    %cst_16 = arith.constant 0.000000e+00 : f32
    %33 = vector.broadcast %cst_16 : f32 to vector<9x16xf32>
    %34 = arith.cmpf ogt, %32, %33 : vector<9x16xf32>
    %cst_17 = arith.constant 0.000000e+00 : f32
    %35 = vector.broadcast %cst_17 : f32 to vector<9x16xf32>
    %36 = arith.minimumf %32, %35 : vector<9x16xf32>
    %37 = math.exp %36 : vector<9x16xf32>
    %cst_18 = arith.constant 1.000000e+00 : f32
    %38 = vector.broadcast %cst_18 : f32 to vector<9x16xf32>
    %39 = arith.subf %37, %38 : vector<9x16xf32>
    %40 = arith.select %34, %32, %39 : vector<9x16xi1>, vector<9x16xf32>
    %41 = vector.extract_strided_slice %6 {offsets = [0, 1], sizes = [9, 1], strides = [1, 1]} : vector<9x2xf32> to vector<9x1xf32>
    %42 = vector.extract_strided_slice %8 {offsets = [1, 0], sizes = [1, 10], strides = [1, 1]} : vector<2x10xf32> to vector<1x10xf32>
    %43 = vector.broadcast %41 : vector<9x1xf32> to vector<9x10xf32>
    %44 = vector.broadcast %42 : vector<1x10xf32> to vector<9x10xf32>
    %45 = arith.addf %43, %44 : vector<9x10xf32>
    %cst_19 = arith.constant 0.000000e+00 : f32
    %46 = vector.broadcast %cst_19 : f32 to vector<9x10xf32>
    %47 = arith.cmpf oge, %45, %46 : vector<9x10xf32>
    %cst_20 = arith.constant 2.000000e-01 : f32
    %48 = vector.broadcast %cst_20 : f32 to vector<9x10xf32>
    %49 = arith.mulf %48, %45 : vector<9x10xf32>
    %50 = arith.select %47, %45, %49 : vector<9x10xi1>, vector<9x10xf32>
    %51 = arith.addf %50, %9 : vector<9x10xf32>
    %cst_21 = arith.constant dense<0xFF800000> : vector<9xf32>
    %52 = vector.multi_reduction <maximumf>, %51, %cst_21 [1] : vector<9x10xf32> to vector<9xf32>
    %53 = vector.shape_cast %52 : vector<9xf32> to vector<9x1xf32>
    %54 = vector.broadcast %53 : vector<9x1xf32> to vector<9x10xf32>
    %55 = arith.subf %51, %54 : vector<9x10xf32>
    %56 = math.exp %55 : vector<9x10xf32>
    %cst_22 = arith.constant dense<0.000000e+00> : vector<9xf32>
    %57 = vector.multi_reduction <add>, %56, %cst_22 [1] : vector<9x10xf32> to vector<9xf32>
    %58 = vector.shape_cast %57 : vector<9xf32> to vector<9x1xf32>
    %59 = tpu.reciprocal %58 {approx = true} : vector<9x1xf32> -> vector<9x1xf32>
    %60 = vector.broadcast %59 : vector<9x1xf32> to vector<9x10xf32>
    %61 = arith.mulf %56, %60 : vector<9x10xf32>
    %62 = vector.extract_strided_slice %3 {offsets = [0, 16], sizes = [10, 16], strides = [1, 1]} : vector<10x32xf32> to vector<10x16xf32>
    %cst_23 = arith.constant dense<0.000000e+00> : vector<9x16xf32>
    %63 = tpu.matmul %61, %62, %cst_23 {dimension_numbers = #tpu.dot_dimension_numbers<[1], [0], [0], [1], [0, 0, 1, 1], [], []>} : vector<9x10xf32>, vector<10x16xf32>, vector<9x16xf32> -> vector<9x16xf32>
    %cst_24 = arith.constant 0.000000e+00 : f32
    %64 = vector.broadcast %cst_24 : f32 to vector<9x16xf32>
    %65 = arith.cmpf ogt, %63, %64 : vector<9x16xf32>
    %cst_25 = arith.constant 0.000000e+00 : f32
    %66 = vector.broadcast %cst_25 : f32 to vector<9x16xf32>
    %67 = arith.minimumf %63, %66 : vector<9x16xf32>
    %68 = math.exp %67 : vector<9x16xf32>
    %cst_26 = arith.constant 1.000000e+00 : f32
    %69 = vector.broadcast %cst_26 : f32 to vector<9x16xf32>
    %70 = arith.subf %68, %69 : vector<9x16xf32>
    %71 = arith.select %65, %63, %70 : vector<9x16xi1>, vector<9x16xf32>
    %72 = tpu.concatenate %40, %71 in 1 : vector<9x16xf32>, vector<9x16xf32> -> vector<9x32xf32>
    %c0_27 = arith.constant 0 : index
    %c0_28 = arith.constant 0 : index
    %73 = vector.load %arg6[%c0_27, %c0_28] : memref<32x34xf32, #tpu.memory_space<vmem>>, vector<32x34xf32>
    %cst_29 = arith.constant dense<0.000000e+00> : vector<9x34xf32>
    %74 = tpu.matmul %72, %73, %cst_29 {dimension_numbers = #tpu.dot_dimension_numbers<[1], [0], [0], [1], [0, 0, 1, 1], [], []>} : vector<9x32xf32>, vector<32x34xf32>, vector<9x34xf32> -> vector<9x34xf32>
    %75 = vector.extract_strided_slice %74 {offsets = [0, 0], sizes = [9, 32], strides = [1, 1]} : vector<9x34xf32> to vector<9x32xf32>
    %76 = vector.extract_strided_slice %74 {offsets = [0, 32], sizes = [9, 2], strides = [1, 1]} : vector<9x34xf32> to vector<9x2xf32>
    %c0_30 = arith.constant 0 : index
    %c0_31 = arith.constant 0 : index
    %77 = vector.load %arg8[%c0_30, %c0_31] : memref<4x9xf32, #tpu.memory_space<vmem>>, vector<4x9xf32>
    %cst_32 = arith.constant dense<0.000000e+00> : vector<4x2xf32>
    %78 = tpu.matmul %77, %76, %cst_32 {dimension_numbers = #tpu.dot_dimension_numbers<[1], [0], [0], [1], [0, 0, 1, 1], [], []>} : vector<4x9xf32>, vector<9x2xf32>, vector<4x2xf32> -> vector<4x2xf32>
    %c0_33 = arith.constant 0 : index
    %c0_34 = arith.constant 0 : index
    %79 = vector.load %arg7[%c0_33, %c0_34] : memref<2x32xf32, #tpu.memory_space<vmem>>, vector<2x32xf32>
    %cst_35 = arith.constant dense<0.000000e+00> : vector<2x9xf32>
    %80 = tpu.matmul %79, %72, %cst_35 {dimension_numbers = #tpu.dot_dimension_numbers<[1], [1], [0], [0], [0, 0, 1, 0], [], []>} : vector<2x32xf32>, vector<9x32xf32>, vector<2x9xf32> -> vector<2x9xf32>
    %c0_36 = arith.constant 0 : index
    %c0_37 = arith.constant 0 : index
    %81 = vector.load %arg9[%c0_36, %c0_37] : memref<4x9xf32, #tpu.memory_space<vmem>>, vector<4x9xf32>
    %82 = vector.extract_strided_slice %78 {offsets = [0, 0], sizes = [4, 1], strides = [1, 1]} : vector<4x2xf32> to vector<4x1xf32>
    %83 = vector.extract_strided_slice %80 {offsets = [0, 0], sizes = [1, 9], strides = [1, 1]} : vector<2x9xf32> to vector<1x9xf32>
    %84 = vector.broadcast %82 : vector<4x1xf32> to vector<4x9xf32>
    %85 = vector.broadcast %83 : vector<1x9xf32> to vector<4x9xf32>
    %86 = arith.addf %84, %85 : vector<4x9xf32>
    %cst_38 = arith.constant 0.000000e+00 : f32
    %87 = vector.broadcast %cst_38 : f32 to vector<4x9xf32>
    %88 = arith.cmpf oge, %86, %87 : vector<4x9xf32>
    %cst_39 = arith.constant 2.000000e-01 : f32
    %89 = vector.broadcast %cst_39 : f32 to vector<4x9xf32>
    %90 = arith.mulf %89, %86 : vector<4x9xf32>
    %91 = arith.select %88, %86, %90 : vector<4x9xi1>, vector<4x9xf32>
    %92 = arith.addf %91, %81 : vector<4x9xf32>
    %cst_40 = arith.constant dense<0xFF800000> : vector<4xf32>
    %93 = vector.multi_reduction <maximumf>, %92, %cst_40 [1] : vector<4x9xf32> to vector<4xf32>
    %94 = vector.shape_cast %93 : vector<4xf32> to vector<4x1xf32>
    %95 = vector.broadcast %94 : vector<4x1xf32> to vector<4x9xf32>
    %96 = arith.subf %92, %95 : vector<4x9xf32>
    %97 = math.exp %96 : vector<4x9xf32>
    %cst_41 = arith.constant dense<0.000000e+00> : vector<4xf32>
    %98 = vector.multi_reduction <add>, %97, %cst_41 [1] : vector<4x9xf32> to vector<4xf32>
    %99 = vector.shape_cast %98 : vector<4xf32> to vector<4x1xf32>
    %100 = tpu.reciprocal %99 {approx = true} : vector<4x1xf32> -> vector<4x1xf32>
    %101 = vector.broadcast %100 : vector<4x1xf32> to vector<4x9xf32>
    %102 = arith.mulf %97, %101 : vector<4x9xf32>
    %103 = vector.extract_strided_slice %75 {offsets = [0, 0], sizes = [9, 16], strides = [1, 1]} : vector<9x32xf32> to vector<9x16xf32>
    %cst_42 = arith.constant dense<0.000000e+00> : vector<4x16xf32>
    %104 = tpu.matmul %102, %103, %cst_42 {dimension_numbers = #tpu.dot_dimension_numbers<[1], [0], [0], [1], [0, 0, 1, 1], [], []>} : vector<4x9xf32>, vector<9x16xf32>, vector<4x16xf32> -> vector<4x16xf32>
    %cst_43 = arith.constant 0.000000e+00 : f32
    %105 = vector.broadcast %cst_43 : f32 to vector<4x16xf32>
    %106 = arith.cmpf ogt, %104, %105 : vector<4x16xf32>
    %cst_44 = arith.constant 0.000000e+00 : f32
    %107 = vector.broadcast %cst_44 : f32 to vector<4x16xf32>
    %108 = arith.minimumf %104, %107 : vector<4x16xf32>
    %109 = math.exp %108 : vector<4x16xf32>
    %cst_45 = arith.constant 1.000000e+00 : f32
    %110 = vector.broadcast %cst_45 : f32 to vector<4x16xf32>
    %111 = arith.subf %109, %110 : vector<4x16xf32>
    %112 = arith.select %106, %104, %111 : vector<4x16xi1>, vector<4x16xf32>
    %113 = vector.extract_strided_slice %78 {offsets = [0, 1], sizes = [4, 1], strides = [1, 1]} : vector<4x2xf32> to vector<4x1xf32>
    %114 = vector.extract_strided_slice %80 {offsets = [1, 0], sizes = [1, 9], strides = [1, 1]} : vector<2x9xf32> to vector<1x9xf32>
    %115 = vector.broadcast %113 : vector<4x1xf32> to vector<4x9xf32>
    %116 = vector.broadcast %114 : vector<1x9xf32> to vector<4x9xf32>
    %117 = arith.addf %115, %116 : vector<4x9xf32>
    %cst_46 = arith.constant 0.000000e+00 : f32
    %118 = vector.broadcast %cst_46 : f32 to vector<4x9xf32>
    %119 = arith.cmpf oge, %117, %118 : vector<4x9xf32>
    %cst_47 = arith.constant 2.000000e-01 : f32
    %120 = vector.broadcast %cst_47 : f32 to vector<4x9xf32>
    %121 = arith.mulf %120, %117 : vector<4x9xf32>
    %122 = arith.select %119, %117, %121 : vector<4x9xi1>, vector<4x9xf32>
    %123 = arith.addf %122, %81 : vector<4x9xf32>
    %cst_48 = arith.constant dense<0xFF800000> : vector<4xf32>
    %124 = vector.multi_reduction <maximumf>, %123, %cst_48 [1] : vector<4x9xf32> to vector<4xf32>
    %125 = vector.shape_cast %124 : vector<4xf32> to vector<4x1xf32>
    %126 = vector.broadcast %125 : vector<4x1xf32> to vector<4x9xf32>
    %127 = arith.subf %123, %126 : vector<4x9xf32>
    %128 = math.exp %127 : vector<4x9xf32>
    %cst_49 = arith.constant dense<0.000000e+00> : vector<4xf32>
    %129 = vector.multi_reduction <add>, %128, %cst_49 [1] : vector<4x9xf32> to vector<4xf32>
    %130 = vector.shape_cast %129 : vector<4xf32> to vector<4x1xf32>
    %131 = tpu.reciprocal %130 {approx = true} : vector<4x1xf32> -> vector<4x1xf32>
    %132 = vector.broadcast %131 : vector<4x1xf32> to vector<4x9xf32>
    %133 = arith.mulf %128, %132 : vector<4x9xf32>
    %134 = vector.extract_strided_slice %75 {offsets = [0, 16], sizes = [9, 16], strides = [1, 1]} : vector<9x32xf32> to vector<9x16xf32>
    %cst_50 = arith.constant dense<0.000000e+00> : vector<4x16xf32>
    %135 = tpu.matmul %133, %134, %cst_50 {dimension_numbers = #tpu.dot_dimension_numbers<[1], [0], [0], [1], [0, 0, 1, 1], [], []>} : vector<4x9xf32>, vector<9x16xf32>, vector<4x16xf32> -> vector<4x16xf32>
    %cst_51 = arith.constant 0.000000e+00 : f32
    %136 = vector.broadcast %cst_51 : f32 to vector<4x16xf32>
    %137 = arith.cmpf ogt, %135, %136 : vector<4x16xf32>
    %cst_52 = arith.constant 0.000000e+00 : f32
    %138 = vector.broadcast %cst_52 : f32 to vector<4x16xf32>
    %139 = arith.minimumf %135, %138 : vector<4x16xf32>
    %140 = math.exp %139 : vector<4x16xf32>
    %cst_53 = arith.constant 1.000000e+00 : f32
    %141 = vector.broadcast %cst_53 : f32 to vector<4x16xf32>
    %142 = arith.subf %140, %141 : vector<4x16xf32>
    %143 = arith.select %137, %135, %142 : vector<4x16xi1>, vector<4x16xf32>
    %144 = tpu.concatenate %112, %143 in 1 : vector<4x16xf32>, vector<4x16xf32> -> vector<4x32xf32>
    %c0_54 = arith.constant 0 : index
    %c0_55 = arith.constant 0 : index
    %145 = vector.load %arg1[%c0_54, %c0_55] : memref<10x32xf32, #tpu.memory_space<vmem>>, vector<10x32xf32>
    %c0_56 = arith.constant 0 : index
    %c0_57 = arith.constant 0 : index
    %146 = vector.load %arg10[%c0_56, %c0_57] : memref<32x34xf32, #tpu.memory_space<vmem>>, vector<32x34xf32>
    %cst_58 = arith.constant dense<0.000000e+00> : vector<10x34xf32>
    %147 = tpu.matmul %145, %146, %cst_58 {dimension_numbers = #tpu.dot_dimension_numbers<[1], [0], [0], [1], [0, 0, 1, 1], [], []>} : vector<10x32xf32>, vector<32x34xf32>, vector<10x34xf32> -> vector<10x34xf32>
    %148 = vector.extract_strided_slice %147 {offsets = [0, 0], sizes = [10, 32], strides = [1, 1]} : vector<10x34xf32> to vector<10x32xf32>
    %149 = vector.extract_strided_slice %147 {offsets = [0, 32], sizes = [10, 2], strides = [1, 1]} : vector<10x34xf32> to vector<10x2xf32>
    %c0_59 = arith.constant 0 : index
    %c0_60 = arith.constant 0 : index
    %150 = vector.load %arg12[%c0_59, %c0_60] : memref<10x10xf32, #tpu.memory_space<vmem>>, vector<10x10xf32>
    %cst_61 = arith.constant dense<0.000000e+00> : vector<10x2xf32>
    %151 = tpu.matmul %150, %149, %cst_61 {dimension_numbers = #tpu.dot_dimension_numbers<[1], [0], [0], [1], [0, 0, 1, 1], [], []>} : vector<10x10xf32>, vector<10x2xf32>, vector<10x2xf32> -> vector<10x2xf32>
    %c0_62 = arith.constant 0 : index
    %c0_63 = arith.constant 0 : index
    %152 = vector.load %arg11[%c0_62, %c0_63] : memref<2x32xf32, #tpu.memory_space<vmem>>, vector<2x32xf32>
    %cst_64 = arith.constant dense<0.000000e+00> : vector<2x10xf32>
    %153 = tpu.matmul %152, %145, %cst_64 {dimension_numbers = #tpu.dot_dimension_numbers<[1], [1], [0], [0], [0, 0, 1, 0], [], []>} : vector<2x32xf32>, vector<10x32xf32>, vector<2x10xf32> -> vector<2x10xf32>
    %c0_65 = arith.constant 0 : index
    %c0_66 = arith.constant 0 : index
    %154 = vector.load %arg13[%c0_65, %c0_66] : memref<10x10xf32, #tpu.memory_space<vmem>>, vector<10x10xf32>
    %155 = vector.extract_strided_slice %151 {offsets = [0, 0], sizes = [10, 1], strides = [1, 1]} : vector<10x2xf32> to vector<10x1xf32>
    %156 = vector.extract_strided_slice %153 {offsets = [0, 0], sizes = [1, 10], strides = [1, 1]} : vector<2x10xf32> to vector<1x10xf32>
    %157 = vector.broadcast %155 : vector<10x1xf32> to vector<10x10xf32>
    %158 = vector.broadcast %156 : vector<1x10xf32> to vector<10x10xf32>
    %159 = arith.addf %157, %158 : vector<10x10xf32>
    %cst_67 = arith.constant 0.000000e+00 : f32
    %160 = vector.broadcast %cst_67 : f32 to vector<10x10xf32>
    %161 = arith.cmpf oge, %159, %160 : vector<10x10xf32>
    %cst_68 = arith.constant 2.000000e-01 : f32
    %162 = vector.broadcast %cst_68 : f32 to vector<10x10xf32>
    %163 = arith.mulf %162, %159 : vector<10x10xf32>
    %164 = arith.select %161, %159, %163 : vector<10x10xi1>, vector<10x10xf32>
    %165 = arith.addf %164, %154 : vector<10x10xf32>
    %cst_69 = arith.constant dense<0xFF800000> : vector<10xf32>
    %166 = vector.multi_reduction <maximumf>, %165, %cst_69 [1] : vector<10x10xf32> to vector<10xf32>
    %167 = vector.shape_cast %166 : vector<10xf32> to vector<10x1xf32>
    %168 = vector.broadcast %167 : vector<10x1xf32> to vector<10x10xf32>
    %169 = arith.subf %165, %168 : vector<10x10xf32>
    %170 = math.exp %169 : vector<10x10xf32>
    %cst_70 = arith.constant dense<0.000000e+00> : vector<10xf32>
    %171 = vector.multi_reduction <add>, %170, %cst_70 [1] : vector<10x10xf32> to vector<10xf32>
    %172 = vector.shape_cast %171 : vector<10xf32> to vector<10x1xf32>
    %173 = tpu.reciprocal %172 {approx = true} : vector<10x1xf32> -> vector<10x1xf32>
    %174 = vector.broadcast %173 : vector<10x1xf32> to vector<10x10xf32>
    %175 = arith.mulf %170, %174 : vector<10x10xf32>
    %176 = vector.extract_strided_slice %148 {offsets = [0, 0], sizes = [10, 16], strides = [1, 1]} : vector<10x32xf32> to vector<10x16xf32>
    %cst_71 = arith.constant dense<0.000000e+00> : vector<10x16xf32>
    %177 = tpu.matmul %175, %176, %cst_71 {dimension_numbers = #tpu.dot_dimension_numbers<[1], [0], [0], [1], [0, 0, 1, 1], [], []>} : vector<10x10xf32>, vector<10x16xf32>, vector<10x16xf32> -> vector<10x16xf32>
    %cst_72 = arith.constant 0.000000e+00 : f32
    %178 = vector.broadcast %cst_72 : f32 to vector<10x16xf32>
    %179 = arith.cmpf ogt, %177, %178 : vector<10x16xf32>
    %cst_73 = arith.constant 0.000000e+00 : f32
    %180 = vector.broadcast %cst_73 : f32 to vector<10x16xf32>
    %181 = arith.minimumf %177, %180 : vector<10x16xf32>
    %182 = math.exp %181 : vector<10x16xf32>
    %cst_74 = arith.constant 1.000000e+00 : f32
    %183 = vector.broadcast %cst_74 : f32 to vector<10x16xf32>
    %184 = arith.subf %182, %183 : vector<10x16xf32>
    %185 = arith.select %179, %177, %184 : vector<10x16xi1>, vector<10x16xf32>
    %186 = vector.extract_strided_slice %151 {offsets = [0, 1], sizes = [10, 1], strides = [1, 1]} : vector<10x2xf32> to vector<10x1xf32>
    %187 = vector.extract_strided_slice %153 {offsets = [1, 0], sizes = [1, 10], strides = [1, 1]} : vector<2x10xf32> to vector<1x10xf32>
    %188 = vector.broadcast %186 : vector<10x1xf32> to vector<10x10xf32>
    %189 = vector.broadcast %187 : vector<1x10xf32> to vector<10x10xf32>
    %190 = arith.addf %188, %189 : vector<10x10xf32>
    %cst_75 = arith.constant 0.000000e+00 : f32
    %191 = vector.broadcast %cst_75 : f32 to vector<10x10xf32>
    %192 = arith.cmpf oge, %190, %191 : vector<10x10xf32>
    %cst_76 = arith.constant 2.000000e-01 : f32
    %193 = vector.broadcast %cst_76 : f32 to vector<10x10xf32>
    %194 = arith.mulf %193, %190 : vector<10x10xf32>
    %195 = arith.select %192, %190, %194 : vector<10x10xi1>, vector<10x10xf32>
    %196 = arith.addf %195, %154 : vector<10x10xf32>
    %cst_77 = arith.constant dense<0xFF800000> : vector<10xf32>
    %197 = vector.multi_reduction <maximumf>, %196, %cst_77 [1] : vector<10x10xf32> to vector<10xf32>
    %198 = vector.shape_cast %197 : vector<10xf32> to vector<10x1xf32>
    %199 = vector.broadcast %198 : vector<10x1xf32> to vector<10x10xf32>
    %200 = arith.subf %196, %199 : vector<10x10xf32>
    %201 = math.exp %200 : vector<10x10xf32>
    %cst_78 = arith.constant dense<0.000000e+00> : vector<10xf32>
    %202 = vector.multi_reduction <add>, %201, %cst_78 [1] : vector<10x10xf32> to vector<10xf32>
    %203 = vector.shape_cast %202 : vector<10xf32> to vector<10x1xf32>
    %204 = tpu.reciprocal %203 {approx = true} : vector<10x1xf32> -> vector<10x1xf32>
    %205 = vector.broadcast %204 : vector<10x1xf32> to vector<10x10xf32>
    %206 = arith.mulf %201, %205 : vector<10x10xf32>
    %207 = vector.extract_strided_slice %148 {offsets = [0, 16], sizes = [10, 16], strides = [1, 1]} : vector<10x32xf32> to vector<10x16xf32>
    %cst_79 = arith.constant dense<0.000000e+00> : vector<10x16xf32>
    %208 = tpu.matmul %206, %207, %cst_79 {dimension_numbers = #tpu.dot_dimension_numbers<[1], [0], [0], [1], [0, 0, 1, 1], [], []>} : vector<10x10xf32>, vector<10x16xf32>, vector<10x16xf32> -> vector<10x16xf32>
    %cst_80 = arith.constant 0.000000e+00 : f32
    %209 = vector.broadcast %cst_80 : f32 to vector<10x16xf32>
    %210 = arith.cmpf ogt, %208, %209 : vector<10x16xf32>
    %cst_81 = arith.constant 0.000000e+00 : f32
    %211 = vector.broadcast %cst_81 : f32 to vector<10x16xf32>
    %212 = arith.minimumf %208, %211 : vector<10x16xf32>
    %213 = math.exp %212 : vector<10x16xf32>
    %cst_82 = arith.constant 1.000000e+00 : f32
    %214 = vector.broadcast %cst_82 : f32 to vector<10x16xf32>
    %215 = arith.subf %213, %214 : vector<10x16xf32>
    %216 = arith.select %210, %208, %215 : vector<10x16xi1>, vector<10x16xf32>
    %217 = tpu.concatenate %185, %216 in 1 : vector<10x16xf32>, vector<10x16xf32> -> vector<10x32xf32>
    %c0_83 = arith.constant 0 : index
    %c0_84 = arith.constant 0 : index
    %218 = vector.load %arg14[%c0_83, %c0_84] : memref<32x34xf32, #tpu.memory_space<vmem>>, vector<32x34xf32>
    %cst_85 = arith.constant dense<0.000000e+00> : vector<10x34xf32>
    %219 = tpu.matmul %217, %218, %cst_85 {dimension_numbers = #tpu.dot_dimension_numbers<[1], [0], [0], [1], [0, 0, 1, 1], [], []>} : vector<10x32xf32>, vector<32x34xf32>, vector<10x34xf32> -> vector<10x34xf32>
    %220 = vector.extract_strided_slice %219 {offsets = [0, 0], sizes = [10, 32], strides = [1, 1]} : vector<10x34xf32> to vector<10x32xf32>
    %221 = vector.extract_strided_slice %219 {offsets = [0, 32], sizes = [10, 2], strides = [1, 1]} : vector<10x34xf32> to vector<10x2xf32>
    %c0_86 = arith.constant 0 : index
    %c0_87 = arith.constant 0 : index
    %222 = vector.load %arg16[%c0_86, %c0_87] : memref<4x10xf32, #tpu.memory_space<vmem>>, vector<4x10xf32>
    %cst_88 = arith.constant dense<0.000000e+00> : vector<4x2xf32>
    %223 = tpu.matmul %222, %221, %cst_88 {dimension_numbers = #tpu.dot_dimension_numbers<[1], [0], [0], [1], [0, 0, 1, 1], [], []>} : vector<4x10xf32>, vector<10x2xf32>, vector<4x2xf32> -> vector<4x2xf32>
    %c0_89 = arith.constant 0 : index
    %c0_90 = arith.constant 0 : index
    %224 = vector.load %arg15[%c0_89, %c0_90] : memref<2x32xf32, #tpu.memory_space<vmem>>, vector<2x32xf32>
    %cst_91 = arith.constant dense<0.000000e+00> : vector<2x10xf32>
    %225 = tpu.matmul %224, %217, %cst_91 {dimension_numbers = #tpu.dot_dimension_numbers<[1], [1], [0], [0], [0, 0, 1, 0], [], []>} : vector<2x32xf32>, vector<10x32xf32>, vector<2x10xf32> -> vector<2x10xf32>
    %c0_92 = arith.constant 0 : index
    %c0_93 = arith.constant 0 : index
    %226 = vector.load %arg17[%c0_92, %c0_93] : memref<4x10xf32, #tpu.memory_space<vmem>>, vector<4x10xf32>
    %227 = vector.extract_strided_slice %223 {offsets = [0, 0], sizes = [4, 1], strides = [1, 1]} : vector<4x2xf32> to vector<4x1xf32>
    %228 = vector.extract_strided_slice %225 {offsets = [0, 0], sizes = [1, 10], strides = [1, 1]} : vector<2x10xf32> to vector<1x10xf32>
    %229 = vector.broadcast %227 : vector<4x1xf32> to vector<4x10xf32>
    %230 = vector.broadcast %228 : vector<1x10xf32> to vector<4x10xf32>
    %231 = arith.addf %229, %230 : vector<4x10xf32>
    %cst_94 = arith.constant 0.000000e+00 : f32
    %232 = vector.broadcast %cst_94 : f32 to vector<4x10xf32>
    %233 = arith.cmpf oge, %231, %232 : vector<4x10xf32>
    %cst_95 = arith.constant 2.000000e-01 : f32
    %234 = vector.broadcast %cst_95 : f32 to vector<4x10xf32>
    %235 = arith.mulf %234, %231 : vector<4x10xf32>
    %236 = arith.select %233, %231, %235 : vector<4x10xi1>, vector<4x10xf32>
    %237 = arith.addf %236, %226 : vector<4x10xf32>
    %cst_96 = arith.constant dense<0xFF800000> : vector<4xf32>
    %238 = vector.multi_reduction <maximumf>, %237, %cst_96 [1] : vector<4x10xf32> to vector<4xf32>
    %239 = vector.shape_cast %238 : vector<4xf32> to vector<4x1xf32>
    %240 = vector.broadcast %239 : vector<4x1xf32> to vector<4x10xf32>
    %241 = arith.subf %237, %240 : vector<4x10xf32>
    %242 = math.exp %241 : vector<4x10xf32>
    %cst_97 = arith.constant dense<0.000000e+00> : vector<4xf32>
    %243 = vector.multi_reduction <add>, %242, %cst_97 [1] : vector<4x10xf32> to vector<4xf32>
    %244 = vector.shape_cast %243 : vector<4xf32> to vector<4x1xf32>
    %245 = tpu.reciprocal %244 {approx = true} : vector<4x1xf32> -> vector<4x1xf32>
    %246 = vector.broadcast %245 : vector<4x1xf32> to vector<4x10xf32>
    %247 = arith.mulf %242, %246 : vector<4x10xf32>
    %248 = vector.extract_strided_slice %220 {offsets = [0, 0], sizes = [10, 16], strides = [1, 1]} : vector<10x32xf32> to vector<10x16xf32>
    %cst_98 = arith.constant dense<0.000000e+00> : vector<4x16xf32>
    %249 = tpu.matmul %247, %248, %cst_98 {dimension_numbers = #tpu.dot_dimension_numbers<[1], [0], [0], [1], [0, 0, 1, 1], [], []>} : vector<4x10xf32>, vector<10x16xf32>, vector<4x16xf32> -> vector<4x16xf32>
    %cst_99 = arith.constant 0.000000e+00 : f32
    %250 = vector.broadcast %cst_99 : f32 to vector<4x16xf32>
    %251 = arith.cmpf ogt, %249, %250 : vector<4x16xf32>
    %cst_100 = arith.constant 0.000000e+00 : f32
    %252 = vector.broadcast %cst_100 : f32 to vector<4x16xf32>
    %253 = arith.minimumf %249, %252 : vector<4x16xf32>
    %254 = math.exp %253 : vector<4x16xf32>
    %cst_101 = arith.constant 1.000000e+00 : f32
    %255 = vector.broadcast %cst_101 : f32 to vector<4x16xf32>
    %256 = arith.subf %254, %255 : vector<4x16xf32>
    %257 = arith.select %251, %249, %256 : vector<4x16xi1>, vector<4x16xf32>
    %258 = vector.extract_strided_slice %223 {offsets = [0, 1], sizes = [4, 1], strides = [1, 1]} : vector<4x2xf32> to vector<4x1xf32>
    %259 = vector.extract_strided_slice %225 {offsets = [1, 0], sizes = [1, 10], strides = [1, 1]} : vector<2x10xf32> to vector<1x10xf32>
    %260 = vector.broadcast %258 : vector<4x1xf32> to vector<4x10xf32>
    %261 = vector.broadcast %259 : vector<1x10xf32> to vector<4x10xf32>
    %262 = arith.addf %260, %261 : vector<4x10xf32>
    %cst_102 = arith.constant 0.000000e+00 : f32
    %263 = vector.broadcast %cst_102 : f32 to vector<4x10xf32>
    %264 = arith.cmpf oge, %262, %263 : vector<4x10xf32>
    %cst_103 = arith.constant 2.000000e-01 : f32
    %265 = vector.broadcast %cst_103 : f32 to vector<4x10xf32>
    %266 = arith.mulf %265, %262 : vector<4x10xf32>
    %267 = arith.select %264, %262, %266 : vector<4x10xi1>, vector<4x10xf32>
    %268 = arith.addf %267, %226 : vector<4x10xf32>
    %cst_104 = arith.constant dense<0xFF800000> : vector<4xf32>
    %269 = vector.multi_reduction <maximumf>, %268, %cst_104 [1] : vector<4x10xf32> to vector<4xf32>
    %270 = vector.shape_cast %269 : vector<4xf32> to vector<4x1xf32>
    %271 = vector.broadcast %270 : vector<4x1xf32> to vector<4x10xf32>
    %272 = arith.subf %268, %271 : vector<4x10xf32>
    %273 = math.exp %272 : vector<4x10xf32>
    %cst_105 = arith.constant dense<0.000000e+00> : vector<4xf32>
    %274 = vector.multi_reduction <add>, %273, %cst_105 [1] : vector<4x10xf32> to vector<4xf32>
    %275 = vector.shape_cast %274 : vector<4xf32> to vector<4x1xf32>
    %276 = tpu.reciprocal %275 {approx = true} : vector<4x1xf32> -> vector<4x1xf32>
    %277 = vector.broadcast %276 : vector<4x1xf32> to vector<4x10xf32>
    %278 = arith.mulf %273, %277 : vector<4x10xf32>
    %279 = vector.extract_strided_slice %220 {offsets = [0, 16], sizes = [10, 16], strides = [1, 1]} : vector<10x32xf32> to vector<10x16xf32>
    %cst_106 = arith.constant dense<0.000000e+00> : vector<4x16xf32>
    %280 = tpu.matmul %278, %279, %cst_106 {dimension_numbers = #tpu.dot_dimension_numbers<[1], [0], [0], [1], [0, 0, 1, 1], [], []>} : vector<4x10xf32>, vector<10x16xf32>, vector<4x16xf32> -> vector<4x16xf32>
    %cst_107 = arith.constant 0.000000e+00 : f32
    %281 = vector.broadcast %cst_107 : f32 to vector<4x16xf32>
    %282 = arith.cmpf ogt, %280, %281 : vector<4x16xf32>
    %cst_108 = arith.constant 0.000000e+00 : f32
    %283 = vector.broadcast %cst_108 : f32 to vector<4x16xf32>
    %284 = arith.minimumf %280, %283 : vector<4x16xf32>
    %285 = math.exp %284 : vector<4x16xf32>
    %cst_109 = arith.constant 1.000000e+00 : f32
    %286 = vector.broadcast %cst_109 : f32 to vector<4x16xf32>
    %287 = arith.subf %285, %286 : vector<4x16xf32>
    %288 = arith.select %282, %280, %287 : vector<4x16xi1>, vector<4x16xf32>
    %289 = tpu.concatenate %257, %288 in 1 : vector<4x16xf32>, vector<4x16xf32> -> vector<4x32xf32>
    %c0_110 = arith.constant 0 : index
    %c0_111 = arith.constant 0 : index
    %290 = vector.load %arg18[%c0_110, %c0_111] : memref<32x16xf32, #tpu.memory_space<vmem>>, vector<32x16xf32>
    %c0_112 = arith.constant 0 : index
    %c0_113 = arith.constant 0 : index
    %291 = vector.load %arg19[%c0_112, %c0_113] : memref<1x16xf32, #tpu.memory_space<vmem>>, vector<1x16xf32>
    %cst_114 = arith.constant dense<0.000000e+00> : vector<4x16xf32>
    %292 = tpu.matmul %144, %290, %cst_114 {dimension_numbers = #tpu.dot_dimension_numbers<[1], [0], [0], [1], [0, 0, 1, 1], [], []>} : vector<4x32xf32>, vector<32x16xf32>, vector<4x16xf32> -> vector<4x16xf32>
    %293 = vector.broadcast %291 : vector<1x16xf32> to vector<4x16xf32>
    %294 = arith.addf %292, %293 : vector<4x16xf32>
    %295 = math.tanh %294 : vector<4x16xf32>
    %c0_115 = arith.constant 0 : index
    %c0_116 = arith.constant 0 : index
    %296 = vector.load %arg20[%c0_115, %c0_116] : memref<2x16xf32, #tpu.memory_space<vmem>>, vector<1x16xf32>
    %297 = vector.broadcast %296 : vector<1x16xf32> to vector<4x16xf32>
    %298 = arith.mulf %295, %297 : vector<4x16xf32>
    %299 = vector.shape_cast %298 : vector<4x16xf32> to vector<1x4x16xf32>
    %cst_117 = arith.constant dense<0.000000e+00> : vector<1xf32>
    %300 = vector.multi_reduction <add>, %299, %cst_117 [1, 2] : vector<1x4x16xf32> to vector<1xf32>
    %301 = vector.shape_cast %300 : vector<1xf32> to vector<1x1x1xf32>
    %302 = vector.extract %301[0, 0, 0] : f32 from vector<1x1x1xf32>
    %cst_118 = arith.constant 4.000000e+00 : f32
    %303 = arith.divf %302, %cst_118 : f32
    %cst_119 = arith.constant dense<0.000000e+00> : vector<4x16xf32>
    %304 = tpu.matmul %289, %290, %cst_119 {dimension_numbers = #tpu.dot_dimension_numbers<[1], [0], [0], [1], [0, 0, 1, 1], [], []>} : vector<4x32xf32>, vector<32x16xf32>, vector<4x16xf32> -> vector<4x16xf32>
    %305 = vector.broadcast %291 : vector<1x16xf32> to vector<4x16xf32>
    %306 = arith.addf %304, %305 : vector<4x16xf32>
    %307 = math.tanh %306 : vector<4x16xf32>
    %c1 = arith.constant 1 : index
    %c0_120 = arith.constant 0 : index
    %308 = vector.load %arg20[%c1, %c0_120] : memref<2x16xf32, #tpu.memory_space<vmem>>, vector<1x16xf32>
    %309 = vector.broadcast %308 : vector<1x16xf32> to vector<4x16xf32>
    %310 = arith.mulf %307, %309 : vector<4x16xf32>
    %311 = vector.shape_cast %310 : vector<4x16xf32> to vector<1x4x16xf32>
    %cst_121 = arith.constant dense<0.000000e+00> : vector<1xf32>
    %312 = vector.multi_reduction <add>, %311, %cst_121 [1, 2] : vector<1x4x16xf32> to vector<1xf32>
    %313 = vector.shape_cast %312 : vector<1xf32> to vector<1x1x1xf32>
    %314 = vector.extract %313[0, 0, 0] : f32 from vector<1x1x1xf32>
    %cst_122 = arith.constant 4.000000e+00 : f32
    %315 = arith.divf %314, %cst_122 : f32
    %316 = arith.maximumf %303, %315 : f32
    %317 = arith.subf %303, %316 : f32
    %318 = math.exp %317 : f32
    %319 = arith.subf %315, %316 : f32
    %320 = math.exp %319 : f32
    %321 = arith.addf %318, %320 : f32
    %322 = arith.divf %318, %321 : f32
    %323 = vector.broadcast %322 : f32 to vector<4x16xf32>
    %324 = arith.mulf %323, %295 : vector<4x16xf32>
    %325 = arith.divf %320, %321 : f32
    %326 = vector.broadcast %325 : f32 to vector<4x16xf32>
    %327 = arith.mulf %326, %307 : vector<4x16xf32>
    %328 = arith.addf %324, %327 : vector<4x16xf32>
    %c0_123 = arith.constant 0 : index
    %c0_124 = arith.constant 0 : index
    %329 = vector.load %arg23[%c0_123, %c0_124] : memref<4x16xf32, #tpu.memory_space<vmem>>, vector<4x16xf32>
    tpu.vector_store %arg23[%c0_123, %c0_124], %328 {strides = array<i32>} : memref<4x16xf32, #tpu.memory_space<vmem>>, vector<4x16xf32>,
    %c0_125 = arith.constant 0 : index
    %c0_126 = arith.constant 0 : index
    %330 = vector.load %arg21[%c0_125, %c0_126] : memref<16x4xf32, #tpu.memory_space<vmem>>, vector<16x4xf32>
    %cst_127 = arith.constant dense<0.000000e+00> : vector<4x4xf32>
    %331 = tpu.matmul %328, %330, %cst_127 {dimension_numbers = #tpu.dot_dimension_numbers<[1], [0], [0], [1], [0, 0, 1, 1], [], []>} : vector<4x16xf32>, vector<16x4xf32>, vector<4x4xf32> -> vector<4x4xf32>
    %c0_128 = arith.constant 0 : index
    %c0_129 = arith.constant 0 : index
    %332 = vector.load %arg22[%c0_128, %c0_129] : memref<1x4xf32, #tpu.memory_space<vmem>>, vector<1x4xf32>
    %333 = vector.broadcast %332 : vector<1x4xf32> to vector<4x4xf32>
    %334 = arith.addf %331, %333 : vector<4x4xf32>
    %c0_130 = arith.constant 0 : index
    %c0_131 = arith.constant 0 : index
    %335 = vector.load %arg24[%c0_130, %c0_131] : memref<4x4xf32, #tpu.memory_space<vmem>>, vector<4x4xf32>
    tpu.vector_store %arg24[%c0_130, %c0_131], %334 {strides = array<i32>} : memref<4x4xf32, #tpu.memory_space<vmem>>, vector<4x4xf32>,
    return
  }
}

</mosaic_0001>

<llo_original>
// kernel: fwd.1
$region0: #{fwd.1}
  #allocation0 [shape = 'u32[]', space=smem, size = 0x4, offset = 0x4, fixed_abs, tag = 'smem constant byte address 0x4 - core index']
  #allocation1 [shape = 'u32[144,128]{1,0:T(1,128)}', space=vmem, size = 0x12000, scoped, tag = 'internal scratch']
  %s0 = inlined_call_operand.vmem [shape: f32[10,32], index: 0, kind: input, shape index: {}]
  %s1 = inlined_call_operand.vmem [shape: f32[10,32], index: 1, kind: input, shape index: {}]
  %s2 = inlined_call_operand.vmem [shape: f32[32,34], index: 2, kind: input, shape index: {}]
  %s3 = inlined_call_operand.vmem [shape: f32[2,32], index: 3, kind: input, shape index: {}]
  %s4 = inlined_call_operand.vmem [shape: f32[9,10], index: 4, kind: input, shape index: {}]
  %s5 = inlined_call_operand.vmem [shape: f32[9,10], index: 5, kind: input, shape index: {}]
  %s6 = inlined_call_operand.vmem [shape: f32[32,34], index: 6, kind: input, shape index: {}]
  %s7 = inlined_call_operand.vmem [shape: f32[2,32], index: 7, kind: input, shape index: {}]
  %s8 = inlined_call_operand.vmem [shape: f32[4,9], index: 8, kind: input, shape index: {}]
  %s9 = inlined_call_operand.vmem [shape: f32[4,9], index: 9, kind: input, shape index: {}]
  %s10 = inlined_call_operand.vmem [shape: f32[32,34], index: 10, kind: input, shape index: {}]
  %s11 = inlined_call_operand.vmem [shape: f32[2,32], index: 11, kind: input, shape index: {}]
  %s12 = inlined_call_operand.vmem [shape: f32[10,10], index: 12, kind: input, shape index: {}]
  %s13 = inlined_call_operand.vmem [shape: f32[10,10], index: 13, kind: input, shape index: {}]
  %s14 = inlined_call_operand.vmem [shape: f32[32,34], index: 14, kind: input, shape index: {}]
  %s15 = inlined_call_operand.vmem [shape: f32[2,32], index: 15, kind: input, shape index: {}]
  %s16 = inlined_call_operand.vmem [shape: f32[4,10], index: 16, kind: input, shape index: {}]
  %s17 = inlined_call_operand.vmem [shape: f32[4,10], index: 17, kind: input, shape index: {}]
  %s18 = inlined_call_operand.vmem [shape: f32[32,16], index: 18, kind: input, shape index: {}]
  %s19 = inlined_call_operand.vmem [shape: f32[1,16], index: 19, kind: input, shape index: {}]
  %s20 = inlined_call_operand.vmem [shape: f32[2,16], index: 20, kind: input, shape index: {}]
  %s21 = inlined_call_operand.vmem [shape: f32[16,4], index: 21, kind: input, shape index: {}]
  %s22 = inlined_call_operand.vmem [shape: f32[1,4], index: 22, kind: input, shape index: {}]
  %s23 = inlined_call_operand.hbm [shape: f32[4,16], index: 23, kind: output, shape index: {0}]
  %s24 = inlined_call_operand.hbm [shape: f32[4,4], index: 24, kind: output, shape index: {1}]
  %25 = xla_tuple %s23, %s24
  %s26 = sld [smem:[#allocation0]]
  $region110: #{fwd.1} parent=0
    _
  %s28 = ssub.s32 1, %s26
  %s29 = scalar_select 0, %s28, %s26
  $region1: #{fwd.1} parent=0
    #allocation2 [shape = 'u8[2048]{0}', space=vmem, size = 0x800, scoped, tag = 'output window, operand 0, single buffered']
    #allocation3 [shape = 's32[1]{0}', space=sflag, size = 0x4, scoped, tag = 'scoped memory for fwd.1']
    #allocation4 [shape = 'u8[2048]{0}', space=vmem, size = 0x800, scoped, tag = 'output window, operand 1, single buffered']
    #allocation5 [shape = 's32[1]{0}', space=sflag, size = 0x4, scoped, tag = 'scoped memory for fwd.1']
    %30 = vsyncpa [#allocation3], 0
    %31 = vsyncpa [#allocation5], 0
    // Predicated region
    $region2: #{fwd.1} parent=1 // pred_check
      _
    $region3: #{fwd.1} parent=1 // pred_check_branch
      %33 = sbr.rel (0) target = $region5
    $region4: #{fwd.1} parent=1 // pred_region
      _
    $region5: #{fwd.1} parent=1 // pred_fallthru
      _
    // Predicated region
    $region6: #{fwd.1} parent=1 // pred_check
      _
    $region7: #{fwd.1} parent=1 // pred_check_branch
      %35 = sbr.rel (0) target = $region9
    $region8: #{fwd.1} parent=1 // pred_region
      _
    $region9: #{fwd.1} parent=1 // pred_fallthru
      _
    // Predicated region
    $region10: #{fwd.1} parent=1 // pred_check
      _
    $region11: #{fwd.1} parent=1 // pred_check_branch
      %37 = sbr.rel (0) target = $region13
    $region12: #{fwd.1} parent=1 // pred_region
      _
    $region13: #{fwd.1} parent=1 // pred_fallthru
      _
    // Predicated region
    $region14: #{fwd.1} parent=1 // pred_check
      _
    $region15: #{fwd.1} parent=1 // pred_check_branch
      %39 = sbr.rel (0) target = $region17
    $region16: #{fwd.1} parent=1 // pred_region
      _
    $region17: #{fwd.1} parent=1 // pred_fallthru
      _
    // Predicated region
    $region18: #{fwd.1} parent=1 // pred_check
      _
    $region19: #{fwd.1} parent=1 // pred_check_branch
      %41 = sbr.rel (0) target = $region21
    $region20: #{fwd.1} parent=1 // pred_region
      _
    $region21: #{fwd.1} parent=1 // pred_fallthru
      _
    // Predicated region
    $region22: #{fwd.1} parent=1 // pred_check
      _
    $region23: #{fwd.1} parent=1 // pred_check_branch
      %43 = sbr.rel (0) target = $region25
    $region24: #{fwd.1} parent=1 // pred_region
      _
    $region25: #{fwd.1} parent=1 // pred_fallthru
      _
    // Predicated region
    $region26: #{fwd.1} parent=1 // pred_check
      _
    $region27: #{fwd.1} parent=1 // pred_check_branch
      %45 = sbr.rel (0) target = $region29
    $region28: #{fwd.1} parent=1 // pred_region
      _
    $region29: #{fwd.1} parent=1 // pred_fallthru
      _
    // Predicated region
    $region30: #{fwd.1} parent=1 // pred_check
      _
    $region31: #{fwd.1} parent=1 // pred_check_branch
      %47 = sbr.rel (0) target = $region33
    $region32: #{fwd.1} parent=1 // pred_region
      _
    $region33: #{fwd.1} parent=1 // pred_fallthru
      _
    // Predicated region
    $region34: #{fwd.1} parent=1 // pred_check
      _
    $region35: #{fwd.1} parent=1 // pred_check_branch
      %49 = sbr.rel (0) target = $region37
    $region36: #{fwd.1} parent=1 // pred_region
      _
    $region37: #{fwd.1} parent=1 // pred_fallthru
      _
    // Predicated region
    $region38: #{fwd.1} parent=1 // pred_check
      _
    $region39: #{fwd.1} parent=1 // pred_check_branch
      %51 = sbr.rel (0) target = $region41
    $region40: #{fwd.1} parent=1 // pred_region
      _
    $region41: #{fwd.1} parent=1 // pred_fallthru
      _
    // Predicated region
    $region42: #{fwd.1} parent=1 // pred_check
      _
    $region43: #{fwd.1} parent=1 // pred_check_branch
      %53 = sbr.rel (0) target = $region45
    $region44: #{fwd.1} parent=1 // pred_region
      _
    $region45: #{fwd.1} parent=1 // pred_fallthru
      _
    // Predicated region
    $region46: #{fwd.1} parent=1 // pred_check
      _
    $region47: #{fwd.1} parent=1 // pred_check_branch
      %55 = sbr.rel (0) target = $region49
    $region48: #{fwd.1} parent=1 // pred_region
      _
    $region49: #{fwd.1} parent=1 // pred_fallthru
      _
    // Predicated region
    $region50: #{fwd.1} parent=1 // pred_check
      _
    $region51: #{fwd.1} parent=1 // pred_check_branch
      %57 = sbr.rel (0) target = $region53
    $region52: #{fwd.1} parent=1 // pred_region
      _
    $region53: #{fwd.1} parent=1 // pred_fallthru
      _
    // Predicated region
    $region54: #{fwd.1} parent=1 // pred_check
      _
    $region55: #{fwd.1} parent=1 // pred_check_branch
      %59 = sbr.rel (0) target = $region57
    $region56: #{fwd.1} parent=1 // pred_region
      _
    $region57: #{fwd.1} parent=1 // pred_fallthru
      _
    // Predicated region
    $region58: #{fwd.1} parent=1 // pred_check
      _
    $region59: #{fwd.1} parent=1 // pred_check_branch
      %61 = sbr.rel (0) target = $region61
    $region60: #{fwd.1} parent=1 // pred_region
      _
    $region61: #{fwd.1} parent=1 // pred_fallthru
      _
    // Predicated region
    $region62: #{fwd.1} parent=1 // pred_check
      _
    $region63: #{fwd.1} parent=1 // pred_check_branch
      %63 = sbr.rel (0) target = $region65
    $region64: #{fwd.1} parent=1 // pred_region
      _
    $region65: #{fwd.1} parent=1 // pred_fallthru
      _
    // Predicated region
    $region66: #{fwd.1} parent=1 // pred_check
      _
    $region67: #{fwd.1} parent=1 // pred_check_branch
      %65 = sbr.rel (0) target = $region69
    $region68: #{fwd.1} parent=1 // pred_region
      _
    $region69: #{fwd.1} parent=1 // pred_fallthru
      _
    // Predicated region
    $region70: #{fwd.1} parent=1 // pred_check
      _
    $region71: #{fwd.1} parent=1 // pred_check_branch
      %67 = sbr.rel (0) target = $region73
    $region72: #{fwd.1} parent=1 // pred_region
      _
    $region73: #{fwd.1} parent=1 // pred_fallthru
      _
    // Predicated region
    $region74: #{fwd.1} parent=1 // pred_check
      _
    $region75: #{fwd.1} parent=1 // pred_check_branch
      %69 = sbr.rel (0) target = $region77
    $region76: #{fwd.1} parent=1 // pred_region
      _
    $region77: #{fwd.1} parent=1 // pred_fallthru
      _
    // Predicated region
    $region78: #{fwd.1} parent=1 // pred_check
      _
    $region79: #{fwd.1} parent=1 // pred_check_branch
      %71 = sbr.rel (0) target = $region81
    $region80: #{fwd.1} parent=1 // pred_region
      _
    $region81: #{fwd.1} parent=1 // pred_fallthru
      _
    // Predicated region
    $region82: #{fwd.1} parent=1 // pred_check
      _
    $region83: #{fwd.1} parent=1 // pred_check_branch
      %73 = sbr.rel (0) target = $region85
    $region84: #{fwd.1} parent=1 // pred_region
      _
    $region85: #{fwd.1} parent=1 // pred_fallthru
      _
    // Predicated region
    $region86: #{fwd.1} parent=1 // pred_check
      _
    $region87: #{fwd.1} parent=1 // pred_check_branch
      %75 = sbr.rel (0) target = $region89
    $region88: #{fwd.1} parent=1 // pred_region
      _
    $region89: #{fwd.1} parent=1 // pred_fallthru
      _
    // Predicated region
    $region90: #{fwd.1} parent=1 // pred_check
      _
    $region91: #{fwd.1} parent=1 // pred_check_branch
      %77 = sbr.rel (0) target = $region93
    $region92: #{fwd.1} parent=1 // pred_region
      _
    $region93: #{fwd.1} parent=1 // pred_fallthru
      _
    %v78 = vld [vmem:[%s0] sm:$0xff]
    %v79 = vld [vmem:[%s0 + $0x8] sm:$0x3]
    %v80 = vld [vmem:[%s2] sm:$0xff]
    %v81 = vld [vmem:[%s2 + $0x8] sm:$0xff]
    %v82 = vld [vmem:[%s2 + $0x10] sm:$0xff]
    %v83 = vld [vmem:[%s2 + $0x18] sm:$0xff]
    %vm84 = vcmask 261120
    %v86 = vsel %vm84, %v78, 0
    %v89 = vsel %vm84, %v79, 0
    %91 = vmatprep.subr.mxu0 0.0
    %92 = vmatpush1.msra.mxu0 0.0
    %93 = vmatprep.subr.mxu0 0.0
    %94 = vmatpush1.msra.mxu0 0.0
    %95 = vmatprep.subr.mxu0 0.0
    %96 = vmatpush1.msra.mxu0 0.0
    %97 = vmatprep.subr.mxu0 0.0
    %98 = vmatpush1.msra.mxu0 0.0
    %99 = vmatprep.subr.mxu0 0.0
    %100 = vmatpush1.msra.mxu0 0.0
    %101 = vmatprep.subr.mxu0 0.0
    %102 = vmatpush1.msra.mxu0 0.0
    %103 = vmatprep.subr.mxu0 0.0
    %104 = vmatpush1.msra.mxu0 0.0
    %105 = vmatprep.subr.mxu0 0.0
    %106 = vmatpush1.msra.mxu0 0.0
    %107 = vmatprep.subr.mxu0 0.0
    %108 = vmatpush1.msra.mxu0 0.0
    %109 = vmatprep.subr.mxu0 0.0
    %110 = vmatpush1.msra.mxu0 0.0
    %111 = vmatprep.subr.mxu0 0.0
    %112 = vmatpush1.msra.mxu0 0.0
    %113 = vmatprep.subr.mxu0 0.0
    %114 = vmatpush1.msra.mxu0 0.0
    %115 = vmatprep.subr.mxu0 0.0
    %116 = vmatpush1.msra.mxu0 %v83
    %117 = vmatprep.subr.mxu0 0.0
    %118 = vmatpush1.msra.mxu0 %v82
    %119 = vmatprep.subr.mxu0 0.0
    %120 = vmatpush1.msra.mxu0 %v81
    %121 = vmatprep.subr.mxu0 0.0
    %122 = vmatpush1.msra.mxu0 %v80
    %123 = vmatprep.subr.mxu0 0.0
    %124 = vmatpush2.msra.mxu0 0.0
    %125 = vmatprep.subr.mxu0 0.0
    %126 = vmatpush2.msra.mxu0 0.0
    %127 = vmatprep.subr.mxu0 0.0
    %128 = vmatpush2.msra.mxu0 0.0
    %129 = vmatprep.subr.mxu0 0.0
    %130 = vmatpush2.msra.mxu0 0.0
    %131 = vmatprep.subr.mxu0 0.0
    %132 = vmatpush2.msra.mxu0 0.0
    %133 = vmatprep.subr.mxu0 0.0
    %134 = vmatpush2.msra.mxu0 0.0
    %135 = vmatprep.subr.mxu0 0.0
    %136 = vmatpush2.msra.mxu0 0.0
    %137 = vmatprep.subr.mxu0 0.0
    %138 = vmatpush2.msra.mxu0 0.0
    %139 = vmatprep.subr.mxu0 0.0
    %140 = vmatpush2.msra.mxu0 0.0
    %141 = vmatprep.subr.mxu0 0.0
    %142 = vmatpush2.msra.mxu0 0.0
    %143 = vmatprep.subr.mxu0 0.0
    %144 = vmatpush2.msra.mxu0 0.0
    %145 = vmatprep.subr.mxu0 0.0
    %146 = vmatpush2.msra.mxu0 0.0
    %147 = vmatprep.subr.mxu0 0.0
    %148 = vmatpush2.msra.mxu0 0.0
    %149 = vmatprep.subr.mxu0 0.0
    %150 = vmatpush2.msra.mxu0 0.0
    %151 = vmatprep.subr.mxu0 0.0
    %152 = vmatpush2.msra.mxu0 0.0
    %153 = vmatprep.subr.mxu0 0.0
    %154 = vmatpush2.msra.mxu0 0.0
    %155 = vmatprep.mubr.f32.mxu0 0.0
    %156 = vmatmul.mubr.f32.gmra.mxu0 %v86
    %v157 = vpop.f32.mrf.mxu0
    %v158 = vadd.f32 0.0, %v157
    %v159 = vpop.f32.mrf.mxu0
    %160 = vmatprep.mubr.f32.mxu0 0.0
    %161 = vmatmul.mubr.f32.gmra.mxu0 %v89
    %v162 = vpop.f32.mrf.mxu0
    %v163 = vadd.f32 0.0, %v162
    %v164 = vpop.f32.mrf.mxu0
    %165 = vdwg.mxu0
    %v166 = vld [vmem:[%s4] sm:$0xff]
    %v167 = vld [vmem:[%s4 + $0x8] sm:$0x1]
    %170 = vrot.lane.b32.xlu0 %v158, 96
    %v171 = vpop.permute.xlu0 %170
    %172 = vrot.lane.b32.xlu0 %v163, 96
    %v173 = vpop.permute.xlu0 %172
    %vm175 = vcmask 80896
    %v177 = vsel %vm175, %v166, 0
    %v180 = vsel %vm175, %v167, 0
    %vm182 = vcmask 1041408
    %v183 = vsel %vm182, %v173, 0
    %185 = vmatprep.subr.mxu0 0.0
    %186 = vmatpush1.msra.mxu0 0.0
    %187 = vmatprep.subr.mxu0 0.0
    %188 = vmatpush1.msra.mxu0 0.0
    %189 = vmatprep.subr.mxu0 0.0
    %190 = vmatpush1.msra.mxu0 0.0
    %191 = vmatprep.subr.mxu0 0.0
    %192 = vmatpush1.msra.mxu0 0.0
    %193 = vmatprep.subr.mxu0 0.0
    %194 = vmatpush1.msra.mxu0 0.0
    %195 = vmatprep.subr.mxu0 0.0
    %196 = vmatpush1.msra.mxu0 0.0
    %197 = vmatprep.subr.mxu0 0.0
    %198 = vmatpush1.msra.mxu0 0.0
    %199 = vmatprep.subr.mxu0 0.0
    %200 = vmatpush1.msra.mxu0 0.0
    %201 = vmatprep.subr.mxu0 0.0
    %202 = vmatpush1.msra.mxu0 0.0
    %203 = vmatprep.subr.mxu0 0.0
    %204 = vmatpush1.msra.mxu0 0.0
    %205 = vmatprep.subr.mxu0 0.0
    %206 = vmatpush1.msra.mxu0 0.0
    %207 = vmatprep.subr.mxu0 0.0
    %208 = vmatpush1.msra.mxu0 0.0
    %209 = vmatprep.subr.mxu0 0.0
    %210 = vmatpush1.msra.mxu0 0.0
    %211 = vmatprep.subr.mxu0 0.0
    %212 = vmatpush1.msra.mxu0 0.0
    %213 = vmatprep.subr.mxu0 0.0
    %214 = vmatpush1.msra.mxu0 %v183
    %215 = vmatprep.subr.mxu0 0.0
    %216 = vmatpush1.msra.mxu0 %v171
    %217 = vmatprep.subr.mxu0 0.0
    %218 = vmatpush2.msra.mxu0 0.0
    %219 = vmatprep.subr.mxu0 0.0
    %220 = vmatpush2.msra.mxu0 0.0
    %221 = vmatprep.subr.mxu0 0.0
    %222 = vmatpush2.msra.mxu0 0.0
    %223 = vmatprep.subr.mxu0 0.0
    %224 = vmatpush2.msra.mxu0 0.0
    %225 = vmatprep.subr.mxu0 0.0
    %226 = vmatpush2.msra.mxu0 0.0
    %227 = vmatprep.subr.mxu0 0.0
    %228 = vmatpush2.msra.mxu0 0.0
    %229 = vmatprep.subr.mxu0 0.0
    %230 = vmatpush2.msra.mxu0 0.0
    %231 = vmatprep.subr.mxu0 0.0
    %232 = vmatpush2.msra.mxu0 0.0
    %233 = vmatprep.subr.mxu0 0.0
    %234 = vmatpush2.msra.mxu0 0.0
    %235 = vmatprep.subr.mxu0 0.0
    %236 = vmatpush2.msra.mxu0 0.0
    %237 = vmatprep.subr.mxu0 0.0
    %238 = vmatpush2.msra.mxu0 0.0
    %239 = vmatprep.subr.mxu0 0.0
    %240 = vmatpush2.msra.mxu0 0.0
    %241 = vmatprep.subr.mxu0 0.0
    %242 = vmatpush2.msra.mxu0 0.0
    %243 = vmatprep.subr.mxu0 0.0
    %244 = vmatpush2.msra.mxu0 0.0
    %245 = vmatprep.subr.mxu0 0.0
    %246 = vmatpush2.msra.mxu0 0.0
    %247 = vmatprep.subr.mxu0 0.0
    %248 = vmatpush2.msra.mxu0 0.0
    %249 = vmatprep.mubr.f32.mxu0 0.0
    %250 = vmatmul.mubr.f32.gmra.mxu0 %v177
    %v251 = vpop.f32.mrf.mxu0
    %v252 = vadd.f32 0.0, %v251
    %v253 = vpop.f32.mrf.mxu0
    %254 = vmatprep.mubr.f32.mxu0 0.0
    %255 = vmatmul.mubr.f32.gmra.mxu0 %v180
    %v256 = vpop.f32.mrf.mxu0
    %v257 = vadd.f32 0.0, %v256
    %v258 = vpop.f32.mrf.mxu0
    %259 = vdwg.mxu0
    %v260 = vld [vmem:[%s3] sm:$0x3]
    %v262 = vsel %vm84, %v260, 0
    %264 = vmatprep.subr.mxu0 0.0
    %265 = vmatpush1.xpose.msra.mxu0 0.0
    %266 = vmatprep.subr.mxu0 0.0
    %267 = vmatpush1.xpose.msra.mxu0 0.0
    %268 = vmatprep.subr.mxu0 0.0
    %269 = vmatpush1.xpose.msra.mxu0 0.0
    %270 = vmatprep.subr.mxu0 0.0
    %271 = vmatpush1.xpose.msra.mxu0 0.0
    %272 = vmatprep.subr.mxu0 0.0
    %273 = vmatpush1.xpose.msra.mxu0 0.0
    %274 = vmatprep.subr.mxu0 0.0
    %275 = vmatpush1.xpose.msra.mxu0 0.0
    %276 = vmatprep.subr.mxu0 0.0
    %277 = vmatpush1.xpose.msra.mxu0 0.0
    %278 = vmatprep.subr.mxu0 0.0
    %279 = vmatpush1.xpose.msra.mxu0 0.0
    %280 = vmatprep.subr.mxu0 0.0
    %281 = vmatpush1.xpose.msra.mxu0 0.0
    %282 = vmatprep.subr.mxu0 0.0
    %283 = vmatpush1.xpose.msra.mxu0 0.0
    %284 = vmatprep.subr.mxu0 0.0
    %285 = vmatpush1.xpose.msra.mxu0 0.0
    %286 = vmatprep.subr.mxu0 0.0
    %287 = vmatpush1.xpose.msra.mxu0 0.0
    %288 = vmatprep.subr.mxu0 0.0
    %289 = vmatpush1.xpose.msra.mxu0 0.0
    %290 = vmatprep.subr.mxu0 0.0
    %291 = vmatpush1.xpose.msra.mxu0 0.0
    %292 = vmatprep.subr.mxu0 0.0
    %293 = vmatpush1.xpose.msra.mxu0 %v89
    %294 = vmatprep.subr.mxu0 0.0
    %295 = vmatpush1.xpose.msra.mxu0 %v86
    %296 = vmatprep.subr.mxu0 0.0
    %297 = vmatpush2.xpose.msra.mxu0 0.0
    %298 = vmatprep.subr.mxu0 0.0
    %299 = vmatpush2.xpose.msra.mxu0 0.0
    %300 = vmatprep.subr.mxu0 0.0
    %301 = vmatpush2.xpose.msra.mxu0 0.0
    %302 = vmatprep.subr.mxu0 0.0
    %303 = vmatpush2.xpose.msra.mxu0 0.0
    %304 = vmatprep.subr.mxu0 0.0
    %305 = vmatpush2.xpose.msra.mxu0 0.0
    %306 = vmatprep.subr.mxu0 0.0
    %307 = vmatpush2.xpose.msra.mxu0 0.0
    %308 = vmatprep.subr.mxu0 0.0
    %309 = vmatpush2.xpose.msra.mxu0 0.0
    %310 = vmatprep.subr.mxu0 0.0
    %311 = vmatpush2.xpose.msra.mxu0 0.0
    %312 = vmatprep.subr.mxu0 0.0
    %313 = vmatpush2.xpose.msra.mxu0 0.0
    %314 = vmatprep.subr.mxu0 0.0
    %315 = vmatpush2.xpose.msra.mxu0 0.0
    %316 = vmatprep.subr.mxu0 0.0
    %317 = vmatpush2.xpose.msra.mxu0 0.0
    %318 = vmatprep.subr.mxu0 0.0
    %319 = vmatpush2.xpose.msra.mxu0 0.0
    %320 = vmatprep.subr.mxu0 0.0
    %321 = vmatpush2.xpose.msra.mxu0 0.0
    %322 = vmatprep.subr.mxu0 0.0
    %323 = vmatpush2.xpose.msra.mxu0 0.0
    %324 = vmatprep.subr.mxu0 0.0
    %325 = vmatpush2.xpose.msra.mxu0 0.0
    %326 = vmatprep.subr.mxu0 0.0
    %327 = vmatpush2.xpose.msra.mxu0 0.0
    %328 = vmatprep.mubr.f32.mxu0 0.0
    %329 = vmatmul.mubr.f32.gmra.mxu0 %v262
    %v330 = vpop.f32.mrf.mxu0
    %v331 = vadd.f32 0.0, %v330
    %v332 = vpop.f32.mrf.mxu0
    %333 = vdwg.mxu0
    %v334 = vld [vmem:[%s5] sm:$0xff]
    %v335 = vld [vmem:[%s5 + $0x8] sm:$0x1]
    %337 = vset.pattern.permute.xlu0 0
    %338 = vperm.xlu0 %337, %v252
    %v339 = vpop.permute.xlu0 %338
    %342 = vset.pattern.permute.xlu0 0
    %343 = vperm.xlu0 %342, %v257
    %v344 = vpop.permute.xlu0 %343
    %v346 = vlaneseq
    %v347 = vshrl.u32 %v346, 7
    %v348 = vsub.s32 0, %v347
    %v349 = vrot.slane %v331, %v348
    %v350 = vadd.f32 %v339, %v349
    %v351 = vadd.f32 %v344, %v349
    %vm352 = vcmp.ge.f32.partialorder %v350, 0.0
    %vm353 = vcmp.ge.f32.partialorder %v351, 0.0
    %v354 = vmul.f32 %v350, 0.2
    %v355 = vmul.f32 %v351, 0.2
    %v356 = vsel %vm352, %v350, %v354
    %v357 = vsel %vm353, %v351, %v355
    %v358 = vadd.f32 %v356, %v334
    %v359 = vadd.f32 %v357, %v335
    %v360 = vsel %vm175, %v358, -inf
    %361 = vmax.xlane.f32.xlu0 %v360
    %v362 = vpop.xlane.xlu0 %361
    %vm363 = vcmask 73728
    %v364 = vsel %vm363, %v359, -inf
    %365 = vmax.xlane.f32.xlu0 %v364
    %v366 = vpop.xlane.xlu0 %365
    %v367 = vsub.f32 %v358, %v362
    %v368 = vsub.f32 %v359, %v366
    %v369 = vmul.f32 %v367, 1.442695
    %v370 = vpow.pop %v369
    %v371 = vmul.f32 %v368, 1.442695
    %v372 = vpow.pop %v371
    %v373 = vsel %vm175, %v370, 0.0
    %374 = vadd.xlane.f32.xlu0 %v373
    %v375 = vpop.xlane.xlu0 %374
    %v376 = vsel %vm363, %v372, 0.0
    %377 = vadd.xlane.f32.xlu0 %v376
    %v378 = vpop.xlane.xlu0 %377
    %v379 = vrcp.pop %v375
    %v380 = vrcp.pop %v378
    %v381 = vmul.f32 %v370, %v379
    %v382 = vmul.f32 %v372, %v380
    %v384 = vsel %vm175, %v381, 0
    %v387 = vsel %vm175, %v382, 0
    %v389 = vsel %vm182, %v163, 0
    %391 = vmatprep.subr.mxu0 0.0
    %392 = vmatpush1.msra.mxu0 0.0
    %393 = vmatprep.subr.mxu0 0.0
    %394 = vmatpush1.msra.mxu0 0.0
    %395 = vmatprep.subr.mxu0 0.0
    %396 = vmatpush1.msra.mxu0 0.0
    %397 = vmatprep.subr.mxu0 0.0
    %398 = vmatpush1.msra.mxu0 0.0
    %399 = vmatprep.subr.mxu0 0.0
    %400 = vmatpush1.msra.mxu0 0.0
    %401 = vmatprep.subr.mxu0 0.0
    %402 = vmatpush1.msra.mxu0 0.0
    %403 = vmatprep.subr.mxu0 0.0
    %404 = vmatpush1.msra.mxu0 0.0
    %405 = vmatprep.subr.mxu0 0.0
    %406 = vmatpush1.msra.mxu0 0.0
    %407 = vmatprep.subr.mxu0 0.0
    %408 = vmatpush1.msra.mxu0 0.0
    %409 = vmatprep.subr.mxu0 0.0
    %410 = vmatpush1.msra.mxu0 0.0
    %411 = vmatprep.subr.mxu0 0.0
    %412 = vmatpush1.msra.mxu0 0.0
    %413 = vmatprep.subr.mxu0 0.0
    %414 = vmatpush1.msra.mxu0 0.0
    %415 = vmatprep.subr.mxu0 0.0
    %416 = vmatpush1.msra.mxu0 0.0
    %417 = vmatprep.subr.mxu0 0.0
    %418 = vmatpush1.msra.mxu0 0.0
    %419 = vmatprep.subr.mxu0 0.0
    %420 = vmatpush1.msra.mxu0 %v389
    %421 = vmatprep.subr.mxu0 0.0
    %422 = vmatpush1.msra.mxu0 %v158
    %423 = vmatprep.subr.mxu0 0.0
    %424 = vmatpush2.msra.mxu0 0.0
    %425 = vmatprep.subr.mxu0 0.0
    %426 = vmatpush2.msra.mxu0 0.0
    %427 = vmatprep.subr.mxu0 0.0
    %428 = vmatpush2.msra.mxu0 0.0
    %429 = vmatprep.subr.mxu0 0.0
    %430 = vmatpush2.msra.mxu0 0.0
    %431 = vmatprep.subr.mxu0 0.0
    %432 = vmatpush2.msra.mxu0 0.0
    %433 = vmatprep.subr.mxu0 0.0
    %434 = vmatpush2.msra.mxu0 0.0
    %435 = vmatprep.subr.mxu0 0.0
    %436 = vmatpush2.msra.mxu0 0.0
    %437 = vmatprep.subr.mxu0 0.0
    %438 = vmatpush2.msra.mxu0 0.0
    %439 = vmatprep.subr.mxu0 0.0
    %440 = vmatpush2.msra.mxu0 0.0
    %441 = vmatprep.subr.mxu0 0.0
    %442 = vmatpush2.msra.mxu0 0.0
    %443 = vmatprep.subr.mxu0 0.0
    %444 = vmatpush2.msra.mxu0 0.0
    %445 = vmatprep.subr.mxu0 0.0
    %446 = vmatpush2.msra.mxu0 0.0
    %447 = vmatprep.subr.mxu0 0.0
    %448 = vmatpush2.msra.mxu0 0.0
    %449 = vmatprep.subr.mxu0 0.0
    %450 = vmatpush2.msra.mxu0 0.0
    %451 = vmatprep.subr.mxu0 0.0
    %452 = vmatpush2.msra.mxu0 0.0
    %453 = vmatprep.subr.mxu0 0.0
    %454 = vmatpush2.msra.mxu0 0.0
    %455 = vmatprep.mubr.f32.mxu0 0.0
    %456 = vmatmul.mubr.f32.gmra.mxu0 %v384
    %v457 = vpop.f32.mrf.mxu0
    %v458 = vadd.f32 0.0, %v457
    %v459 = vpop.f32.mrf.mxu0
    %460 = vmatprep.mubr.f32.mxu0 0.0
    %461 = vmatmul.mubr.f32.gmra.mxu0 %v387
    %v462 = vpop.f32.mrf.mxu0
    %v463 = vadd.f32 0.0, %v462
    %v464 = vpop.f32.mrf.mxu0
    %465 = vdwg.mxu0
    %vm466 = vcmp.gt.f32.partialorder %v458, 0.0
    %vm467 = vcmp.gt.f32.partialorder %v463, 0.0
    %v468 = vmin.f32 %v458, 0.0
    %v469 = vmin.f32 %v463, 0.0
    %v470 = vmul.f32 %v468, 1.442695
    %v471 = vpow.pop %v470
    %v472 = vmul.f32 %v469, 1.442695
    %v473 = vpow.pop %v472
    %v474 = vsub.f32 %v471, 1.0
    %v475 = vsub.f32 %v473, 1.0
    %v476 = vsel %vm466, %v458, %v474
    %v477 = vsel %vm467, %v463, %v475
    %478 = vset.pattern.permute.xlu0 1
    %479 = vperm.xlu0 %478, %v252
    %v480 = vpop.permute.xlu0 %479
    %482 = vset.pattern.permute.xlu0 1
    %483 = vperm.xlu0 %482, %v257
    %v484 = vpop.permute.xlu0 %483
    %v486 = vlaneseq
    %v487 = vshrl.u32 %v486, 7
    %v488 = vsub.s32 1, %v487
    %v489 = vrot.slane %v331, %v488
    %v490 = vadd.f32 %v480, %v489
    %v491 = vadd.f32 %v484, %v489
    %vm492 = vcmp.ge.f32.partialorder %v490, 0.0
    %vm493 = vcmp.ge.f32.partialorder %v491, 0.0
    %v494 = vmul.f32 %v490, 0.2
    %v495 = vmul.f32 %v491, 0.2
    %v496 = vsel %vm492, %v490, %v494
    %v497 = vsel %vm493, %v491, %v495
    %v498 = vadd.f32 %v496, %v334
    %v499 = vadd.f32 %v497, %v335
    %v500 = vsel %vm175, %v498, -inf
    %501 = vmax.xlane.f32.xlu0 %v500
    %v502 = vpop.xlane.xlu0 %501
    %v503 = vsel %vm363, %v499, -inf
    %504 = vmax.xlane.f32.xlu0 %v503
    %v505 = vpop.xlane.xlu0 %504
    %v506 = vsub.f32 %v498, %v502
    %v507 = vsub.f32 %v499, %v505
    %v508 = vmul.f32 %v506, 1.442695
    %v509 = vpow.pop %v508
    %v510 = vmul.f32 %v507, 1.442695
    %v511 = vpow.pop %v510
    %v512 = vsel %vm175, %v509, 0.0
    %513 = vadd.xlane.f32.xlu0 %v512
    %v514 = vpop.xlane.xlu0 %513
    %v515 = vsel %vm363, %v511, 0.0
    %516 = vadd.xlane.f32.xlu0 %v515
    %v517 = vpop.xlane.xlu0 %516
    %v518 = vrcp.pop %v514
    %v519 = vrcp.pop %v517
    %v520 = vmul.f32 %v509, %v518
    %v521 = vmul.f32 %v511, %v519
    %522 = vrot.lane.b32.xlu0 %v158, 112
    %v523 = vpop.permute.xlu0 %522
    %524 = vrot.lane.b32.xlu0 %v163, 112
    %v525 = vpop.permute.xlu0 %524
    %v528 = vsel %vm175, %v520, 0
    %v531 = vsel %vm175, %v521, 0
    %v533 = vsel %vm182, %v525, 0
    %535 = vmatprep.subr.mxu0 0.0
    %536 = vmatpush1.msra.mxu0 0.0
    %537 = vmatprep.subr.mxu0 0.0
    %538 = vmatpush1.msra.mxu0 0.0
    %539 = vmatprep.subr.mxu0 0.0
    %540 = vmatpush1.msra.mxu0 0.0
    %541 = vmatprep.subr.mxu0 0.0
    %542 = vmatpush1.msra.mxu0 0.0
    %543 = vmatprep.subr.mxu0 0.0
    %544 = vmatpush1.msra.mxu0 0.0
    %545 = vmatprep.subr.mxu0 0.0
    %546 = vmatpush1.msra.mxu0 0.0
    %547 = vmatprep.subr.mxu0 0.0
    %548 = vmatpush1.msra.mxu0 0.0
    %549 = vmatprep.subr.mxu0 0.0
    %550 = vmatpush1.msra.mxu0 0.0
    %551 = vmatprep.subr.mxu0 0.0
    %552 = vmatpush1.msra.mxu0 0.0
    %553 = vmatprep.subr.mxu0 0.0
    %554 = vmatpush1.msra.mxu0 0.0
    %555 = vmatprep.subr.mxu0 0.0
    %556 = vmatpush1.msra.mxu0 0.0
    %557 = vmatprep.subr.mxu0 0.0
    %558 = vmatpush1.msra.mxu0 0.0
    %559 = vmatprep.subr.mxu0 0.0
    %560 = vmatpush1.msra.mxu0 0.0
    %561 = vmatprep.subr.mxu0 0.0
    %562 = vmatpush1.msra.mxu0 0.0
    %563 = vmatprep.subr.mxu0 0.0
    %564 = vmatpush1.msra.mxu0 %v533
    %565 = vmatprep.subr.mxu0 0.0
    %566 = vmatpush1.msra.mxu0 %v523
    %567 = vmatprep.subr.mxu0 0.0
    %568 = vmatpush2.msra.mxu0 0.0
    %569 = vmatprep.subr.mxu0 0.0
    %570 = vmatpush2.msra.mxu0 0.0
    %571 = vmatprep.subr.mxu0 0.0
    %572 = vmatpush2.msra.mxu0 0.0
    %573 = vmatprep.subr.mxu0 0.0
    %574 = vmatpush2.msra.mxu0 0.0
    %575 = vmatprep.subr.mxu0 0.0
    %576 = vmatpush2.msra.mxu0 0.0
    %577 = vmatprep.subr.mxu0 0.0
    %578 = vmatpush2.msra.mxu0 0.0
    %579 = vmatprep.subr.mxu0 0.0
    %580 = vmatpush2.msra.mxu0 0.0
    %581 = vmatprep.subr.mxu0 0.0
    %582 = vmatpush2.msra.mxu0 0.0
    %583 = vmatprep.subr.mxu0 0.0
    %584 = vmatpush2.msra.mxu0 0.0
    %585 = vmatprep.subr.mxu0 0.0
    %586 = vmatpush2.msra.mxu0 0.0
    %587 = vmatprep.subr.mxu0 0.0
    %588 = vmatpush2.msra.mxu0 0.0
    %589 = vmatprep.subr.mxu0 0.0
    %590 = vmatpush2.msra.mxu0 0.0
    %591 = vmatprep.subr.mxu0 0.0
    %592 = vmatpush2.msra.mxu0 0.0
    %593 = vmatprep.subr.mxu0 0.0
    %594 = vmatpush2.msra.mxu0 0.0
    %595 = vmatprep.subr.mxu0 0.0
    %596 = vmatpush2.msra.mxu0 0.0
    %597 = vmatprep.subr.mxu0 0.0
    %598 = vmatpush2.msra.mxu0 0.0
    %599 = vmatprep.mubr.f32.mxu0 0.0
    %600 = vmatmul.mubr.f32.gmra.mxu0 %v528
    %v601 = vpop.f32.mrf.mxu0
    %v602 = vadd.f32 0.0, %v601
    %v603 = vpop.f32.mrf.mxu0
    %604 = vmatprep.mubr.f32.mxu0 0.0
    %605 = vmatmul.mubr.f32.gmra.mxu0 %v531
    %v606 = vpop.f32.mrf.mxu0
    %v607 = vadd.f32 0.0, %v606
    %v608 = vpop.f32.mrf.mxu0
    %609 = vdwg.mxu0
    %vm610 = vcmp.gt.f32.partialorder %v602, 0.0
    %vm611 = vcmp.gt.f32.partialorder %v607, 0.0
    %v612 = vmin.f32 %v602, 0.0
    %v613 = vmin.f32 %v607, 0.0
    %v614 = vmul.f32 %v612, 1.442695
    %v615 = vpow.pop %v614
    %v616 = vmul.f32 %v613, 1.442695
    %v617 = vpow.pop %v616
    %v618 = vsub.f32 %v615, 1.0
    %v619 = vsub.f32 %v617, 1.0
    %v620 = vsel %vm610, %v602, %v618
    %v621 = vsel %vm611, %v607, %v619
    %624 = vrot.lane.b32.xlu0 %v620, 16
    %v625 = vpop.permute.xlu0 %624
    %626 = vrot.lane.b32.xlu0 %v621, 16
    %v627 = vpop.permute.xlu0 %626
    %vm630 = vcmask 130048
    %v631 = vsel %vm630, %v476, %v625
    %v632 = vsel %vm630, %v477, %v627
    %v633 = vld [vmem:[%s6] sm:$0xff]
    %v634 = vld [vmem:[%s6 + $0x8] sm:$0xff]
    %v635 = vld [vmem:[%s6 + $0x10] sm:$0xff]
    %v636 = vld [vmem:[%s6 + $0x18] sm:$0xff]
    %v638 = vsel %vm84, %v631, 0
    %v641 = vsel %vm84, %v632, 0
    %643 = vmatprep.subr.mxu0 0.0
    %644 = vmatpush1.msra.mxu0 0.0
    %645 = vmatprep.subr.mxu0 0.0
    %646 = vmatpush1.msra.mxu0 0.0
    %647 = vmatprep.subr.mxu0 0.0
    %648 = vmatpush1.msra.mxu0 0.0
    %649 = vmatprep.subr.mxu0 0.0
    %650 = vmatpush1.msra.mxu0 0.0
    %651 = vmatprep.subr.mxu0 0.0
    %652 = vmatpush1.msra.mxu0 0.0
    %653 = vmatprep.subr.mxu0 0.0
    %654 = vmatpush1.msra.mxu0 0.0
    %655 = vmatprep.subr.mxu0 0.0
    %656 = vmatpush1.msra.mxu0 0.0
    %657 = vmatprep.subr.mxu0 0.0
    %658 = vmatpush1.msra.mxu0 0.0
    %659 = vmatprep.subr.mxu0 0.0
    %660 = vmatpush1.msra.mxu0 0.0
    %661 = vmatprep.subr.mxu0 0.0
    %662 = vmatpush1.msra.mxu0 0.0
    %663 = vmatprep.subr.mxu0 0.0
    %664 = vmatpush1.msra.mxu0 0.0
    %665 = vmatprep.subr.mxu0 0.0
    %666 = vmatpush1.msra.mxu0 0.0
    %667 = vmatprep.subr.mxu0 0.0
    %668 = vmatpush1.msra.mxu0 %v636
    %669 = vmatprep.subr.mxu0 0.0
    %670 = vmatpush1.msra.mxu0 %v635
    %671 = vmatprep.subr.mxu0 0.0
    %672 = vmatpush1.msra.mxu0 %v634
    %673 = vmatprep.subr.mxu0 0.0
    %674 = vmatpush1.msra.mxu0 %v633
    %675 = vmatprep.subr.mxu0 0.0
    %676 = vmatpush2.msra.mxu0 0.0
    %677 = vmatprep.subr.mxu0 0.0
    %678 = vmatpush2.msra.mxu0 0.0
    %679 = vmatprep.subr.mxu0 0.0
    %680 = vmatpush2.msra.mxu0 0.0
    %681 = vmatprep.subr.mxu0 0.0
    %682 = vmatpush2.msra.mxu0 0.0
    %683 = vmatprep.subr.mxu0 0.0
    %684 = vmatpush2.msra.mxu0 0.0
    %685 = vmatprep.subr.mxu0 0.0
    %686 = vmatpush2.msra.mxu0 0.0
    %687 = vmatprep.subr.mxu0 0.0
    %688 = vmatpush2.msra.mxu0 0.0
    %689 = vmatprep.subr.mxu0 0.0
    %690 = vmatpush2.msra.mxu0 0.0
    %691 = vmatprep.subr.mxu0 0.0
    %692 = vmatpush2.msra.mxu0 0.0
    %693 = vmatprep.subr.mxu0 0.0
    %694 = vmatpush2.msra.mxu0 0.0
    %695 = vmatprep.subr.mxu0 0.0
    %696 = vmatpush2.msra.mxu0 0.0
    %697 = vmatprep.subr.mxu0 0.0
    %698 = vmatpush2.msra.mxu0 0.0
    %699 = vmatprep.subr.mxu0 0.0
    %700 = vmatpush2.msra.mxu0 0.0
    %701 = vmatprep.subr.mxu0 0.0
    %702 = vmatpush2.msra.mxu0 0.0
    %703 = vmatprep.subr.mxu0 0.0
    %704 = vmatpush2.msra.mxu0 0.0
    %705 = vmatprep.subr.mxu0 0.0
    %706 = vmatpush2.msra.mxu0 0.0
    %707 = vmatprep.mubr.f32.mxu0 0.0
    %708 = vmatmul.mubr.f32.gmra.mxu0 %v638
    %v709 = vpop.f32.mrf.mxu0
    %v710 = vadd.f32 0.0, %v709
    %v711 = vpop.f32.mrf.mxu0
    %712 = vmatprep.mubr.f32.mxu0 0.0
    %713 = vmatmul.mubr.f32.gmra.mxu0 %v641
    %v714 = vpop.f32.mrf.mxu0
    %v715 = vadd.f32 0.0, %v714
    %v716 = vpop.f32.mrf.mxu0
    %717 = vdwg.mxu0
    %v718 = vld [vmem:[%s8] sm:$0xf]
    %721 = vrot.lane.b32.xlu0 %v710, 96
    %v722 = vpop.permute.xlu0 %721
    %723 = vrot.lane.b32.xlu0 %v715, 96
    %v724 = vpop.permute.xlu0 %723
    %vm726 = vcmask 72704
    %v728 = vsel %vm726, %v718, 0
    %vm730 = vcmask 1040384
    %v731 = vsel %vm730, %v724, 0
    %733 = vmatprep.subr.mxu0 0.0
    %734 = vmatpush1.msra.mxu0 0.0
    %735 = vmatprep.subr.mxu0 0.0
    %736 = vmatpush1.msra.mxu0 0.0
    %737 = vmatprep.subr.mxu0 0.0
    %738 = vmatpush1.msra.mxu0 0.0
    %739 = vmatprep.subr.mxu0 0.0
    %740 = vmatpush1.msra.mxu0 0.0
    %741 = vmatprep.subr.mxu0 0.0
    %742 = vmatpush1.msra.mxu0 0.0
    %743 = vmatprep.subr.mxu0 0.0
    %744 = vmatpush1.msra.mxu0 0.0
    %745 = vmatprep.subr.mxu0 0.0
    %746 = vmatpush1.msra.mxu0 0.0
    %747 = vmatprep.subr.mxu0 0.0
    %748 = vmatpush1.msra.mxu0 0.0
    %749 = vmatprep.subr.mxu0 0.0
    %750 = vmatpush1.msra.mxu0 0.0
    %751 = vmatprep.subr.mxu0 0.0
    %752 = vmatpush1.msra.mxu0 0.0
    %753 = vmatprep.subr.mxu0 0.0
    %754 = vmatpush1.msra.mxu0 0.0
    %755 = vmatprep.subr.mxu0 0.0
    %756 = vmatpush1.msra.mxu0 0.0
    %757 = vmatprep.subr.mxu0 0.0
    %758 = vmatpush1.msra.mxu0 0.0
    %759 = vmatprep.subr.mxu0 0.0
    %760 = vmatpush1.msra.mxu0 0.0
    %761 = vmatprep.subr.mxu0 0.0
    %762 = vmatpush1.msra.mxu0 %v731
    %763 = vmatprep.subr.mxu0 0.0
    %764 = vmatpush1.msra.mxu0 %v722
    %765 = vmatprep.subr.mxu0 0.0
    %766 = vmatpush2.msra.mxu0 0.0
    %767 = vmatprep.subr.mxu0 0.0
    %768 = vmatpush2.msra.mxu0 0.0
    %769 = vmatprep.subr.mxu0 0.0
    %770 = vmatpush2.msra.mxu0 0.0
    %771 = vmatprep.subr.mxu0 0.0
    %772 = vmatpush2.msra.mxu0 0.0
    %773 = vmatprep.subr.mxu0 0.0
    %774 = vmatpush2.msra.mxu0 0.0
    %775 = vmatprep.subr.mxu0 0.0
    %776 = vmatpush2.msra.mxu0 0.0
    %777 = vmatprep.subr.mxu0 0.0
    %778 = vmatpush2.msra.mxu0 0.0
    %779 = vmatprep.subr.mxu0 0.0
    %780 = vmatpush2.msra.mxu0 0.0
    %781 = vmatprep.subr.mxu0 0.0
    %782 = vmatpush2.msra.mxu0 0.0
    %783 = vmatprep.subr.mxu0 0.0
    %784 = vmatpush2.msra.mxu0 0.0
    %785 = vmatprep.subr.mxu0 0.0
    %786 = vmatpush2.msra.mxu0 0.0
    %787 = vmatprep.subr.mxu0 0.0
    %788 = vmatpush2.msra.mxu0 0.0
    %789 = vmatprep.subr.mxu0 0.0
    %790 = vmatpush2.msra.mxu0 0.0
    %791 = vmatprep.subr.mxu0 0.0
    %792 = vmatpush2.msra.mxu0 0.0
    %793 = vmatprep.subr.mxu0 0.0
    %794 = vmatpush2.msra.mxu0 0.0
    %795 = vmatprep.subr.mxu0 0.0
    %796 = vmatpush2.msra.mxu0 0.0
    %797 = vmatprep.mubr.f32.mxu0 0.0
    %798 = vmatmul.mubr.f32.gmra.mxu0 %v728
    %v799 = vpop.f32.mrf.mxu0
    %v800 = vadd.f32 0.0, %v799
    %v801 = vpop.f32.mrf.mxu0
    %802 = vdwg.mxu0
    %v803 = vld [vmem:[%s7] sm:$0x3]
    %v805 = vsel %vm84, %v803, 0
    %807 = vmatprep.subr.mxu0 0.0
    %808 = vmatpush1.xpose.msra.mxu0 0.0
    %809 = vmatprep.subr.mxu0 0.0
    %810 = vmatpush1.xpose.msra.mxu0 0.0
    %811 = vmatprep.subr.mxu0 0.0
    %812 = vmatpush1.xpose.msra.mxu0 0.0
    %813 = vmatprep.subr.mxu0 0.0
    %814 = vmatpush1.xpose.msra.mxu0 0.0
    %815 = vmatprep.subr.mxu0 0.0
    %816 = vmatpush1.xpose.msra.mxu0 0.0
    %817 = vmatprep.subr.mxu0 0.0
    %818 = vmatpush1.xpose.msra.mxu0 0.0
    %819 = vmatprep.subr.mxu0 0.0
    %820 = vmatpush1.xpose.msra.mxu0 0.0
    %821 = vmatprep.subr.mxu0 0.0
    %822 = vmatpush1.xpose.msra.mxu0 0.0
    %823 = vmatprep.subr.mxu0 0.0
    %824 = vmatpush1.xpose.msra.mxu0 0.0
    %825 = vmatprep.subr.mxu0 0.0
    %826 = vmatpush1.xpose.msra.mxu0 0.0
    %827 = vmatprep.subr.mxu0 0.0
    %828 = vmatpush1.xpose.msra.mxu0 0.0
    %829 = vmatprep.subr.mxu0 0.0
    %830 = vmatpush1.xpose.msra.mxu0 0.0
    %831 = vmatprep.subr.mxu0 0.0
    %832 = vmatpush1.xpose.msra.mxu0 0.0
    %833 = vmatprep.subr.mxu0 0.0
    %834 = vmatpush1.xpose.msra.mxu0 0.0
    %835 = vmatprep.subr.mxu0 0.0
    %836 = vmatpush1.xpose.msra.mxu0 %v641
    %837 = vmatprep.subr.mxu0 0.0
    %838 = vmatpush1.xpose.msra.mxu0 %v638
    %839 = vmatprep.subr.mxu0 0.0
    %840 = vmatpush2.xpose.msra.mxu0 0.0
    %841 = vmatprep.subr.mxu0 0.0
    %842 = vmatpush2.xpose.msra.mxu0 0.0
    %843 = vmatprep.subr.mxu0 0.0
    %844 = vmatpush2.xpose.msra.mxu0 0.0
    %845 = vmatprep.subr.mxu0 0.0
    %846 = vmatpush2.xpose.msra.mxu0 0.0
    %847 = vmatprep.subr.mxu0 0.0
    %848 = vmatpush2.xpose.msra.mxu0 0.0
    %849 = vmatprep.subr.mxu0 0.0
    %850 = vmatpush2.xpose.msra.mxu0 0.0
    %851 = vmatprep.subr.mxu0 0.0
    %852 = vmatpush2.xpose.msra.mxu0 0.0
    %853 = vmatprep.subr.mxu0 0.0
    %854 = vmatpush2.xpose.msra.mxu0 0.0
    %855 = vmatprep.subr.mxu0 0.0
    %856 = vmatpush2.xpose.msra.mxu0 0.0
    %857 = vmatprep.subr.mxu0 0.0
    %858 = vmatpush2.xpose.msra.mxu0 0.0
    %859 = vmatprep.subr.mxu0 0.0
    %860 = vmatpush2.xpose.msra.mxu0 0.0
    %861 = vmatprep.subr.mxu0 0.0
    %862 = vmatpush2.xpose.msra.mxu0 0.0
    %863 = vmatprep.subr.mxu0 0.0
    %864 = vmatpush2.xpose.msra.mxu0 0.0
    %865 = vmatprep.subr.mxu0 0.0
    %866 = vmatpush2.xpose.msra.mxu0 0.0
    %867 = vmatprep.subr.mxu0 0.0
    %868 = vmatpush2.xpose.msra.mxu0 0.0
    %869 = vmatprep.subr.mxu0 0.0
    %870 = vmatpush2.xpose.msra.mxu0 0.0
    %871 = vmatprep.mubr.f32.mxu0 0.0
    %872 = vmatmul.mubr.f32.gmra.mxu0 %v805
    %v873 = vpop.f32.mrf.mxu0
    %v874 = vadd.f32 0.0, %v873
    %v875 = vpop.f32.mrf.mxu0
    %876 = vdwg.mxu0
    %v877 = vld [vmem:[%s9] sm:$0xf]
    %879 = vset.pattern.permute.xlu0 0
    %880 = vperm.xlu0 %879, %v800
    %v881 = vpop.permute.xlu0 %880
    %v883 = vlaneseq
    %v884 = vshrl.u32 %v883, 7
    %v885 = vsub.s32 0, %v884
    %v886 = vrot.slane %v874, %v885
    %v887 = vadd.f32 %v881, %v886
    %vm888 = vcmp.ge.f32.partialorder %v887, 0.0
    %v889 = vmul.f32 %v887, 0.2
    %v890 = vsel %vm888, %v887, %v889
    %v891 = vadd.f32 %v890, %v877
    %vm892 = vcmask 68608
    %v893 = vsel %vm892, %v891, -inf
    %894 = vmax.xlane.f32.xlu0 %v893
    %v895 = vpop.xlane.xlu0 %894
    %v896 = vsub.f32 %v891, %v895
    %v897 = vmul.f32 %v896, 1.442695
    %v898 = vpow.pop %v897
    %v899 = vsel %vm892, %v898, 0.0
    %900 = vadd.xlane.f32.xlu0 %v899
    %v901 = vpop.xlane.xlu0 %900
    %v902 = vrcp.pop %v901
    %v903 = vmul.f32 %v898, %v902
    %v905 = vsel %vm726, %v903, 0
    %v907 = vsel %vm730, %v715, 0
    %909 = vmatprep.subr.mxu0 0.0
    %910 = vmatpush1.msra.mxu0 0.0
    %911 = vmatprep.subr.mxu0 0.0
    %912 = vmatpush1.msra.mxu0 0.0
    %913 = vmatprep.subr.mxu0 0.0
    %914 = vmatpush1.msra.mxu0 0.0
    %915 = vmatprep.subr.mxu0 0.0
    %916 = vmatpush1.msra.mxu0 0.0
    %917 = vmatprep.subr.mxu0 0.0
    %918 = vmatpush1.msra.mxu0 0.0
    %919 = vmatprep.subr.mxu0 0.0
    %920 = vmatpush1.msra.mxu0 0.0
    %921 = vmatprep.subr.mxu0 0.0
    %922 = vmatpush1.msra.mxu0 0.0
    %923 = vmatprep.subr.mxu0 0.0
    %924 = vmatpush1.msra.mxu0 0.0
    %925 = vmatprep.subr.mxu0 0.0
    %926 = vmatpush1.msra.mxu0 0.0
    %927 = vmatprep.subr.mxu0 0.0
    %928 = vmatpush1.msra.mxu0 0.0
    %929 = vmatprep.subr.mxu0 0.0
    %930 = vmatpush1.msra.mxu0 0.0
    %931 = vmatprep.subr.mxu0 0.0
    %932 = vmatpush1.msra.mxu0 0.0
    %933 = vmatprep.subr.mxu0 0.0
    %934 = vmatpush1.msra.mxu0 0.0
    %935 = vmatprep.subr.mxu0 0.0
    %936 = vmatpush1.msra.mxu0 0.0
    %937 = vmatprep.subr.mxu0 0.0
    %938 = vmatpush1.msra.mxu0 %v907
    %939 = vmatprep.subr.mxu0 0.0
    %940 = vmatpush1.msra.mxu0 %v710
    %941 = vmatprep.subr.mxu0 0.0
    %942 = vmatpush2.msra.mxu0 0.0
    %943 = vmatprep.subr.mxu0 0.0
    %944 = vmatpush2.msra.mxu0 0.0
    %945 = vmatprep.subr.mxu0 0.0
    %946 = vmatpush2.msra.mxu0 0.0
    %947 = vmatprep.subr.mxu0 0.0
    %948 = vmatpush2.msra.mxu0 0.0
    %949 = vmatprep.subr.mxu0 0.0
    %950 = vmatpush2.msra.mxu0 0.0
    %951 = vmatprep.subr.mxu0 0.0
    %952 = vmatpush2.msra.mxu0 0.0
    %953 = vmatprep.subr.mxu0 0.0
    %954 = vmatpush2.msra.mxu0 0.0
    %955 = vmatprep.subr.mxu0 0.0
    %956 = vmatpush2.msra.mxu0 0.0
    %957 = vmatprep.subr.mxu0 0.0
    %958 = vmatpush2.msra.mxu0 0.0
    %959 = vmatprep.subr.mxu0 0.0
    %960 = vmatpush2.msra.mxu0 0.0
    %961 = vmatprep.subr.mxu0 0.0
    %962 = vmatpush2.msra.mxu0 0.0
    %963 = vmatprep.subr.mxu0 0.0
    %964 = vmatpush2.msra.mxu0 0.0
    %965 = vmatprep.subr.mxu0 0.0
    %966 = vmatpush2.msra.mxu0 0.0
    %967 = vmatprep.subr.mxu0 0.0
    %968 = vmatpush2.msra.mxu0 0.0
    %969 = vmatprep.subr.mxu0 0.0
    %970 = vmatpush2.msra.mxu0 0.0
    %971 = vmatprep.subr.mxu0 0.0
    %972 = vmatpush2.msra.mxu0 0.0
    %973 = vmatprep.mubr.f32.mxu0 0.0
    %974 = vmatmul.mubr.f32.gmra.mxu0 %v905
    %v975 = vpop.f32.mrf.mxu0
    %v976 = vadd.f32 0.0, %v975
    %v977 = vpop.f32.mrf.mxu0
    %978 = vdwg.mxu0
    %vm979 = vcmp.gt.f32.partialorder %v976, 0.0
    %v980 = vmin.f32 %v976, 0.0
    %v981 = vmul.f32 %v980, 1.442695
    %v982 = vpow.pop %v981
    %v983 = vsub.f32 %v982, 1.0
    %v984 = vsel %vm979, %v976, %v983
    %985 = vset.pattern.permute.xlu0 1
    %986 = vperm.xlu0 %985, %v800
    %v987 = vpop.permute.xlu0 %986
    %v989 = vlaneseq
    %v990 = vshrl.u32 %v989, 7
    %v991 = vsub.s32 1, %v990
    %v992 = vrot.slane %v874, %v991
    %v993 = vadd.f32 %v987, %v992
    %vm994 = vcmp.ge.f32.partialorder %v993, 0.0
    %v995 = vmul.f32 %v993, 0.2
    %v996 = vsel %vm994, %v993, %v995
    %v997 = vadd.f32 %v996, %v877
    %v998 = vsel %vm892, %v997, -inf
    %999 = vmax.xlane.f32.xlu0 %v998
    %v1000 = vpop.xlane.xlu0 %999
    %v1001 = vsub.f32 %v997, %v1000
    %v1002 = vmul.f32 %v1001, 1.442695
    %v1003 = vpow.pop %v1002
    %v1004 = vsel %vm892, %v1003, 0.0
    %1005 = vadd.xlane.f32.xlu0 %v1004
    %v1006 = vpop.xlane.xlu0 %1005
    %v1007 = vrcp.pop %v1006
    %v1008 = vmul.f32 %v1003, %v1007
    %1009 = vrot.lane.b32.xlu0 %v710, 112
    %v1010 = vpop.permute.xlu0 %1009
    %1011 = vrot.lane.b32.xlu0 %v715, 112
    %v1012 = vpop.permute.xlu0 %1011
    %v1015 = vsel %vm726, %v1008, 0
    %v1017 = vsel %vm730, %v1012, 0
    %1019 = vmatprep.subr.mxu0 0.0
    %1020 = vmatpush1.msra.mxu0 0.0
    %1021 = vmatprep.subr.mxu0 0.0
    %1022 = vmatpush1.msra.mxu0 0.0
    %1023 = vmatprep.subr.mxu0 0.0
    %1024 = vmatpush1.msra.mxu0 0.0
    %1025 = vmatprep.subr.mxu0 0.0
    %1026 = vmatpush1.msra.mxu0 0.0
    %1027 = vmatprep.subr.mxu0 0.0
    %1028 = vmatpush1.msra.mxu0 0.0
    %1029 = vmatprep.subr.mxu0 0.0
    %1030 = vmatpush1.msra.mxu0 0.0
    %1031 = vmatprep.subr.mxu0 0.0
    %1032 = vmatpush1.msra.mxu0 0.0
    %1033 = vmatprep.subr.mxu0 0.0
    %1034 = vmatpush1.msra.mxu0 0.0
    %1035 = vmatprep.subr.mxu0 0.0
    %1036 = vmatpush1.msra.mxu0 0.0
    %1037 = vmatprep.subr.mxu0 0.0
    %1038 = vmatpush1.msra.mxu0 0.0
    %1039 = vmatprep.subr.mxu0 0.0
    %1040 = vmatpush1.msra.mxu0 0.0
    %1041 = vmatprep.subr.mxu0 0.0
    %1042 = vmatpush1.msra.mxu0 0.0
    %1043 = vmatprep.subr.mxu0 0.0
    %1044 = vmatpush1.msra.mxu0 0.0
    %1045 = vmatprep.subr.mxu0 0.0
    %1046 = vmatpush1.msra.mxu0 0.0
    %1047 = vmatprep.subr.mxu0 0.0
    %1048 = vmatpush1.msra.mxu0 %v1017
    %1049 = vmatprep.subr.mxu0 0.0
    %1050 = vmatpush1.msra.mxu0 %v1010
    %1051 = vmatprep.subr.mxu0 0.0
    %1052 = vmatpush2.msra.mxu0 0.0
    %1053 = vmatprep.subr.mxu0 0.0
    %1054 = vmatpush2.msra.mxu0 0.0
    %1055 = vmatprep.subr.mxu0 0.0
    %1056 = vmatpush2.msra.mxu0 0.0
    %1057 = vmatprep.subr.mxu0 0.0
    %1058 = vmatpush2.msra.mxu0 0.0
    %1059 = vmatprep.subr.mxu0 0.0
    %1060 = vmatpush2.msra.mxu0 0.0
    %1061 = vmatprep.subr.mxu0 0.0
    %1062 = vmatpush2.msra.mxu0 0.0
    %1063 = vmatprep.subr.mxu0 0.0
    %1064 = vmatpush2.msra.mxu0 0.0
    %1065 = vmatprep.subr.mxu0 0.0
    %1066 = vmatpush2.msra.mxu0 0.0
    %1067 = vmatprep.subr.mxu0 0.0
    %1068 = vmatpush2.msra.mxu0 0.0
    %1069 = vmatprep.subr.mxu0 0.0
    %1070 = vmatpush2.msra.mxu0 0.0
    %1071 = vmatprep.subr.mxu0 0.0
    %1072 = vmatpush2.msra.mxu0 0.0
    %1073 = vmatprep.subr.mxu0 0.0
    %1074 = vmatpush2.msra.mxu0 0.0
    %1075 = vmatprep.subr.mxu0 0.0
    %1076 = vmatpush2.msra.mxu0 0.0
    %1077 = vmatprep.subr.mxu0 0.0
    %1078 = vmatpush2.msra.mxu0 0.0
    %1079 = vmatprep.subr.mxu0 0.0
    %1080 = vmatpush2.msra.mxu0 0.0
    %1081 = vmatprep.subr.mxu0 0.0
    %1082 = vmatpush2.msra.mxu0 0.0
    %1083 = vmatprep.mubr.f32.mxu0 0.0
    %1084 = vmatmul.mubr.f32.gmra.mxu0 %v1015
    %v1085 = vpop.f32.mrf.mxu0
    %v1086 = vadd.f32 0.0, %v1085
    %v1087 = vpop.f32.mrf.mxu0
    %1088 = vdwg.mxu0
    %vm1089 = vcmp.gt.f32.partialorder %v1086, 0.0
    %v1090 = vmin.f32 %v1086, 0.0
    %v1091 = vmul.f32 %v1090, 1.442695
    %v1092 = vpow.pop %v1091
    %v1093 = vsub.f32 %v1092, 1.0
    %v1094 = vsel %vm1089, %v1086, %v1093
    %1096 = vrot.lane.b32.xlu0 %v1094, 16
    %v1097 = vpop.permute.xlu0 %1096
    %v1099 = vsel %vm630, %v984, %v1097
    %v1100 = vld [vmem:[%s1] sm:$0xff]
    %v1101 = vld [vmem:[%s1 + $0x8] sm:$0x3]
    %v1102 = vld [vmem:[%s10] sm:$0xff]
    %v1103 = vld [vmem:[%s10 + $0x8] sm:$0xff]
    %v1104 = vld [vmem:[%s10 + $0x10] sm:$0xff]
    %v1105 = vld [vmem:[%s10 + $0x18] sm:$0xff]
    %v1107 = vsel %vm84, %v1100, 0
    %v1110 = vsel %vm84, %v1101, 0
    %1112 = vmatprep.subr.mxu0 0.0
    %1113 = vmatpush1.msra.mxu0 0.0
    %1114 = vmatprep.subr.mxu0 0.0
    %1115 = vmatpush1.msra.mxu0 0.0
    %1116 = vmatprep.subr.mxu0 0.0
    %1117 = vmatpush1.msra.mxu0 0.0
    %1118 = vmatprep.subr.mxu0 0.0
    %1119 = vmatpush1.msra.mxu0 0.0
    %1120 = vmatprep.subr.mxu0 0.0
    %1121 = vmatpush1.msra.mxu0 0.0
    %1122 = vmatprep.subr.mxu0 0.0
    %1123 = vmatpush1.msra.mxu0 0.0
    %1124 = vmatprep.subr.mxu0 0.0
    %1125 = vmatpush1.msra.mxu0 0.0
    %1126 = vmatprep.subr.mxu0 0.0
    %1127 = vmatpush1.msra.mxu0 0.0
    %1128 = vmatprep.subr.mxu0 0.0
    %1129 = vmatpush1.msra.mxu0 0.0
    %1130 = vmatprep.subr.mxu0 0.0
    %1131 = vmatpush1.msra.mxu0 0.0
    %1132 = vmatprep.subr.mxu0 0.0
    %1133 = vmatpush1.msra.mxu0 0.0
    %1134 = vmatprep.subr.mxu0 0.0
    %1135 = vmatpush1.msra.mxu0 0.0
    %1136 = vmatprep.subr.mxu0 0.0
    %1137 = vmatpush1.msra.mxu0 %v1105
    %1138 = vmatprep.subr.mxu0 0.0
    %1139 = vmatpush1.msra.mxu0 %v1104
    %1140 = vmatprep.subr.mxu0 0.0
    %1141 = vmatpush1.msra.mxu0 %v1103
    %1142 = vmatprep.subr.mxu0 0.0
    %1143 = vmatpush1.msra.mxu0 %v1102
    %1144 = vmatprep.subr.mxu0 0.0
    %1145 = vmatpush2.msra.mxu0 0.0
    %1146 = vmatprep.subr.mxu0 0.0
    %1147 = vmatpush2.msra.mxu0 0.0
    %1148 = vmatprep.subr.mxu0 0.0
    %1149 = vmatpush2.msra.mxu0 0.0
    %1150 = vmatprep.subr.mxu0 0.0
    %1151 = vmatpush2.msra.mxu0 0.0
    %1152 = vmatprep.subr.mxu0 0.0
    %1153 = vmatpush2.msra.mxu0 0.0
    %1154 = vmatprep.subr.mxu0 0.0
    %1155 = vmatpush2.msra.mxu0 0.0
    %1156 = vmatprep.subr.mxu0 0.0
    %1157 = vmatpush2.msra.mxu0 0.0
    %1158 = vmatprep.subr.mxu0 0.0
    %1159 = vmatpush2.msra.mxu0 0.0
    %1160 = vmatprep.subr.mxu0 0.0
    %1161 = vmatpush2.msra.mxu0 0.0
    %1162 = vmatprep.subr.mxu0 0.0
    %1163 = vmatpush2.msra.mxu0 0.0
    %1164 = vmatprep.subr.mxu0 0.0
    %1165 = vmatpush2.msra.mxu0 0.0
    %1166 = vmatprep.subr.mxu0 0.0
    %1167 = vmatpush2.msra.mxu0 0.0
    %1168 = vmatprep.subr.mxu0 0.0
    %1169 = vmatpush2.msra.mxu0 0.0
    %1170 = vmatprep.subr.mxu0 0.0
    %1171 = vmatpush2.msra.mxu0 0.0
    %1172 = vmatprep.subr.mxu0 0.0
    %1173 = vmatpush2.msra.mxu0 0.0
    %1174 = vmatprep.subr.mxu0 0.0
    %1175 = vmatpush2.msra.mxu0 0.0
    %1176 = vmatprep.mubr.f32.mxu0 0.0
    %1177 = vmatmul.mubr.f32.gmra.mxu0 %v1107
    %v1178 = vpop.f32.mrf.mxu0
    %v1179 = vadd.f32 0.0, %v1178
    %v1180 = vpop.f32.mrf.mxu0
    %1181 = vmatprep.mubr.f32.mxu0 0.0
    %1182 = vmatmul.mubr.f32.gmra.mxu0 %v1110
    %v1183 = vpop.f32.mrf.mxu0
    %v1184 = vadd.f32 0.0, %v1183
    %v1185 = vpop.f32.mrf.mxu0
    %1186 = vdwg.mxu0
    %v1187 = vld [vmem:[%s12] sm:$0xff]
    %v1188 = vld [vmem:[%s12 + $0x8] sm:$0x3]
    %1191 = vrot.lane.b32.xlu0 %v1179, 96
    %v1192 = vpop.permute.xlu0 %1191
    %1193 = vrot.lane.b32.xlu0 %v1184, 96
    %v1194 = vpop.permute.xlu0 %1193
    %v1197 = vsel %vm175, %v1187, 0
    %v1200 = vsel %vm175, %v1188, 0
    %v1202 = vsel %vm182, %v1194, 0
    %1204 = vmatprep.subr.mxu0 0.0
    %1205 = vmatpush1.msra.mxu0 0.0
    %1206 = vmatprep.subr.mxu0 0.0
    %1207 = vmatpush1.msra.mxu0 0.0
    %1208 = vmatprep.subr.mxu0 0.0
    %1209 = vmatpush1.msra.mxu0 0.0
    %1210 = vmatprep.subr.mxu0 0.0
    %1211 = vmatpush1.msra.mxu0 0.0
    %1212 = vmatprep.subr.mxu0 0.0
    %1213 = vmatpush1.msra.mxu0 0.0
    %1214 = vmatprep.subr.mxu0 0.0
    %1215 = vmatpush1.msra.mxu0 0.0
    %1216 = vmatprep.subr.mxu0 0.0
    %1217 = vmatpush1.msra.mxu0 0.0
    %1218 = vmatprep.subr.mxu0 0.0
    %1219 = vmatpush1.msra.mxu0 0.0
    %1220 = vmatprep.subr.mxu0 0.0
    %1221 = vmatpush1.msra.mxu0 0.0
    %1222 = vmatprep.subr.mxu0 0.0
    %1223 = vmatpush1.msra.mxu0 0.0
    %1224 = vmatprep.subr.mxu0 0.0
    %1225 = vmatpush1.msra.mxu0 0.0
    %1226 = vmatprep.subr.mxu0 0.0
    %1227 = vmatpush1.msra.mxu0 0.0
    %1228 = vmatprep.subr.mxu0 0.0
    %1229 = vmatpush1.msra.mxu0 0.0
    %1230 = vmatprep.subr.mxu0 0.0
    %1231 = vmatpush1.msra.mxu0 0.0
    %1232 = vmatprep.subr.mxu0 0.0
    %1233 = vmatpush1.msra.mxu0 %v1202
    %1234 = vmatprep.subr.mxu0 0.0
    %1235 = vmatpush1.msra.mxu0 %v1192
    %1236 = vmatprep.subr.mxu0 0.0
    %1237 = vmatpush2.msra.mxu0 0.0
    %1238 = vmatprep.subr.mxu0 0.0
    %1239 = vmatpush2.msra.mxu0 0.0
    %1240 = vmatprep.subr.mxu0 0.0
    %1241 = vmatpush2.msra.mxu0 0.0
    %1242 = vmatprep.subr.mxu0 0.0
    %1243 = vmatpush2.msra.mxu0 0.0
    %1244 = vmatprep.subr.mxu0 0.0
    %1245 = vmatpush2.msra.mxu0 0.0
    %1246 = vmatprep.subr.mxu0 0.0
    %1247 = vmatpush2.msra.mxu0 0.0
    %1248 = vmatprep.subr.mxu0 0.0
    %1249 = vmatpush2.msra.mxu0 0.0
    %1250 = vmatprep.subr.mxu0 0.0
    %1251 = vmatpush2.msra.mxu0 0.0
    %1252 = vmatprep.subr.mxu0 0.0
    %1253 = vmatpush2.msra.mxu0 0.0
    %1254 = vmatprep.subr.mxu0 0.0
    %1255 = vmatpush2.msra.mxu0 0.0
    %1256 = vmatprep.subr.mxu0 0.0
    %1257 = vmatpush2.msra.mxu0 0.0
    %1258 = vmatprep.subr.mxu0 0.0
    %1259 = vmatpush2.msra.mxu0 0.0
    %1260 = vmatprep.subr.mxu0 0.0
    %1261 = vmatpush2.msra.mxu0 0.0
    %1262 = vmatprep.subr.mxu0 0.0
    %1263 = vmatpush2.msra.mxu0 0.0
    %1264 = vmatprep.subr.mxu0 0.0
    %1265 = vmatpush2.msra.mxu0 0.0
    %1266 = vmatprep.subr.mxu0 0.0
    %1267 = vmatpush2.msra.mxu0 0.0
    %1268 = vmatprep.mubr.f32.mxu0 0.0
    %1269 = vmatmul.mubr.f32.gmra.mxu0 %v1197
    %v1270 = vpop.f32.mrf.mxu0
    %v1271 = vadd.f32 0.0, %v1270
    %v1272 = vpop.f32.mrf.mxu0
    %1273 = vmatprep.mubr.f32.mxu0 0.0
    %1274 = vmatmul.mubr.f32.gmra.mxu0 %v1200
    %v1275 = vpop.f32.mrf.mxu0
    %v1276 = vadd.f32 0.0, %v1275
    %v1277 = vpop.f32.mrf.mxu0
    %1278 = vdwg.mxu0
    %v1279 = vld [vmem:[%s11] sm:$0x3]
    %v1281 = vsel %vm84, %v1279, 0
    %1283 = vmatprep.subr.mxu0 0.0
    %1284 = vmatpush1.xpose.msra.mxu0 0.0
    %1285 = vmatprep.subr.mxu0 0.0
    %1286 = vmatpush1.xpose.msra.mxu0 0.0
    %1287 = vmatprep.subr.mxu0 0.0
    %1288 = vmatpush1.xpose.msra.mxu0 0.0
    %1289 = vmatprep.subr.mxu0 0.0
    %1290 = vmatpush1.xpose.msra.mxu0 0.0
    %1291 = vmatprep.subr.mxu0 0.0
    %1292 = vmatpush1.xpose.msra.mxu0 0.0
    %1293 = vmatprep.subr.mxu0 0.0
    %1294 = vmatpush1.xpose.msra.mxu0 0.0
    %1295 = vmatprep.subr.mxu0 0.0
    %1296 = vmatpush1.xpose.msra.mxu0 0.0
    %1297 = vmatprep.subr.mxu0 0.0
    %1298 = vmatpush1.xpose.msra.mxu0 0.0
    %1299 = vmatprep.subr.mxu0 0.0
    %1300 = vmatpush1.xpose.msra.mxu0 0.0
    %1301 = vmatprep.subr.mxu0 0.0
    %1302 = vmatpush1.xpose.msra.mxu0 0.0
    %1303 = vmatprep.subr.mxu0 0.0
    %1304 = vmatpush1.xpose.msra.mxu0 0.0
    %1305 = vmatprep.subr.mxu0 0.0
    %1306 = vmatpush1.xpose.msra.mxu0 0.0
    %1307 = vmatprep.subr.mxu0 0.0
    %1308 = vmatpush1.xpose.msra.mxu0 0.0
    %1309 = vmatprep.subr.mxu0 0.0
    %1310 = vmatpush1.xpose.msra.mxu0 0.0
    %1311 = vmatprep.subr.mxu0 0.0
    %1312 = vmatpush1.xpose.msra.mxu0 %v1110
    %1313 = vmatprep.subr.mxu0 0.0
    %1314 = vmatpush1.xpose.msra.mxu0 %v1107
    %1315 = vmatprep.subr.mxu0 0.0
    %1316 = vmatpush2.xpose.msra.mxu0 0.0
    %1317 = vmatprep.subr.mxu0 0.0
    %1318 = vmatpush2.xpose.msra.mxu0 0.0
    %1319 = vmatprep.subr.mxu0 0.0
    %1320 = vmatpush2.xpose.msra.mxu0 0.0
    %1321 = vmatprep.subr.mxu0 0.0
    %1322 = vmatpush2.xpose.msra.mxu0 0.0
    %1323 = vmatprep.subr.mxu0 0.0
    %1324 = vmatpush2.xpose.msra.mxu0 0.0
    %1325 = vmatprep.subr.mxu0 0.0
    %1326 = vmatpush2.xpose.msra.mxu0 0.0
    %1327 = vmatprep.subr.mxu0 0.0
    %1328 = vmatpush2.xpose.msra.mxu0 0.0
    %1329 = vmatprep.subr.mxu0 0.0
    %1330 = vmatpush2.xpose.msra.mxu0 0.0
    %1331 = vmatprep.subr.mxu0 0.0
    %1332 = vmatpush2.xpose.msra.mxu0 0.0
    %1333 = vmatprep.subr.mxu0 0.0
    %1334 = vmatpush2.xpose.msra.mxu0 0.0
    %1335 = vmatprep.subr.mxu0 0.0
    %1336 = vmatpush2.xpose.msra.mxu0 0.0
    %1337 = vmatprep.subr.mxu0 0.0
    %1338 = vmatpush2.xpose.msra.mxu0 0.0
    %1339 = vmatprep.subr.mxu0 0.0
    %1340 = vmatpush2.xpose.msra.mxu0 0.0
    %1341 = vmatprep.subr.mxu0 0.0
    %1342 = vmatpush2.xpose.msra.mxu0 0.0
    %1343 = vmatprep.subr.mxu0 0.0
    %1344 = vmatpush2.xpose.msra.mxu0 0.0
    %1345 = vmatprep.subr.mxu0 0.0
    %1346 = vmatpush2.xpose.msra.mxu0 0.0
    %1347 = vmatprep.mubr.f32.mxu0 0.0
    %1348 = vmatmul.mubr.f32.gmra.mxu0 %v1281
    %v1349 = vpop.f32.mrf.mxu0
    %v1350 = vadd.f32 0.0, %v1349
    %v1351 = vpop.f32.mrf.mxu0
    %1352 = vdwg.mxu0
    %v1353 = vld [vmem:[%s13] sm:$0xff]
    %v1354 = vld [vmem:[%s13 + $0x8] sm:$0x3]
    %1356 = vset.pattern.permute.xlu0 0
    %1357 = vperm.xlu0 %1356, %v1271
    %v1358 = vpop.permute.xlu0 %1357
    %1361 = vset.pattern.permute.xlu0 0
    %1362 = vperm.xlu0 %1361, %v1276
    %v1363 = vpop.permute.xlu0 %1362
    %v1365 = vlaneseq
    %v1366 = vshrl.u32 %v1365, 7
    %v1367 = vsub.s32 0, %v1366
    %v1368 = vrot.slane %v1350, %v1367
    %v1369 = vadd.f32 %v1358, %v1368
    %v1370 = vadd.f32 %v1363, %v1368
    %vm1371 = vcmp.ge.f32.partialorder %v1369, 0.0
    %vm1372 = vcmp.ge.f32.partialorder %v1370, 0.0
    %v1373 = vmul.f32 %v1369, 0.2
    %v1374 = vmul.f32 %v1370, 0.2
    %v1375 = vsel %vm1371, %v1369, %v1373
    %v1376 = vsel %vm1372, %v1370, %v1374
    %v1377 = vadd.f32 %v1375, %v1353
    %v1378 = vadd.f32 %v1376, %v1354
    %v1379 = vsel %vm175, %v1377, -inf
    %1380 = vmax.xlane.f32.xlu0 %v1379
    %v1381 = vpop.xlane.xlu0 %1380
    %vm1382 = vcmask 74752
    %v1383 = vsel %vm1382, %v1378, -inf
    %1384 = vmax.xlane.f32.xlu0 %v1383
    %v1385 = vpop.xlane.xlu0 %1384
    %v1386 = vsub.f32 %v1377, %v1381
    %v1387 = vsub.f32 %v1378, %v1385
    %v1388 = vmul.f32 %v1386, 1.442695
    %v1389 = vpow.pop %v1388
    %v1390 = vmul.f32 %v1387, 1.442695
    %v1391 = vpow.pop %v1390
    %v1392 = vsel %vm175, %v1389, 0.0
    %1393 = vadd.xlane.f32.xlu0 %v1392
    %v1394 = vpop.xlane.xlu0 %1393
    %v1395 = vsel %vm1382, %v1391, 0.0
    %1396 = vadd.xlane.f32.xlu0 %v1395
    %v1397 = vpop.xlane.xlu0 %1396
    %v1398 = vrcp.pop %v1394
    %v1399 = vrcp.pop %v1397
    %v1400 = vmul.f32 %v1389, %v1398
    %v1401 = vmul.f32 %v1391, %v1399
    %v1403 = vsel %vm175, %v1400, 0
    %v1406 = vsel %vm175, %v1401, 0
    %v1408 = vsel %vm182, %v1184, 0
    %1410 = vmatprep.subr.mxu0 0.0
    %1411 = vmatpush1.msra.mxu0 0.0
    %1412 = vmatprep.subr.mxu0 0.0
    %1413 = vmatpush1.msra.mxu0 0.0
    %1414 = vmatprep.subr.mxu0 0.0
    %1415 = vmatpush1.msra.mxu0 0.0
    %1416 = vmatprep.subr.mxu0 0.0
    %1417 = vmatpush1.msra.mxu0 0.0
    %1418 = vmatprep.subr.mxu0 0.0
    %1419 = vmatpush1.msra.mxu0 0.0
    %1420 = vmatprep.subr.mxu0 0.0
    %1421 = vmatpush1.msra.mxu0 0.0
    %1422 = vmatprep.subr.mxu0 0.0
    %1423 = vmatpush1.msra.mxu0 0.0
    %1424 = vmatprep.subr.mxu0 0.0
    %1425 = vmatpush1.msra.mxu0 0.0
    %1426 = vmatprep.subr.mxu0 0.0
    %1427 = vmatpush1.msra.mxu0 0.0
    %1428 = vmatprep.subr.mxu0 0.0
    %1429 = vmatpush1.msra.mxu0 0.0
    %1430 = vmatprep.subr.mxu0 0.0
    %1431 = vmatpush1.msra.mxu0 0.0
    %1432 = vmatprep.subr.mxu0 0.0
    %1433 = vmatpush1.msra.mxu0 0.0
    %1434 = vmatprep.subr.mxu0 0.0
    %1435 = vmatpush1.msra.mxu0 0.0
    %1436 = vmatprep.subr.mxu0 0.0
    %1437 = vmatpush1.msra.mxu0 0.0
    %1438 = vmatprep.subr.mxu0 0.0
    %1439 = vmatpush1.msra.mxu0 %v1408
    %1440 = vmatprep.subr.mxu0 0.0
    %1441 = vmatpush1.msra.mxu0 %v1179
    %1442 = vmatprep.subr.mxu0 0.0
    %1443 = vmatpush2.msra.mxu0 0.0
    %1444 = vmatprep.subr.mxu0 0.0
    %1445 = vmatpush2.msra.mxu0 0.0
    %1446 = vmatprep.subr.mxu0 0.0
    %1447 = vmatpush2.msra.mxu0 0.0
    %1448 = vmatprep.subr.mxu0 0.0
    %1449 = vmatpush2.msra.mxu0 0.0
    %1450 = vmatprep.subr.mxu0 0.0
    %1451 = vmatpush2.msra.mxu0 0.0
    %1452 = vmatprep.subr.mxu0 0.0
    %1453 = vmatpush2.msra.mxu0 0.0
    %1454 = vmatprep.subr.mxu0 0.0
    %1455 = vmatpush2.msra.mxu0 0.0
    %1456 = vmatprep.subr.mxu0 0.0
    %1457 = vmatpush2.msra.mxu0 0.0
    %1458 = vmatprep.subr.mxu0 0.0
    %1459 = vmatpush2.msra.mxu0 0.0
    %1460 = vmatprep.subr.mxu0 0.0
    %1461 = vmatpush2.msra.mxu0 0.0
    %1462 = vmatprep.subr.mxu0 0.0
    %1463 = vmatpush2.msra.mxu0 0.0
    %1464 = vmatprep.subr.mxu0 0.0
    %1465 = vmatpush2.msra.mxu0 0.0
    %1466 = vmatprep.subr.mxu0 0.0
    %1467 = vmatpush2.msra.mxu0 0.0
    %1468 = vmatprep.subr.mxu0 0.0
    %1469 = vmatpush2.msra.mxu0 0.0
    %1470 = vmatprep.subr.mxu0 0.0
    %1471 = vmatpush2.msra.mxu0 0.0
    %1472 = vmatprep.subr.mxu0 0.0
    %1473 = vmatpush2.msra.mxu0 0.0
    %1474 = vmatprep.mubr.f32.mxu0 0.0
    %1475 = vmatmul.mubr.f32.gmra.mxu0 %v1403
    %v1476 = vpop.f32.mrf.mxu0
    %v1477 = vadd.f32 0.0, %v1476
    %v1478 = vpop.f32.mrf.mxu0
    %1479 = vmatprep.mubr.f32.mxu0 0.0
    %1480 = vmatmul.mubr.f32.gmra.mxu0 %v1406
    %v1481 = vpop.f32.mrf.mxu0
    %v1482 = vadd.f32 0.0, %v1481
    %v1483 = vpop.f32.mrf.mxu0
    %1484 = vdwg.mxu0
    %vm1485 = vcmp.gt.f32.partialorder %v1477, 0.0
    %vm1486 = vcmp.gt.f32.partialorder %v1482, 0.0
    %v1487 = vmin.f32 %v1477, 0.0
    %v1488 = vmin.f32 %v1482, 0.0
    %v1489 = vmul.f32 %v1487, 1.442695
    %v1490 = vpow.pop %v1489
    %v1491 = vmul.f32 %v1488, 1.442695
    %v1492 = vpow.pop %v1491
    %v1493 = vsub.f32 %v1490, 1.0
    %v1494 = vsub.f32 %v1492, 1.0
    %v1495 = vsel %vm1485, %v1477, %v1493
    %v1496 = vsel %vm1486, %v1482, %v1494
    %1497 = vset.pattern.permute.xlu0 1
    %1498 = vperm.xlu0 %1497, %v1271
    %v1499 = vpop.permute.xlu0 %1498
    %1501 = vset.pattern.permute.xlu0 1
    %1502 = vperm.xlu0 %1501, %v1276
    %v1503 = vpop.permute.xlu0 %1502
    %v1505 = vlaneseq
    %v1506 = vshrl.u32 %v1505, 7
    %v1507 = vsub.s32 1, %v1506
    %v1508 = vrot.slane %v1350, %v1507
    %v1509 = vadd.f32 %v1499, %v1508
    %v1510 = vadd.f32 %v1503, %v1508
    %vm1511 = vcmp.ge.f32.partialorder %v1509, 0.0
    %vm1512 = vcmp.ge.f32.partialorder %v1510, 0.0
    %v1513 = vmul.f32 %v1509, 0.2
    %v1514 = vmul.f32 %v1510, 0.2
    %v1515 = vsel %vm1511, %v1509, %v1513
    %v1516 = vsel %vm1512, %v1510, %v1514
    %v1517 = vadd.f32 %v1515, %v1353
    %v1518 = vadd.f32 %v1516, %v1354
    %v1519 = vsel %vm175, %v1517, -inf
    %1520 = vmax.xlane.f32.xlu0 %v1519
    %v1521 = vpop.xlane.xlu0 %1520
    %v1522 = vsel %vm1382, %v1518, -inf
    %1523 = vmax.xlane.f32.xlu0 %v1522
    %v1524 = vpop.xlane.xlu0 %1523
    %v1525 = vsub.f32 %v1517, %v1521
    %v1526 = vsub.f32 %v1518, %v1524
    %v1527 = vmul.f32 %v1525, 1.442695
    %v1528 = vpow.pop %v1527
    %v1529 = vmul.f32 %v1526, 1.442695
    %v1530 = vpow.pop %v1529
    %v1531 = vsel %vm175, %v1528, 0.0
    %1532 = vadd.xlane.f32.xlu0 %v1531
    %v1533 = vpop.xlane.xlu0 %1532
    %v1534 = vsel %vm1382, %v1530, 0.0
    %1535 = vadd.xlane.f32.xlu0 %v1534
    %v1536 = vpop.xlane.xlu0 %1535
    %v1537 = vrcp.pop %v1533
    %v1538 = vrcp.pop %v1536
    %v1539 = vmul.f32 %v1528, %v1537
    %v1540 = vmul.f32 %v1530, %v1538
    %1541 = vrot.lane.b32.xlu0 %v1179, 112
    %v1542 = vpop.permute.xlu0 %1541
    %1543 = vrot.lane.b32.xlu0 %v1184, 112
    %v1544 = vpop.permute.xlu0 %1543
    %v1547 = vsel %vm175, %v1539, 0
    %v1550 = vsel %vm175, %v1540, 0
    %v1552 = vsel %vm182, %v1544, 0
    %1554 = vmatprep.subr.mxu0 0.0
    %1555 = vmatpush1.msra.mxu0 0.0
    %1556 = vmatprep.subr.mxu0 0.0
    %1557 = vmatpush1.msra.mxu0 0.0
    %1558 = vmatprep.subr.mxu0 0.0
    %1559 = vmatpush1.msra.mxu0 0.0
    %1560 = vmatprep.subr.mxu0 0.0
    %1561 = vmatpush1.msra.mxu0 0.0
    %1562 = vmatprep.subr.mxu0 0.0
    %1563 = vmatpush1.msra.mxu0 0.0
    %1564 = vmatprep.subr.mxu0 0.0
    %1565 = vmatpush1.msra.mxu0 0.0
    %1566 = vmatprep.subr.mxu0 0.0
    %1567 = vmatpush1.msra.mxu0 0.0
    %1568 = vmatprep.subr.mxu0 0.0
    %1569 = vmatpush1.msra.mxu0 0.0
    %1570 = vmatprep.subr.mxu0 0.0
    %1571 = vmatpush1.msra.mxu0 0.0
    %1572 = vmatprep.subr.mxu0 0.0
    %1573 = vmatpush1.msra.mxu0 0.0
    %1574 = vmatprep.subr.mxu0 0.0
    %1575 = vmatpush1.msra.mxu0 0.0
    %1576 = vmatprep.subr.mxu0 0.0
    %1577 = vmatpush1.msra.mxu0 0.0
    %1578 = vmatprep.subr.mxu0 0.0
    %1579 = vmatpush1.msra.mxu0 0.0
    %1580 = vmatprep.subr.mxu0 0.0
    %1581 = vmatpush1.msra.mxu0 0.0
    %1582 = vmatprep.subr.mxu0 0.0
    %1583 = vmatpush1.msra.mxu0 %v1552
    %1584 = vmatprep.subr.mxu0 0.0
    %1585 = vmatpush1.msra.mxu0 %v1542
    %1586 = vmatprep.subr.mxu0 0.0
    %1587 = vmatpush2.msra.mxu0 0.0
    %1588 = vmatprep.subr.mxu0 0.0
    %1589 = vmatpush2.msra.mxu0 0.0
    %1590 = vmatprep.subr.mxu0 0.0
    %1591 = vmatpush2.msra.mxu0 0.0
    %1592 = vmatprep.subr.mxu0 0.0
    %1593 = vmatpush2.msra.mxu0 0.0
    %1594 = vmatprep.subr.mxu0 0.0
    %1595 = vmatpush2.msra.mxu0 0.0
    %1596 = vmatprep.subr.mxu0 0.0
    %1597 = vmatpush2.msra.mxu0 0.0
    %1598 = vmatprep.subr.mxu0 0.0
    %1599 = vmatpush2.msra.mxu0 0.0
    %1600 = vmatprep.subr.mxu0 0.0
    %1601 = vmatpush2.msra.mxu0 0.0
    %1602 = vmatprep.subr.mxu0 0.0
    %1603 = vmatpush2.msra.mxu0 0.0
    %1604 = vmatprep.subr.mxu0 0.0
    %1605 = vmatpush2.msra.mxu0 0.0
    %1606 = vmatprep.subr.mxu0 0.0
    %1607 = vmatpush2.msra.mxu0 0.0
    %1608 = vmatprep.subr.mxu0 0.0
    %1609 = vmatpush2.msra.mxu0 0.0
    %1610 = vmatprep.subr.mxu0 0.0
    %1611 = vmatpush2.msra.mxu0 0.0
    %1612 = vmatprep.subr.mxu0 0.0
    %1613 = vmatpush2.msra.mxu0 0.0
    %1614 = vmatprep.subr.mxu0 0.0
    %1615 = vmatpush2.msra.mxu0 0.0
    %1616 = vmatprep.subr.mxu0 0.0
    %1617 = vmatpush2.msra.mxu0 0.0
    %1618 = vmatprep.mubr.f32.mxu0 0.0
    %1619 = vmatmul.mubr.f32.gmra.mxu0 %v1547
    %v1620 = vpop.f32.mrf.mxu0
    %v1621 = vadd.f32 0.0, %v1620
    %v1622 = vpop.f32.mrf.mxu0
    %1623 = vmatprep.mubr.f32.mxu0 0.0
    %1624 = vmatmul.mubr.f32.gmra.mxu0 %v1550
    %v1625 = vpop.f32.mrf.mxu0
    %v1626 = vadd.f32 0.0, %v1625
    %v1627 = vpop.f32.mrf.mxu0
    %1628 = vdwg.mxu0
    %vm1629 = vcmp.gt.f32.partialorder %v1621, 0.0
    %vm1630 = vcmp.gt.f32.partialorder %v1626, 0.0
    %v1631 = vmin.f32 %v1621, 0.0
    %v1632 = vmin.f32 %v1626, 0.0
    %v1633 = vmul.f32 %v1631, 1.442695
    %v1634 = vpow.pop %v1633
    %v1635 = vmul.f32 %v1632, 1.442695
    %v1636 = vpow.pop %v1635
    %v1637 = vsub.f32 %v1634, 1.0
    %v1638 = vsub.f32 %v1636, 1.0
    %v1639 = vsel %vm1629, %v1621, %v1637
    %v1640 = vsel %vm1630, %v1626, %v1638
    %1643 = vrot.lane.b32.xlu0 %v1639, 16
    %v1644 = vpop.permute.xlu0 %1643
    %1645 = vrot.lane.b32.xlu0 %v1640, 16
    %v1646 = vpop.permute.xlu0 %1645
    %v1649 = vsel %vm630, %v1495, %v1644
    %v1650 = vsel %vm630, %v1496, %v1646
    %v1651 = vld [vmem:[%s14] sm:$0xff]
    %v1652 = vld [vmem:[%s14 + $0x8] sm:$0xff]
    %v1653 = vld [vmem:[%s14 + $0x10] sm:$0xff]
    %v1654 = vld [vmem:[%s14 + $0x18] sm:$0xff]
    %v1656 = vsel %vm84, %v1649, 0
    %v1659 = vsel %vm84, %v1650, 0
    %1661 = vmatprep.subr.mxu0 0.0
    %1662 = vmatpush1.msra.mxu0 0.0
    %1663 = vmatprep.subr.mxu0 0.0
    %1664 = vmatpush1.msra.mxu0 0.0
    %1665 = vmatprep.subr.mxu0 0.0
    %1666 = vmatpush1.msra.mxu0 0.0
    %1667 = vmatprep.subr.mxu0 0.0
    %1668 = vmatpush1.msra.mxu0 0.0
    %1669 = vmatprep.subr.mxu0 0.0
    %1670 = vmatpush1.msra.mxu0 0.0
    %1671 = vmatprep.subr.mxu0 0.0
    %1672 = vmatpush1.msra.mxu0 0.0
    %1673 = vmatprep.subr.mxu0 0.0
    %1674 = vmatpush1.msra.mxu0 0.0
    %1675 = vmatprep.subr.mxu0 0.0
    %1676 = vmatpush1.msra.mxu0 0.0
    %1677 = vmatprep.subr.mxu0 0.0
    %1678 = vmatpush1.msra.mxu0 0.0
    %1679 = vmatprep.subr.mxu0 0.0
    %1680 = vmatpush1.msra.mxu0 0.0
    %1681 = vmatprep.subr.mxu0 0.0
    %1682 = vmatpush1.msra.mxu0 0.0
    %1683 = vmatprep.subr.mxu0 0.0
    %1684 = vmatpush1.msra.mxu0 0.0
    %1685 = vmatprep.subr.mxu0 0.0
    %1686 = vmatpush1.msra.mxu0 %v1654
    %1687 = vmatprep.subr.mxu0 0.0
    %1688 = vmatpush1.msra.mxu0 %v1653
    %1689 = vmatprep.subr.mxu0 0.0
    %1690 = vmatpush1.msra.mxu0 %v1652
    %1691 = vmatprep.subr.mxu0 0.0
    %1692 = vmatpush1.msra.mxu0 %v1651
    %1693 = vmatprep.subr.mxu0 0.0
    %1694 = vmatpush2.msra.mxu0 0.0
    %1695 = vmatprep.subr.mxu0 0.0
    %1696 = vmatpush2.msra.mxu0 0.0
    %1697 = vmatprep.subr.mxu0 0.0
    %1698 = vmatpush2.msra.mxu0 0.0
    %1699 = vmatprep.subr.mxu0 0.0
    %1700 = vmatpush2.msra.mxu0 0.0
    %1701 = vmatprep.subr.mxu0 0.0
    %1702 = vmatpush2.msra.mxu0 0.0
    %1703 = vmatprep.subr.mxu0 0.0
    %1704 = vmatpush2.msra.mxu0 0.0
    %1705 = vmatprep.subr.mxu0 0.0
    %1706 = vmatpush2.msra.mxu0 0.0
    %1707 = vmatprep.subr.mxu0 0.0
    %1708 = vmatpush2.msra.mxu0 0.0
    %1709 = vmatprep.subr.mxu0 0.0
    %1710 = vmatpush2.msra.mxu0 0.0
    %1711 = vmatprep.subr.mxu0 0.0
    %1712 = vmatpush2.msra.mxu0 0.0
    %1713 = vmatprep.subr.mxu0 0.0
    %1714 = vmatpush2.msra.mxu0 0.0
    %1715 = vmatprep.subr.mxu0 0.0
    %1716 = vmatpush2.msra.mxu0 0.0
    %1717 = vmatprep.subr.mxu0 0.0
    %1718 = vmatpush2.msra.mxu0 0.0
    %1719 = vmatprep.subr.mxu0 0.0
    %1720 = vmatpush2.msra.mxu0 0.0
    %1721 = vmatprep.subr.mxu0 0.0
    %1722 = vmatpush2.msra.mxu0 0.0
    %1723 = vmatprep.subr.mxu0 0.0
    %1724 = vmatpush2.msra.mxu0 0.0
    %1725 = vmatprep.mubr.f32.mxu0 0.0
    %1726 = vmatmul.mubr.f32.gmra.mxu0 %v1656
    %v1727 = vpop.f32.mrf.mxu0
    %v1728 = vadd.f32 0.0, %v1727
    %v1729 = vpop.f32.mrf.mxu0
    %1730 = vmatprep.mubr.f32.mxu0 0.0
    %1731 = vmatmul.mubr.f32.gmra.mxu0 %v1659
    %v1732 = vpop.f32.mrf.mxu0
    %v1733 = vadd.f32 0.0, %v1732
    %v1734 = vpop.f32.mrf.mxu0
    %1735 = vdwg.mxu0
    %v1736 = vld [vmem:[%s16] sm:$0xf]
    %1739 = vrot.lane.b32.xlu0 %v1728, 96
    %v1740 = vpop.permute.xlu0 %1739
    %1741 = vrot.lane.b32.xlu0 %v1733, 96
    %v1742 = vpop.permute.xlu0 %1741
    %v1745 = vsel %vm175, %v1736, 0
    %v1747 = vsel %vm182, %v1742, 0
    %1749 = vmatprep.subr.mxu0 0.0
    %1750 = vmatpush1.msra.mxu0 0.0
    %1751 = vmatprep.subr.mxu0 0.0
    %1752 = vmatpush1.msra.mxu0 0.0
    %1753 = vmatprep.subr.mxu0 0.0
    %1754 = vmatpush1.msra.mxu0 0.0
    %1755 = vmatprep.subr.mxu0 0.0
    %1756 = vmatpush1.msra.mxu0 0.0
    %1757 = vmatprep.subr.mxu0 0.0
    %1758 = vmatpush1.msra.mxu0 0.0
    %1759 = vmatprep.subr.mxu0 0.0
    %1760 = vmatpush1.msra.mxu0 0.0
    %1761 = vmatprep.subr.mxu0 0.0
    %1762 = vmatpush1.msra.mxu0 0.0
    %1763 = vmatprep.subr.mxu0 0.0
    %1764 = vmatpush1.msra.mxu0 0.0
    %1765 = vmatprep.subr.mxu0 0.0
    %1766 = vmatpush1.msra.mxu0 0.0
    %1767 = vmatprep.subr.mxu0 0.0
    %1768 = vmatpush1.msra.mxu0 0.0
    %1769 = vmatprep.subr.mxu0 0.0
    %1770 = vmatpush1.msra.mxu0 0.0
    %1771 = vmatprep.subr.mxu0 0.0
    %1772 = vmatpush1.msra.mxu0 0.0
    %1773 = vmatprep.subr.mxu0 0.0
    %1774 = vmatpush1.msra.mxu0 0.0
    %1775 = vmatprep.subr.mxu0 0.0
    %1776 = vmatpush1.msra.mxu0 0.0
    %1777 = vmatprep.subr.mxu0 0.0
    %1778 = vmatpush1.msra.mxu0 %v1747
    %1779 = vmatprep.subr.mxu0 0.0
    %1780 = vmatpush1.msra.mxu0 %v1740
    %1781 = vmatprep.subr.mxu0 0.0
    %1782 = vmatpush2.msra.mxu0 0.0
    %1783 = vmatprep.subr.mxu0 0.0
    %1784 = vmatpush2.msra.mxu0 0.0
    %1785 = vmatprep.subr.mxu0 0.0
    %1786 = vmatpush2.msra.mxu0 0.0
    %1787 = vmatprep.subr.mxu0 0.0
    %1788 = vmatpush2.msra.mxu0 0.0
    %1789 = vmatprep.subr.mxu0 0.0
    %1790 = vmatpush2.msra.mxu0 0.0
    %1791 = vmatprep.subr.mxu0 0.0
    %1792 = vmatpush2.msra.mxu0 0.0
    %1793 = vmatprep.subr.mxu0 0.0
    %1794 = vmatpush2.msra.mxu0 0.0
    %1795 = vmatprep.subr.mxu0 0.0
    %1796 = vmatpush2.msra.mxu0 0.0
    %1797 = vmatprep.subr.mxu0 0.0
    %1798 = vmatpush2.msra.mxu0 0.0
    %1799 = vmatprep.subr.mxu0 0.0
    %1800 = vmatpush2.msra.mxu0 0.0
    %1801 = vmatprep.subr.mxu0 0.0
    %1802 = vmatpush2.msra.mxu0 0.0
    %1803 = vmatprep.subr.mxu0 0.0
    %1804 = vmatpush2.msra.mxu0 0.0
    %1805 = vmatprep.subr.mxu0 0.0
    %1806 = vmatpush2.msra.mxu0 0.0
    %1807 = vmatprep.subr.mxu0 0.0
    %1808 = vmatpush2.msra.mxu0 0.0
    %1809 = vmatprep.subr.mxu0 0.0
    %1810 = vmatpush2.msra.mxu0 0.0
    %1811 = vmatprep.subr.mxu0 0.0
    %1812 = vmatpush2.msra.mxu0 0.0
    %1813 = vmatprep.mubr.f32.mxu0 0.0
    %1814 = vmatmul.mubr.f32.gmra.mxu0 %v1745
    %v1815 = vpop.f32.mrf.mxu0
    %v1816 = vadd.f32 0.0, %v1815
    %v1817 = vpop.f32.mrf.mxu0
    %1818 = vdwg.mxu0
    %v1819 = vld [vmem:[%s15] sm:$0x3]
    %v1821 = vsel %vm84, %v1819, 0
    %1823 = vmatprep.subr.mxu0 0.0
    %1824 = vmatpush1.xpose.msra.mxu0 0.0
    %1825 = vmatprep.subr.mxu0 0.0
    %1826 = vmatpush1.xpose.msra.mxu0 0.0
    %1827 = vmatprep.subr.mxu0 0.0
    %1828 = vmatpush1.xpose.msra.mxu0 0.0
    %1829 = vmatprep.subr.mxu0 0.0
    %1830 = vmatpush1.xpose.msra.mxu0 0.0
    %1831 = vmatprep.subr.mxu0 0.0
    %1832 = vmatpush1.xpose.msra.mxu0 0.0
    %1833 = vmatprep.subr.mxu0 0.0
    %1834 = vmatpush1.xpose.msra.mxu0 0.0
    %1835 = vmatprep.subr.mxu0 0.0
    %1836 = vmatpush1.xpose.msra.mxu0 0.0
    %1837 = vmatprep.subr.mxu0 0.0
    %1838 = vmatpush1.xpose.msra.mxu0 0.0
    %1839 = vmatprep.subr.mxu0 0.0
    %1840 = vmatpush1.xpose.msra.mxu0 0.0
    %1841 = vmatprep.subr.mxu0 0.0
    %1842 = vmatpush1.xpose.msra.mxu0 0.0
    %1843 = vmatprep.subr.mxu0 0.0
    %1844 = vmatpush1.xpose.msra.mxu0 0.0
    %1845 = vmatprep.subr.mxu0 0.0
    %1846 = vmatpush1.xpose.msra.mxu0 0.0
    %1847 = vmatprep.subr.mxu0 0.0
    %1848 = vmatpush1.xpose.msra.mxu0 0.0
    %1849 = vmatprep.subr.mxu0 0.0
    %1850 = vmatpush1.xpose.msra.mxu0 0.0
    %1851 = vmatprep.subr.mxu0 0.0
    %1852 = vmatpush1.xpose.msra.mxu0 %v1659
    %1853 = vmatprep.subr.mxu0 0.0
    %1854 = vmatpush1.xpose.msra.mxu0 %v1656
    %1855 = vmatprep.subr.mxu0 0.0
    %1856 = vmatpush2.xpose.msra.mxu0 0.0
    %1857 = vmatprep.subr.mxu0 0.0
    %1858 = vmatpush2.xpose.msra.mxu0 0.0
    %1859 = vmatprep.subr.mxu0 0.0
    %1860 = vmatpush2.xpose.msra.mxu0 0.0
    %1861 = vmatprep.subr.mxu0 0.0
    %1862 = vmatpush2.xpose.msra.mxu0 0.0
    %1863 = vmatprep.subr.mxu0 0.0
    %1864 = vmatpush2.xpose.msra.mxu0 0.0
    %1865 = vmatprep.subr.mxu0 0.0
    %1866 = vmatpush2.xpose.msra.mxu0 0.0
    %1867 = vmatprep.subr.mxu0 0.0
    %1868 = vmatpush2.xpose.msra.mxu0 0.0
    %1869 = vmatprep.subr.mxu0 0.0
    %1870 = vmatpush2.xpose.msra.mxu0 0.0
    %1871 = vmatprep.subr.mxu0 0.0
    %1872 = vmatpush2.xpose.msra.mxu0 0.0
    %1873 = vmatprep.subr.mxu0 0.0
    %1874 = vmatpush2.xpose.msra.mxu0 0.0
    %1875 = vmatprep.subr.mxu0 0.0
    %1876 = vmatpush2.xpose.msra.mxu0 0.0
    %1877 = vmatprep.subr.mxu0 0.0
    %1878 = vmatpush2.xpose.msra.mxu0 0.0
    %1879 = vmatprep.subr.mxu0 0.0
    %1880 = vmatpush2.xpose.msra.mxu0 0.0
    %1881 = vmatprep.subr.mxu0 0.0
    %1882 = vmatpush2.xpose.msra.mxu0 0.0
    %1883 = vmatprep.subr.mxu0 0.0
    %1884 = vmatpush2.xpose.msra.mxu0 0.0
    %1885 = vmatprep.subr.mxu0 0.0
    %1886 = vmatpush2.xpose.msra.mxu0 0.0
    %1887 = vmatprep.mubr.f32.mxu0 0.0
    %1888 = vmatmul.mubr.f32.gmra.mxu0 %v1821
    %v1889 = vpop.f32.mrf.mxu0
    %v1890 = vadd.f32 0.0, %v1889
    %v1891 = vpop.f32.mrf.mxu0
    %1892 = vdwg.mxu0
    %v1893 = vld [vmem:[%s17] sm:$0xf]
    %1895 = vset.pattern.permute.xlu0 0
    %1896 = vperm.xlu0 %1895, %v1816
    %v1897 = vpop.permute.xlu0 %1896
    %v1899 = vlaneseq
    %v1900 = vshrl.u32 %v1899, 7
    %v1901 = vsub.s32 0, %v1900
    %v1902 = vrot.slane %v1890, %v1901
    %v1903 = vadd.f32 %v1897, %v1902
    %vm1904 = vcmp.ge.f32.partialorder %v1903, 0.0
    %v1905 = vmul.f32 %v1903, 0.2
    %v1906 = vsel %vm1904, %v1903, %v1905
    %v1907 = vadd.f32 %v1906, %v1893
    %vm1908 = vcmask 76800
    %v1909 = vsel %vm1908, %v1907, -inf
    %1910 = vmax.xlane.f32.xlu0 %v1909
    %v1911 = vpop.xlane.xlu0 %1910
    %v1912 = vsub.f32 %v1907, %v1911
    %v1913 = vmul.f32 %v1912, 1.442695
    %v1914 = vpow.pop %v1913
    %v1915 = vsel %vm1908, %v1914, 0.0
    %1916 = vadd.xlane.f32.xlu0 %v1915
    %v1917 = vpop.xlane.xlu0 %1916
    %v1918 = vrcp.pop %v1917
    %v1919 = vmul.f32 %v1914, %v1918
    %v1921 = vsel %vm175, %v1919, 0
    %v1923 = vsel %vm182, %v1733, 0
    %1925 = vmatprep.subr.mxu0 0.0
    %1926 = vmatpush1.msra.mxu0 0.0
    %1927 = vmatprep.subr.mxu0 0.0
    %1928 = vmatpush1.msra.mxu0 0.0
    %1929 = vmatprep.subr.mxu0 0.0
    %1930 = vmatpush1.msra.mxu0 0.0
    %1931 = vmatprep.subr.mxu0 0.0
    %1932 = vmatpush1.msra.mxu0 0.0
    %1933 = vmatprep.subr.mxu0 0.0
    %1934 = vmatpush1.msra.mxu0 0.0
    %1935 = vmatprep.subr.mxu0 0.0
    %1936 = vmatpush1.msra.mxu0 0.0
    %1937 = vmatprep.subr.mxu0 0.0
    %1938 = vmatpush1.msra.mxu0 0.0
    %1939 = vmatprep.subr.mxu0 0.0
    %1940 = vmatpush1.msra.mxu0 0.0
    %1941 = vmatprep.subr.mxu0 0.0
    %1942 = vmatpush1.msra.mxu0 0.0
    %1943 = vmatprep.subr.mxu0 0.0
    %1944 = vmatpush1.msra.mxu0 0.0
    %1945 = vmatprep.subr.mxu0 0.0
    %1946 = vmatpush1.msra.mxu0 0.0
    %1947 = vmatprep.subr.mxu0 0.0
    %1948 = vmatpush1.msra.mxu0 0.0
    %1949 = vmatprep.subr.mxu0 0.0
    %1950 = vmatpush1.msra.mxu0 0.0
    %1951 = vmatprep.subr.mxu0 0.0
    %1952 = vmatpush1.msra.mxu0 0.0
    %1953 = vmatprep.subr.mxu0 0.0
    %1954 = vmatpush1.msra.mxu0 %v1923
    %1955 = vmatprep.subr.mxu0 0.0
    %1956 = vmatpush1.msra.mxu0 %v1728
    %1957 = vmatprep.subr.mxu0 0.0
    %1958 = vmatpush2.msra.mxu0 0.0
    %1959 = vmatprep.subr.mxu0 0.0
    %1960 = vmatpush2.msra.mxu0 0.0
    %1961 = vmatprep.subr.mxu0 0.0
    %1962 = vmatpush2.msra.mxu0 0.0
    %1963 = vmatprep.subr.mxu0 0.0
    %1964 = vmatpush2.msra.mxu0 0.0
    %1965 = vmatprep.subr.mxu0 0.0
    %1966 = vmatpush2.msra.mxu0 0.0
    %1967 = vmatprep.subr.mxu0 0.0
    %1968 = vmatpush2.msra.mxu0 0.0
    %1969 = vmatprep.subr.mxu0 0.0
    %1970 = vmatpush2.msra.mxu0 0.0
    %1971 = vmatprep.subr.mxu0 0.0
    %1972 = vmatpush2.msra.mxu0 0.0
    %1973 = vmatprep.subr.mxu0 0.0
    %1974 = vmatpush2.msra.mxu0 0.0
    %1975 = vmatprep.subr.mxu0 0.0
    %1976 = vmatpush2.msra.mxu0 0.0
    %1977 = vmatprep.subr.mxu0 0.0
    %1978 = vmatpush2.msra.mxu0 0.0
    %1979 = vmatprep.subr.mxu0 0.0
    %1980 = vmatpush2.msra.mxu0 0.0
    %1981 = vmatprep.subr.mxu0 0.0
    %1982 = vmatpush2.msra.mxu0 0.0
    %1983 = vmatprep.subr.mxu0 0.0
    %1984 = vmatpush2.msra.mxu0 0.0
    %1985 = vmatprep.subr.mxu0 0.0
    %1986 = vmatpush2.msra.mxu0 0.0
    %1987 = vmatprep.subr.mxu0 0.0
    %1988 = vmatpush2.msra.mxu0 0.0
    %1989 = vmatprep.mubr.f32.mxu0 0.0
    %1990 = vmatmul.mubr.f32.gmra.mxu0 %v1921
    %v1991 = vpop.f32.mrf.mxu0
    %v1992 = vadd.f32 0.0, %v1991
    %v1993 = vpop.f32.mrf.mxu0
    %1994 = vdwg.mxu0
    %vm1995 = vcmp.gt.f32.partialorder %v1992, 0.0
    %v1996 = vmin.f32 %v1992, 0.0
    %v1997 = vmul.f32 %v1996, 1.442695
    %v1998 = vpow.pop %v1997
    %v1999 = vsub.f32 %v1998, 1.0
    %v2000 = vsel %vm1995, %v1992, %v1999
    %2001 = vset.pattern.permute.xlu0 1
    %2002 = vperm.xlu0 %2001, %v1816
    %v2003 = vpop.permute.xlu0 %2002
    %v2005 = vlaneseq
    %v2006 = vshrl.u32 %v2005, 7
    %v2007 = vsub.s32 1, %v2006
    %v2008 = vrot.slane %v1890, %v2007
    %v2009 = vadd.f32 %v2003, %v2008
    %vm2010 = vcmp.ge.f32.partialorder %v2009, 0.0
    %v2011 = vmul.f32 %v2009, 0.2
    %v2012 = vsel %vm2010, %v2009, %v2011
    %v2013 = vadd.f32 %v2012, %v1893
    %v2014 = vsel %vm1908, %v2013, -inf
    %2015 = vmax.xlane.f32.xlu0 %v2014
    %v2016 = vpop.xlane.xlu0 %2015
    %v2017 = vsub.f32 %v2013, %v2016
    %v2018 = vmul.f32 %v2017, 1.442695
    %v2019 = vpow.pop %v2018
    %v2020 = vsel %vm1908, %v2019, 0.0
    %2021 = vadd.xlane.f32.xlu0 %v2020
    %v2022 = vpop.xlane.xlu0 %2021
    %v2023 = vrcp.pop %v2022
    %v2024 = vmul.f32 %v2019, %v2023
    %2025 = vrot.lane.b32.xlu0 %v1728, 112
    %v2026 = vpop.permute.xlu0 %2025
    %2027 = vrot.lane.b32.xlu0 %v1733, 112
    %v2028 = vpop.permute.xlu0 %2027
    %v2031 = vsel %vm175, %v2024, 0
    %v2033 = vsel %vm182, %v2028, 0
    %2035 = vmatprep.subr.mxu0 0.0
    %2036 = vmatpush1.msra.mxu0 0.0
    %2037 = vmatprep.subr.mxu0 0.0
    %2038 = vmatpush1.msra.mxu0 0.0
    %2039 = vmatprep.subr.mxu0 0.0
    %2040 = vmatpush1.msra.mxu0 0.0
    %2041 = vmatprep.subr.mxu0 0.0
    %2042 = vmatpush1.msra.mxu0 0.0
    %2043 = vmatprep.subr.mxu0 0.0
    %2044 = vmatpush1.msra.mxu0 0.0
    %2045 = vmatprep.subr.mxu0 0.0
    %2046 = vmatpush1.msra.mxu0 0.0
    %2047 = vmatprep.subr.mxu0 0.0
    %2048 = vmatpush1.msra.mxu0 0.0
    %2049 = vmatprep.subr.mxu0 0.0
    %2050 = vmatpush1.msra.mxu0 0.0
    %2051 = vmatprep.subr.mxu0 0.0
    %2052 = vmatpush1.msra.mxu0 0.0
    %2053 = vmatprep.subr.mxu0 0.0
    %2054 = vmatpush1.msra.mxu0 0.0
    %2055 = vmatprep.subr.mxu0 0.0
    %2056 = vmatpush1.msra.mxu0 0.0
    %2057 = vmatprep.subr.mxu0 0.0
    %2058 = vmatpush1.msra.mxu0 0.0
    %2059 = vmatprep.subr.mxu0 0.0
    %2060 = vmatpush1.msra.mxu0 0.0
    %2061 = vmatprep.subr.mxu0 0.0
    %2062 = vmatpush1.msra.mxu0 0.0
    %2063 = vmatprep.subr.mxu0 0.0
    %2064 = vmatpush1.msra.mxu0 %v2033
    %2065 = vmatprep.subr.mxu0 0.0
    %2066 = vmatpush1.msra.mxu0 %v2026
    %2067 = vmatprep.subr.mxu0 0.0
    %2068 = vmatpush2.msra.mxu0 0.0
    %2069 = vmatprep.subr.mxu0 0.0
    %2070 = vmatpush2.msra.mxu0 0.0
    %2071 = vmatprep.subr.mxu0 0.0
    %2072 = vmatpush2.msra.mxu0 0.0
    %2073 = vmatprep.subr.mxu0 0.0
    %2074 = vmatpush2.msra.mxu0 0.0
    %2075 = vmatprep.subr.mxu0 0.0
    %2076 = vmatpush2.msra.mxu0 0.0
    %2077 = vmatprep.subr.mxu0 0.0
    %2078 = vmatpush2.msra.mxu0 0.0
    %2079 = vmatprep.subr.mxu0 0.0
    %2080 = vmatpush2.msra.mxu0 0.0
    %2081 = vmatprep.subr.mxu0 0.0
    %2082 = vmatpush2.msra.mxu0 0.0
    %2083 = vmatprep.subr.mxu0 0.0
    %2084 = vmatpush2.msra.mxu0 0.0
    %2085 = vmatprep.subr.mxu0 0.0
    %2086 = vmatpush2.msra.mxu0 0.0
    %2087 = vmatprep.subr.mxu0 0.0
    %2088 = vmatpush2.msra.mxu0 0.0
    %2089 = vmatprep.subr.mxu0 0.0
    %2090 = vmatpush2.msra.mxu0 0.0
    %2091 = vmatprep.subr.mxu0 0.0
    %2092 = vmatpush2.msra.mxu0 0.0
    %2093 = vmatprep.subr.mxu0 0.0
    %2094 = vmatpush2.msra.mxu0 0.0
    %2095 = vmatprep.subr.mxu0 0.0
    %2096 = vmatpush2.msra.mxu0 0.0
    %2097 = vmatprep.subr.mxu0 0.0
    %2098 = vmatpush2.msra.mxu0 0.0
    %2099 = vmatprep.mubr.f32.mxu0 0.0
    %2100 = vmatmul.mubr.f32.gmra.mxu0 %v2031
    %v2101 = vpop.f32.mrf.mxu0
    %v2102 = vadd.f32 0.0, %v2101
    %v2103 = vpop.f32.mrf.mxu0
    %2104 = vdwg.mxu0
    %vm2105 = vcmp.gt.f32.partialorder %v2102, 0.0
    %v2106 = vmin.f32 %v2102, 0.0
    %v2107 = vmul.f32 %v2106, 1.442695
    %v2108 = vpow.pop %v2107
    %v2109 = vsub.f32 %v2108, 1.0
    %v2110 = vsel %vm2105, %v2102, %v2109
    %2112 = vrot.lane.b32.xlu0 %v2110, 16
    %v2113 = vpop.permute.xlu0 %2112
    %v2115 = vsel %vm630, %v2000, %v2113
    %v2116 = vld [vmem:[%s18] sm:$0xff]
    %v2117 = vld [vmem:[%s18 + $0x8] sm:$0xff]
    %v2118 = vld [vmem:[%s18 + $0x10] sm:$0xff]
    %v2119 = vld [vmem:[%s18 + $0x18] sm:$0xff]
    %v2120 = vld [vmem:[%s19] sm:$0x1]
    %v2122 = vlaneseq
    %v2123 = vshrl.u32 %v2122, 7
    %v2124 = vsub.s32 0, %v2123
    %v2125 = vrot.slane %v2120, %v2124
    %v2128 = vsel %vm84, %v1099, 0
    %2130 = vmatprep.subr.mxu0 0.0
    %2131 = vmatpush1.msra.mxu0 0.0
    %2132 = vmatprep.subr.mxu0 0.0
    %2133 = vmatpush1.msra.mxu0 0.0
    %2134 = vmatprep.subr.mxu0 0.0
    %2135 = vmatpush1.msra.mxu0 0.0
    %2136 = vmatprep.subr.mxu0 0.0
    %2137 = vmatpush1.msra.mxu0 0.0
    %2138 = vmatprep.subr.mxu0 0.0
    %2139 = vmatpush1.msra.mxu0 0.0
    %2140 = vmatprep.subr.mxu0 0.0
    %2141 = vmatpush1.msra.mxu0 0.0
    %2142 = vmatprep.subr.mxu0 0.0
    %2143 = vmatpush1.msra.mxu0 0.0
    %2144 = vmatprep.subr.mxu0 0.0
    %2145 = vmatpush1.msra.mxu0 0.0
    %2146 = vmatprep.subr.mxu0 0.0
    %2147 = vmatpush1.msra.mxu0 0.0
    %2148 = vmatprep.subr.mxu0 0.0
    %2149 = vmatpush1.msra.mxu0 0.0
    %2150 = vmatprep.subr.mxu0 0.0
    %2151 = vmatpush1.msra.mxu0 0.0
    %2152 = vmatprep.subr.mxu0 0.0
    %2153 = vmatpush1.msra.mxu0 0.0
    %2154 = vmatprep.subr.mxu0 0.0
    %2155 = vmatpush1.msra.mxu0 %v2119
    %2156 = vmatprep.subr.mxu0 0.0
    %2157 = vmatpush1.msra.mxu0 %v2118
    %2158 = vmatprep.subr.mxu0 0.0
    %2159 = vmatpush1.msra.mxu0 %v2117
    %2160 = vmatprep.subr.mxu0 0.0
    %2161 = vmatpush1.msra.mxu0 %v2116
    %2162 = vmatprep.subr.mxu0 0.0
    %2163 = vmatpush2.msra.mxu0 0.0
    %2164 = vmatprep.subr.mxu0 0.0
    %2165 = vmatpush2.msra.mxu0 0.0
    %2166 = vmatprep.subr.mxu0 0.0
    %2167 = vmatpush2.msra.mxu0 0.0
    %2168 = vmatprep.subr.mxu0 0.0
    %2169 = vmatpush2.msra.mxu0 0.0
    %2170 = vmatprep.subr.mxu0 0.0
    %2171 = vmatpush2.msra.mxu0 0.0
    %2172 = vmatprep.subr.mxu0 0.0
    %2173 = vmatpush2.msra.mxu0 0.0
    %2174 = vmatprep.subr.mxu0 0.0
    %2175 = vmatpush2.msra.mxu0 0.0
    %2176 = vmatprep.subr.mxu0 0.0
    %2177 = vmatpush2.msra.mxu0 0.0
    %2178 = vmatprep.subr.mxu0 0.0
    %2179 = vmatpush2.msra.mxu0 0.0
    %2180 = vmatprep.subr.mxu0 0.0
    %2181 = vmatpush2.msra.mxu0 0.0
    %2182 = vmatprep.subr.mxu0 0.0
    %2183 = vmatpush2.msra.mxu0 0.0
    %2184 = vmatprep.subr.mxu0 0.0
    %2185 = vmatpush2.msra.mxu0 0.0
    %2186 = vmatprep.subr.mxu0 0.0
    %2187 = vmatpush2.msra.mxu0 0.0
    %2188 = vmatprep.subr.mxu0 0.0
    %2189 = vmatpush2.msra.mxu0 0.0
    %2190 = vmatprep.subr.mxu0 0.0
    %2191 = vmatpush2.msra.mxu0 0.0
    %2192 = vmatprep.subr.mxu0 0.0
    %2193 = vmatpush2.msra.mxu0 0.0
    %2194 = vmatprep.mubr.f32.mxu0 0.0
    %2195 = vmatmul.mubr.f32.gmra.mxu0 %v2128
    %v2196 = vpop.f32.mrf.mxu0
    %v2197 = vadd.f32 %v2125, %v2196
    %v2198 = vpop.f32.mrf.mxu0
    %2199 = vdwg.mxu0
    %v2200 = vtanh.pop %v2197
    %v2201 = vld [vmem:[%s20] sm:$0x1]
    %v2202 = vlaneseq
    %v2203 = vshrl.u32 %v2202, 7
    %v2204 = vsub.s32 0, %v2203
    %v2205 = vrot.slane %v2201, %v2204
    %v2206 = vmul.f32 %v2200, %v2205
    %vm2207 = vcmask 125952
    %v2208 = vsel %vm2207, %v2206, 0.0
    %2209 = vadd.xlane.f32.xlu0 %v2208
    %v2210 = vpop.xlane.xlu0 %2209
    %v2211 = vrot.slane %v2210, 4
    %v2212 = vadd.f32 %v2210, %v2211
    %v2213 = vrot.slane %v2212, 2
    %v2214 = vadd.f32 %v2212, %v2213
    %v2215 = vrot.slane %v2214, 1
    %v2216 = vadd.f32 %v2214, %v2215
    %s2217 = vtos %v2216
    %v2218 = vrcp.pop 4.0
    %s2219 = vtos %v2218
    %s2220 = smul.f32 %s2217, %s2219
    %v2222 = vsel %vm84, %v2115, 0
    %2224 = vmatprep.subr.mxu0 0.0
    %2225 = vmatpush1.msra.mxu0 0.0
    %2226 = vmatprep.subr.mxu0 0.0
    %2227 = vmatpush1.msra.mxu0 0.0
    %2228 = vmatprep.subr.mxu0 0.0
    %2229 = vmatpush1.msra.mxu0 0.0
    %2230 = vmatprep.subr.mxu0 0.0
    %2231 = vmatpush1.msra.mxu0 0.0
    %2232 = vmatprep.subr.mxu0 0.0
    %2233 = vmatpush1.msra.mxu0 0.0
    %2234 = vmatprep.subr.mxu0 0.0
    %2235 = vmatpush1.msra.mxu0 0.0
    %2236 = vmatprep.subr.mxu0 0.0
    %2237 = vmatpush1.msra.mxu0 0.0
    %2238 = vmatprep.subr.mxu0 0.0
    %2239 = vmatpush1.msra.mxu0 0.0
    %2240 = vmatprep.subr.mxu0 0.0
    %2241 = vmatpush1.msra.mxu0 0.0
    %2242 = vmatprep.subr.mxu0 0.0
    %2243 = vmatpush1.msra.mxu0 0.0
    %2244 = vmatprep.subr.mxu0 0.0
    %2245 = vmatpush1.msra.mxu0 0.0
    %2246 = vmatprep.subr.mxu0 0.0
    %2247 = vmatpush1.msra.mxu0 0.0
    %2248 = vmatprep.subr.mxu0 0.0
    %2249 = vmatpush1.msra.mxu0 %v2119
    %2250 = vmatprep.subr.mxu0 0.0
    %2251 = vmatpush1.msra.mxu0 %v2118
    %2252 = vmatprep.subr.mxu0 0.0
    %2253 = vmatpush1.msra.mxu0 %v2117
    %2254 = vmatprep.subr.mxu0 0.0
    %2255 = vmatpush1.msra.mxu0 %v2116
    %2256 = vmatprep.subr.mxu0 0.0
    %2257 = vmatpush2.msra.mxu0 0.0
    %2258 = vmatprep.subr.mxu0 0.0
    %2259 = vmatpush2.msra.mxu0 0.0
    %2260 = vmatprep.subr.mxu0 0.0
    %2261 = vmatpush2.msra.mxu0 0.0
    %2262 = vmatprep.subr.mxu0 0.0
    %2263 = vmatpush2.msra.mxu0 0.0
    %2264 = vmatprep.subr.mxu0 0.0
    %2265 = vmatpush2.msra.mxu0 0.0
    %2266 = vmatprep.subr.mxu0 0.0
    %2267 = vmatpush2.msra.mxu0 0.0
    %2268 = vmatprep.subr.mxu0 0.0
    %2269 = vmatpush2.msra.mxu0 0.0
    %2270 = vmatprep.subr.mxu0 0.0
    %2271 = vmatpush2.msra.mxu0 0.0
    %2272 = vmatprep.subr.mxu0 0.0
    %2273 = vmatpush2.msra.mxu0 0.0
    %2274 = vmatprep.subr.mxu0 0.0
    %2275 = vmatpush2.msra.mxu0 0.0
    %2276 = vmatprep.subr.mxu0 0.0
    %2277 = vmatpush2.msra.mxu0 0.0
    %2278 = vmatprep.subr.mxu0 0.0
    %2279 = vmatpush2.msra.mxu0 0.0
    %2280 = vmatprep.subr.mxu0 0.0
    %2281 = vmatpush2.msra.mxu0 0.0
    %2282 = vmatprep.subr.mxu0 0.0
    %2283 = vmatpush2.msra.mxu0 0.0
    %2284 = vmatprep.subr.mxu0 0.0
    %2285 = vmatpush2.msra.mxu0 0.0
    %2286 = vmatprep.subr.mxu0 0.0
    %2287 = vmatpush2.msra.mxu0 0.0
    %2288 = vmatprep.mubr.f32.mxu0 0.0
    %2289 = vmatmul.mubr.f32.gmra.mxu0 %v2222
    %v2290 = vpop.f32.mrf.mxu0
    %v2291 = vadd.f32 %v2125, %v2290
    %v2292 = vpop.f32.mrf.mxu0
    %2293 = vdwg.mxu0
    %v2294 = vtanh.pop %v2291
    %v2295 = vld [vmem:[%s20 + $0x1] sm:$0x1]
    %v2296 = vlaneseq
    %v2297 = vshrl.u32 %v2296, 7
    %v2298 = vsub.s32 0, %v2297
    %v2299 = vrot.slane %v2295, %v2298
    %v2300 = vmul.f32 %v2294, %v2299
    %v2301 = vsel %vm2207, %v2300, 0.0
    %2302 = vadd.xlane.f32.xlu0 %v2301
    %v2303 = vpop.xlane.xlu0 %2302
    %v2304 = vrot.slane %v2303, 4
    %v2305 = vadd.f32 %v2303, %v2304
    %v2306 = vrot.slane %v2305, 2
    %v2307 = vadd.f32 %v2305, %v2306
    %v2308 = vrot.slane %v2307, 1
    %v2309 = vadd.f32 %v2307, %v2308
    %s2310 = vtos %v2309
    %v2311 = vrcp.pop 4.0
    %s2312 = vtos %v2311
    %s2313 = smul.f32 %s2310, %s2312
    %s2314 = smax.f32 %s2220, %s2313
    %s2315 = ssub.f32 %s2220, %s2314
    %v2316 = vstv %s2315
    %v2317 = vmul.f32 %v2316, 1.442695
    %v2318 = vpow.pop %v2317
    %s2319 = vtos %v2318
    %s2320 = ssub.f32 %s2313, %s2314
    %v2321 = vstv %s2320
    %v2322 = vmul.f32 %v2321, 1.442695
    %v2323 = vpow.pop %v2322
    %s2324 = vtos %v2323
    %s2325 = sadd.f32 %s2319, %s2324
    %v2326 = vstv %s2325
    %v2327 = vrcp.pop %v2326
    %s2328 = vtos %v2327
    %s2329 = smul.f32 %s2319, %s2328
    %v2330 = vstv %s2329
    %v2331 = vmul.f32 %v2330, %v2200
    %v2332 = vstv %s2325
    %v2333 = vrcp.pop %v2332
    %s2334 = vtos %v2333
    %s2335 = smul.f32 %s2324, %s2334
    %v2336 = vstv %s2335
    %v2337 = vmul.f32 %v2336, %v2294
    %v2338 = vadd.f32 %v2331, %v2337
    %2339 = vst.msk [vmem:[#allocation2] sm:$0xf] %vm2207, %v2338
    %v2340 = vld [vmem:[%s21] sm:$0xff]
    %v2341 = vld [vmem:[%s21 + $0x8] sm:$0xff]
    %v2342 = vld [vmem:[%s22] sm:$0x1]
    %v2344 = vlaneseq
    %v2345 = vshrl.u32 %v2344, 7
    %v2346 = vsub.s32 0, %v2345
    %v2347 = vrot.slane %v2342, %v2346
    %v2350 = vsel %vm630, %v2338, 0
    %2352 = vmatprep.subr.mxu0 0.0
    %2353 = vmatpush1.msra.mxu0 0.0
    %2354 = vmatprep.subr.mxu0 0.0
    %2355 = vmatpush1.msra.mxu0 0.0
    %2356 = vmatprep.subr.mxu0 0.0
    %2357 = vmatpush1.msra.mxu0 0.0
    %2358 = vmatprep.subr.mxu0 0.0
    %2359 = vmatpush1.msra.mxu0 0.0
    %2360 = vmatprep.subr.mxu0 0.0
    %2361 = vmatpush1.msra.mxu0 0.0
    %2362 = vmatprep.subr.mxu0 0.0
    %2363 = vmatpush1.msra.mxu0 0.0
    %2364 = vmatprep.subr.mxu0 0.0
    %2365 = vmatpush1.msra.mxu0 0.0
    %2366 = vmatprep.subr.mxu0 0.0
    %2367 = vmatpush1.msra.mxu0 0.0
    %2368 = vmatprep.subr.mxu0 0.0
    %2369 = vmatpush1.msra.mxu0 0.0
    %2370 = vmatprep.subr.mxu0 0.0
    %2371 = vmatpush1.msra.mxu0 0.0
    %2372 = vmatprep.subr.mxu0 0.0
    %2373 = vmatpush1.msra.mxu0 0.0
    %2374 = vmatprep.subr.mxu0 0.0
    %2375 = vmatpush1.msra.mxu0 0.0
    %2376 = vmatprep.subr.mxu0 0.0
    %2377 = vmatpush1.msra.mxu0 0.0
    %2378 = vmatprep.subr.mxu0 0.0
    %2379 = vmatpush1.msra.mxu0 0.0
    %2380 = vmatprep.subr.mxu0 0.0
    %2381 = vmatpush1.msra.mxu0 %v2341
    %2382 = vmatprep.subr.mxu0 0.0
    %2383 = vmatpush1.msra.mxu0 %v2340
    %2384 = vmatprep.subr.mxu0 0.0
    %2385 = vmatpush2.msra.mxu0 0.0
    %2386 = vmatprep.subr.mxu0 0.0
    %2387 = vmatpush2.msra.mxu0 0.0
    %2388 = vmatprep.subr.mxu0 0.0
    %2389 = vmatpush2.msra.mxu0 0.0
    %2390 = vmatprep.subr.mxu0 0.0
    %2391 = vmatpush2.msra.mxu0 0.0
    %2392 = vmatprep.subr.mxu0 0.0
    %2393 = vmatpush2.msra.mxu0 0.0
    %2394 = vmatprep.subr.mxu0 0.0
    %2395 = vmatpush2.msra.mxu0 0.0
    %2396 = vmatprep.subr.mxu0 0.0
    %2397 = vmatpush2.msra.mxu0 0.0
    %2398 = vmatprep.subr.mxu0 0.0
    %2399 = vmatpush2.msra.mxu0 0.0
    %2400 = vmatprep.subr.mxu0 0.0
    %2401 = vmatpush2.msra.mxu0 0.0
    %2402 = vmatprep.subr.mxu0 0.0
    %2403 = vmatpush2.msra.mxu0 0.0
    %2404 = vmatprep.subr.mxu0 0.0
    %2405 = vmatpush2.msra.mxu0 0.0
    %2406 = vmatprep.subr.mxu0 0.0
    %2407 = vmatpush2.msra.mxu0 0.0
    %2408 = vmatprep.subr.mxu0 0.0
    %2409 = vmatpush2.msra.mxu0 0.0
    %2410 = vmatprep.subr.mxu0 0.0
    %2411 = vmatpush2.msra.mxu0 0.0
    %2412 = vmatprep.subr.mxu0 0.0
    %2413 = vmatpush2.msra.mxu0 0.0
    %2414 = vmatprep.subr.mxu0 0.0
    %2415 = vmatpush2.msra.mxu0 0.0
    %2416 = vmatprep.mubr.f32.mxu0 0.0
    %2417 = vmatmul.mubr.f32.gmra.mxu0 %v2350
    %v2418 = vpop.f32.mrf.mxu0
    %v2419 = vadd.f32 %v2347, %v2418
    %v2420 = vpop.f32.mrf.mxu0
    %2421 = vdwg.mxu0
    %vm2422 = vcmask 27648
    %2423 = vst.msk [vmem:[#allocation4] sm:$0xf] %vm2422, %v2419
    // Predicated region
    $region94: #{fwd.1} parent=1 // pred_check
      _
    $region95: #{fwd.1} parent=1 // pred_check_branch
      %2425 = sbr.rel (0) target = $region97
    $region96: #{fwd.1} parent=1 // pred_region
      %s2427 = ssub.s32 64, 64
      %2428 = vsyncadd [#allocation3], %s2427
      %s2430 = sshll.u32 [#allocation2], 4
      %s2431 = int_to_ptr.vmem [resolvable:$true] %s2430
      %2433 = dma.vmem_to_hbm [thread:$0]  %s2431, 64, %s23, [#allocation3]
    $region97: #{fwd.1} parent=1 // pred_fallthru
      _
    // Predicated region
    $region98: #{fwd.1} parent=1 // pred_check
      _
    $region99: #{fwd.1} parent=1 // pred_check_branch
      %2435 = sbr.rel (0) target = $region101
    $region100: #{fwd.1} parent=1 // pred_region
      %s2437 = ssub.s32 64, 64
      %2438 = vsyncadd [#allocation5], %s2437
      %s2440 = sshll.u32 [#allocation4], 4
      %s2441 = int_to_ptr.vmem [resolvable:$true] %s2440
      %2443 = dma.vmem_to_hbm [thread:$0]  %s2441, 64, %s24, [#allocation5]
    $region101: #{fwd.1} parent=1 // pred_fallthru
      _
    // Predicated region
    $region102: #{fwd.1} parent=1 // pred_check
      _
    $region103: #{fwd.1} parent=1 // pred_check_branch
      %2445 = sbr.rel (0) target = $region105
    $region104: #{fwd.1} parent=1 // pred_region
      %2446 = dma.done [#allocation3], 64
    $region105: #{fwd.1} parent=1 // pred_fallthru
      _
    // Predicated region
    $region106: #{fwd.1} parent=1 // pred_check
      _
    $region107: #{fwd.1} parent=1 // pred_check_branch
      %2448 = sbr.rel (0) target = $region109
    $region108: #{fwd.1} parent=1 // pred_region
      %2449 = dma.done [#allocation5], 64
    $region109: #{fwd.1} parent=1 // pred_fallthru
      _
    %2450 = vsyncpa [#allocation3], 1
    %2451 = vsyncpa [#allocation5], 1

</llo_original>
